<compile_context>
chip_gen: v6e
topology: v6e:2x2x1
jax: 0.10.0
libtpu: 0.0.40
codegen_flags: <defaults>
</compile_context>

<pallas_src>
import jax
import jax.numpy as jnp
from jax.experimental import pallas as pl
from jax.experimental.pallas import tpu as pltpu

# ------------------------- scaled-down BERT config -------------------------
VOCAB = 100
HIDDEN = 128
NUM_LAYERS = 2
NUM_HEADS = 4
INTERMEDIATE = 512
MAX_POS = 32
TYPE_VOCAB = 2
LN_EPS = 1e-12

BATCH = 2
SEQ = 8


# ------------------------------ fused kernel --------------------------------
def _ln(x, g, b):
    mean = jnp.mean(x, axis=-1, keepdims=True)
    var = jnp.mean((x - mean) ** 2, axis=-1, keepdims=True)
    inv = jax.lax.rsqrt(var + LN_EPS)
    return (x - mean) * inv * g + b


def _bert_fused_kernel(
    mask_ref,                       # [BS, BS] additive mask (padding + block-diag batch)
    x_ref,                          # [BS, H]  embedding sum (whole batch), pre-LN
    emb_g_ref, emb_b_ref,           # [1, H]
    wqkv_ref, bqkv_ref,             # [L, H, 3H] bf16 / [L, 1, 3H] f32
    wo_ref, bo_ref,                 # [L, H, H]  bf16 / [L, 1, H]  f32
    ln1_g_ref, ln1_b_ref,           # [L, 1, H]
    w1_ref, b1_ref,                 # [L, H, I]  bf16 / [L, 1, I]  f32
    w2_ref, b2_ref,                 # [L, I, H]  bf16 / [L, 1, H]  f32
    ln2_g_ref, ln2_b_ref,           # [L, 1, H]
    pool_w_ref, pool_b_ref,         # [H, H] bf16 / [1, H] f32
    out_w_ref, out_b_ref,           # [1, H] f32 / [1, 1] f32
    out_ref,                        # [B, 1]
):
    H = HIDDEN
    dh = H // NUM_HEADS
    scale = 1.0 / float(dh) ** 0.5

    # embeddings LayerNorm (embedding dropout is identity at inference)
    x = _ln(x_ref[...].astype(jnp.float32), emb_g_ref[...], emb_b_ref[...])  # [BS, H]

    # Additive attention mask, loaded ONCE (padding -10000 on key columns plus
    # -10000 on cross-batch blocks => batches never attend to each other).
    amask = mask_ref[...]                                                    # [BS, BS]

    for l in range(NUM_LAYERS):
        xin = x

        # ---- fused QKV projection: one [BS,H]x[H,3H] matmul, bf16 in / f32 acc ----
        qkv = jnp.dot(
            x.astype(jnp.bfloat16), wqkv_ref[l],
            preferred_element_type=jnp.float32,
        ) + bqkv_ref[l]                                                      # [BS, 3H]
        qkv_bf = qkv.astype(jnp.bfloat16)   # single cast; head slices are bf16

        # ---- per-head attention over all B*S rows at once (block-diag mask) ----
        ctx_heads = []
        for h in range(NUM_HEADS):
            q = qkv_bf[:, h * dh:(h + 1) * dh]                               # [BS, dh]
            k = qkv_bf[:, H + h * dh:H + (h + 1) * dh]                       # [BS, dh]
            v = qkv_bf[:, 2 * H + h * dh:2 * H + (h + 1) * dh]               # [BS, dh]

            scores = jax.lax.dot_general(
                q, k, (((1,), (1,)), ((), ())),
                preferred_element_type=jnp.float32,
            ) * scale                                                        # [BS, BS]
            scores = scores + amask          # shapes match: no broadcast emitted
            scores = scores - jnp.max(scores, axis=-1, keepdims=True)
            p = jnp.exp(scores)
            p = p * pl.reciprocal(jnp.sum(p, axis=-1, keepdims=True), approx=True)
            ctx_heads.append(
                jnp.dot(p.astype(jnp.bfloat16), v,
                        preferred_element_type=jnp.float32))                 # [BS, dh]
        ctx = jnp.concatenate(ctx_heads, axis=-1)                            # [BS, H]

        # ---- attention output projection + residual + LN1 ----
        attn_out = jnp.dot(
            ctx.astype(jnp.bfloat16), wo_ref[l],
            preferred_element_type=jnp.float32,
        ) + bo_ref[l]
        x = _ln(attn_out + xin, ln1_g_ref[l], ln1_b_ref[l])

        # ---- FFN (GELU) + residual + LN2 ----
        # TODO(synk): HF BERT uses erf-GELU; tanh approximation used here.
        ffn = jnp.dot(
            x.astype(jnp.bfloat16), w1_ref[l],
            preferred_element_type=jnp.float32,
        ) + b1_ref[l]
        ffn = jax.nn.gelu(ffn, approximate=True)
        ffn = jnp.dot(
            ffn.astype(jnp.bfloat16), w2_ref[l],
            preferred_element_type=jnp.float32,
        ) + b2_ref[l]
        x = _ln(ffn + x, ln2_g_ref[l], ln2_b_ref[l])

    # ---- pooler: tanh(W * h_[CLS] + b) on both batches at once ----
    cls = jnp.concatenate([x[b * SEQ:b * SEQ + 1, :] for b in range(BATCH)],
                          axis=0)                                            # [B, H]
    pooled = jnp.tanh(
        jnp.dot(cls.astype(jnp.bfloat16), pool_w_ref[...],
                preferred_element_type=jnp.float32) + pool_b_ref[...])       # [B, H]

    # bo = bert_drop(o2): nn.Dropout(0.3) -> identity at inference.
    # TODO(synk): training-mode stochastic dropout not implemented.

    # output = Linear(H, 1) as VPU multiply + lane reduction (no N=1 matmul);
    # the entire [B, 1] result is written in one store.
    out = jnp.sum(pooled * out_w_ref[...], axis=-1, keepdims=True) + out_b_ref[...]
    out_ref[...] = out.astype(out_ref.dtype)


# ------------------------------ parameter init ------------------------------
def init_params(key):
    def nrm(k, shape, dtype=jnp.float32):
        return (0.02 * jax.random.normal(k, shape, dtype=jnp.float32)).astype(dtype)

    L, H, I = NUM_LAYERS, HIDDEN, INTERMEDIATE
    keys = iter(jax.random.split(key, 16))
    return {
        "word_emb": nrm(next(keys), (VOCAB, H)),
        "pos_emb": nrm(next(keys), (MAX_POS, H)),
        "type_emb": nrm(next(keys), (TYPE_VOCAB, H)),
        "emb_ln_g": jnp.ones((1, H), jnp.float32),
        "emb_ln_b": jnp.zeros((1, H), jnp.float32),
        # matmul weights stored bf16 at init (no per-call convert / HBM copy)
        # wq|wk|wv concatenated along the output (lane) axis
        "wqkv": nrm(next(keys), (L, H, 3 * H), jnp.bfloat16),
        "bqkv": jnp.zeros((L, 1, 3 * H), jnp.float32),
        "wo": nrm(next(keys), (L, H, H), jnp.bfloat16),
        "bo": jnp.zeros((L, 1, H), jnp.float32),
        "ln1_g": jnp.ones((L, 1, H), jnp.float32),
        "ln1_b": jnp.zeros((L, 1, H), jnp.float32),
        "w1": nrm(next(keys), (L, H, I), jnp.bfloat16),
        "b1": jnp.zeros((L, 1, I), jnp.float32),
        "w2": nrm(next(keys), (L, I, H), jnp.bfloat16),
        "b2": jnp.zeros((L, 1, H), jnp.float32),
        "ln2_g": jnp.ones((L, 1, H), jnp.float32),
        "ln2_b": jnp.zeros((L, 1, H), jnp.float32),
        "pool_w": nrm(next(keys), (H, H), jnp.bfloat16),
        "pool_b": jnp.zeros((1, H), jnp.float32),
        "out_w": nrm(next(keys), (1, H)),      # nn.Linear(hidden, 1) weight (row form)
        "out_b": jnp.zeros((1, 1), jnp.float32),
    }


# -------------------------------- forward pass -------------------------------
def bert_base_uncased_forward(params, ids, mask, token_type_ids):
    B, S = ids.shape
    H, L, I = HIDDEN, NUM_LAYERS, INTERMEDIATE
    BS = B * S

    # --- embedding gathers stay as tiny XLA glue (no small-scale Pallas gather) ---
    x_emb = (params["word_emb"][ids]
             + params["pos_emb"][jnp.arange(S)][None, :, :]
             + params["type_emb"][token_type_ids]).reshape(BS, H)

    # Additive attention mask over the flattened [B*S, B*S] score matrix:
    #   * padding columns get -10000 (standard BERT additive mask)
    #   * cross-batch blocks get -10000 (exp underflows to exactly 0 -> batches
    #     are independent even though scores are computed for all rows at once)
    pad_add = ((1.0 - mask.astype(jnp.float32)) * -10000.0).reshape(BS)      # per key col
    row_batch = jnp.arange(BS) // S
    block_add = jnp.where(row_batch[:, None] == row_batch[None, :], 0.0, -10000.0)
    attn_mask = block_add + pad_add[None, :]                                 # [BS, BS]

    def full(shape):
        return pl.BlockSpec(shape, lambda i: (0,) * len(shape))

    out = pl.pallas_call(
        _bert_fused_kernel,
        out_shape=jax.ShapeDtypeStruct((B, 1), jnp.float32),
        grid=(1,),                                          # single invocation
        in_specs=[
            full((BS, BS)),                                 # additive attention mask
            full((BS, H)),                                  # x_emb, whole batch
            full((1, H)), full((1, H)),                     # embedding LN
            full((L, H, 3 * H)), full((L, 1, 3 * H)),       # fused QKV
            full((L, H, H)), full((L, 1, H)),               # attn output proj
            full((L, 1, H)), full((L, 1, H)),               # LN1
            full((L, H, I)), full((L, 1, I)),               # FFN 1
            full((L, I, H)), full((L, 1, H)),               # FFN 2
            full((L, 1, H)), full((L, 1, H)),               # LN2
            full((H, H)), full((1, H)),                     # pooler
            full((1, H)), full((1, 1)),                     # output head
        ],
        out_specs=pl.BlockSpec((B, 1), lambda i: (0, 0)),   # whole output, one store
        compiler_params=pltpu.CompilerParams(
            dimension_semantics=("arbitrary",)),
    )(
        attn_mask, x_emb,
        params["emb_ln_g"], params["emb_ln_b"],
        params["wqkv"], params["bqkv"],
        params["wo"], params["bo"],
        params["ln1_g"], params["ln1_b"],
        params["w1"], params["b1"],
        params["w2"], params["b2"],
        params["ln2_g"], params["ln2_b"],
        params["pool_w"], params["pool_b"],
        params["out_w"], params["out_b"],
    )
    return out


# ----------------------------------- main ------------------------------------
if __name__ == "__main__":
    key = jax.random.PRNGKey(0)
    pkey, ikey, tkey = jax.random.split(key, 3)

    params = init_params(pkey)

    ids = jax.random.randint(ikey, (BATCH, SEQ), 0, VOCAB, dtype=jnp.int32)
    mask = jnp.ones((BATCH, SEQ), dtype=jnp.int32)            # all tokens valid
    token_type_ids = jax.random.randint(tkey, (BATCH, SEQ), 0, TYPE_VOCAB,
                                        dtype=jnp.int32)

    fwd = jax.jit(bert_base_uncased_forward)
    out = fwd(params, ids, mask, token_type_ids)
    out = jax.block_until_ready(out)

    assert out.shape == (BATCH, 1), out.shape
    assert out.dtype == jnp.float32
    assert bool(jnp.all(jnp.isfinite(out)))
    print("KERNEL_OK")
</pallas_src>

<mosaic_0001>
module attributes {stable_mosaic.version = 11 : i64} {
  func.func @_bert_fused_kernel(%arg0: i32, %arg1: memref<16x16xf32, #tpu.memory_space<vmem>>, %arg2: memref<16x128xf32, #tpu.memory_space<vmem>>, %arg3: memref<1x128xf32, #tpu.memory_space<vmem>>, %arg4: memref<1x128xf32, #tpu.memory_space<vmem>>, %arg5: memref<2x128x384xbf16, #tpu.memory_space<vmem>>, %arg6: memref<2x1x384xf32, #tpu.memory_space<vmem>>, %arg7: memref<2x128x128xbf16, #tpu.memory_space<vmem>>, %arg8: memref<2x1x128xf32, #tpu.memory_space<vmem>>, %arg9: memref<2x1x128xf32, #tpu.memory_space<vmem>>, %arg10: memref<2x1x128xf32, #tpu.memory_space<vmem>>, %arg11: memref<2x128x512xbf16, #tpu.memory_space<vmem>>, %arg12: memref<2x1x512xf32, #tpu.memory_space<vmem>>, %arg13: memref<2x512x128xbf16, #tpu.memory_space<vmem>>, %arg14: memref<2x1x128xf32, #tpu.memory_space<vmem>>, %arg15: memref<2x1x128xf32, #tpu.memory_space<vmem>>, %arg16: memref<2x1x128xf32, #tpu.memory_space<vmem>>, %arg17: memref<128x128xbf16, #tpu.memory_space<vmem>>, %arg18: memref<1x128xf32, #tpu.memory_space<vmem>>, %arg19: memref<1x128xf32, #tpu.memory_space<vmem>>, %arg20: memref<1x1xf32, #tpu.memory_space<vmem>>, %arg21: memref<2x1xf32, #tpu.memory_space<vmem>>) attributes {dimension_semantics = [#tpu.dimension_semantics<arbitrary>], iteration_bounds = array<i64: 1>, scalar_prefetch = 0 : i64, scratch_operands = 0 : i64, tpu.core_type = #tpu.core_type<tc>, window_params = [{pipeline_mode = #tpu.pipeline_mode<synchronous>, transform_indices = @transform_0, window_bounds = array<i64: 16, 16>}, {pipeline_mode = #tpu.pipeline_mode<synchronous>, transform_indices = @transform_1, window_bounds = array<i64: 16, 128>}, {pipeline_mode = #tpu.pipeline_mode<synchronous>, transform_indices = @transform_2, window_bounds = array<i64: 1, 128>}, {pipeline_mode = #tpu.pipeline_mode<synchronous>, transform_indices = @transform_3, window_bounds = array<i64: 1, 128>}, {pipeline_mode = #tpu.pipeline_mode<synchronous>, transform_indices = @transform_4, window_bounds = array<i64: 2, 128, 384>}, {pipeline_mode = #tpu.pipeline_mode<synchronous>, transform_indices = @transform_5, window_bounds = array<i64: 2, 1, 384>}, {pipeline_mode = #tpu.pipeline_mode<synchronous>, transform_indices = @transform_6, window_bounds = array<i64: 2, 128, 128>}, {pipeline_mode = #tpu.pipeline_mode<synchronous>, transform_indices = @transform_7, window_bounds = array<i64: 2, 1, 128>}, {pipeline_mode = #tpu.pipeline_mode<synchronous>, transform_indices = @transform_8, window_bounds = array<i64: 2, 1, 128>}, {pipeline_mode = #tpu.pipeline_mode<synchronous>, transform_indices = @transform_9, window_bounds = array<i64: 2, 1, 128>}, {pipeline_mode = #tpu.pipeline_mode<synchronous>, transform_indices = @transform_10, window_bounds = array<i64: 2, 128, 512>}, {pipeline_mode = #tpu.pipeline_mode<synchronous>, transform_indices = @transform_11, window_bounds = array<i64: 2, 1, 512>}, {pipeline_mode = #tpu.pipeline_mode<synchronous>, transform_indices = @transform_12, window_bounds = array<i64: 2, 512, 128>}, {pipeline_mode = #tpu.pipeline_mode<synchronous>, transform_indices = @transform_13, window_bounds = array<i64: 2, 1, 128>}, {pipeline_mode = #tpu.pipeline_mode<synchronous>, transform_indices = @transform_14, window_bounds = array<i64: 2, 1, 128>}, {pipeline_mode = #tpu.pipeline_mode<synchronous>, transform_indices = @transform_15, window_bounds = array<i64: 2, 1, 128>}, {pipeline_mode = #tpu.pipeline_mode<synchronous>, transform_indices = @transform_16, window_bounds = array<i64: 128, 128>}, {pipeline_mode = #tpu.pipeline_mode<synchronous>, transform_indices = @transform_17, window_bounds = array<i64: 1, 128>}, {pipeline_mode = #tpu.pipeline_mode<synchronous>, transform_indices = @transform_18, window_bounds = array<i64: 1, 128>}, {pipeline_mode = #tpu.pipeline_mode<synchronous>, transform_indices = @transform_19, window_bounds = array<i64: 1, 1>}, {pipeline_mode = #tpu.pipeline_mode<synchronous>, transform_indices = @transform_20, window_bounds = array<i64: 2, 1>}]} {
    %c0 = arith.constant 0 : index
    %c0_0 = arith.constant 0 : index
    %0 = vector.load %arg2[%c0, %c0_0] : memref<16x128xf32, #tpu.memory_space<vmem>>, vector<16x128xf32>
    %c0_1 = arith.constant 0 : index
    %c0_2 = arith.constant 0 : index
    %1 = vector.load %arg3[%c0_1, %c0_2] : memref<1x128xf32, #tpu.memory_space<vmem>>, vector<1x128xf32>
    %c0_3 = arith.constant 0 : index
    %c0_4 = arith.constant 0 : index
    %2 = vector.load %arg4[%c0_3, %c0_4] : memref<1x128xf32, #tpu.memory_space<vmem>>, vector<1x128xf32>
    %cst = arith.constant dense<0.000000e+00> : vector<16xf32>
    %3 = vector.multi_reduction <add>, %0, %cst [1] : vector<16x128xf32> to vector<16xf32>
    %4 = vector.shape_cast %3 : vector<16xf32> to vector<16x1xf32>
    %cst_5 = arith.constant 1.280000e+02 : f32
    %5 = vector.broadcast %cst_5 : f32 to vector<16x1xf32>
    %6 = arith.divf %4, %5 : vector<16x1xf32>
    %7 = vector.broadcast %6 : vector<16x1xf32> to vector<16x128xf32>
    %8 = arith.subf %0, %7 : vector<16x128xf32>
    %9 = arith.mulf %8, %8 : vector<16x128xf32>
    %cst_6 = arith.constant dense<0.000000e+00> : vector<16xf32>
    %10 = vector.multi_reduction <add>, %9, %cst_6 [1] : vector<16x128xf32> to vector<16xf32>
    %11 = vector.shape_cast %10 : vector<16xf32> to vector<16x1xf32>
    %cst_7 = arith.constant 1.280000e+02 : f32
    %12 = vector.broadcast %cst_7 : f32 to vector<16x1xf32>
    %13 = arith.divf %11, %12 : vector<16x1xf32>
    %cst_8 = arith.constant 9.99999996E-13 : f32
    %14 = vector.broadcast %cst_8 : f32 to vector<16x1xf32>
    %15 = arith.addf %13, %14 : vector<16x1xf32>
    %16 = math.rsqrt %15 : vector<16x1xf32>
    %17 = vector.broadcast %6 : vector<16x1xf32> to vector<16x128xf32>
    %18 = arith.subf %0, %17 : vector<16x128xf32>
    %19 = vector.broadcast %16 : vector<16x1xf32> to vector<16x128xf32>
    %20 = arith.mulf %18, %19 : vector<16x128xf32>
    %21 = vector.broadcast %1 : vector<1x128xf32> to vector<16x128xf32>
    %22 = arith.mulf %20, %21 : vector<16x128xf32>
    %23 = vector.broadcast %2 : vector<1x128xf32> to vector<16x128xf32>
    %24 = arith.addf %22, %23 : vector<16x128xf32>
    %c0_9 = arith.constant 0 : index
    %c0_10 = arith.constant 0 : index
    %25 = vector.load %arg1[%c0_9, %c0_10] : memref<16x16xf32, #tpu.memory_space<vmem>>, vector<16x16xf32>
    %26 = arith.truncf %24 : vector<16x128xf32> to vector<16x128xbf16>
    %c0_11 = arith.constant 0 : index
    %c0_12 = arith.constant 0 : index
    %c0_13 = arith.constant 0 : index
    %27 = vector.load %arg5[%c0_11, %c0_12, %c0_13] : memref<2x128x384xbf16, #tpu.memory_space<vmem>>, vector<1x128x384xbf16>
    %28 = vector.shape_cast %27 : vector<1x128x384xbf16> to vector<128x384xbf16>
    %cst_14 = arith.constant dense<0.000000e+00> : vector<16x384xf32>
    %29 = tpu.matmul %26, %28, %cst_14 {dimension_numbers = #tpu.dot_dimension_numbers<[1], [0], [0], [1], [0, 0, 1, 1], [], []>} : vector<16x128xbf16>, vector<128x384xbf16>, vector<16x384xf32> -> vector<16x384xf32>
    %c0_15 = arith.constant 0 : index
    %c0_16 = arith.constant 0 : index
    %c0_17 = arith.constant 0 : index
    %30 = vector.load %arg6[%c0_15, %c0_16, %c0_17] : memref<2x1x384xf32, #tpu.memory_space<vmem>>, vector<1x1x384xf32>
    %31 = vector.shape_cast %30 : vector<1x1x384xf32> to vector<1x384xf32>
    %32 = vector.broadcast %31 : vector<1x384xf32> to vector<16x384xf32>
    %33 = arith.addf %29, %32 : vector<16x384xf32>
    %34 = arith.truncf %33 : vector<16x384xf32> to vector<16x384xbf16>
    %35 = vector.extract_strided_slice %34 {offsets = [0, 0], sizes = [16, 32], strides = [1, 1]} : vector<16x384xbf16> to vector<16x32xbf16>
    %36 = vector.extract_strided_slice %34 {offsets = [0, 128], sizes = [16, 32], strides = [1, 1]} : vector<16x384xbf16> to vector<16x32xbf16>
    %37 = vector.extract_strided_slice %34 {offsets = [0, 256], sizes = [16, 32], strides = [1, 1]} : vector<16x384xbf16> to vector<16x32xbf16>
    %cst_18 = arith.constant dense<0.000000e+00> : vector<16x16xf32>
    %38 = tpu.matmul %35, %36, %cst_18 {dimension_numbers = #tpu.dot_dimension_numbers<[1], [1], [0], [0], [0, 0, 1, 0], [], []>} : vector<16x32xbf16>, vector<16x32xbf16>, vector<16x16xf32> -> vector<16x16xf32>
    %cst_19 = arith.constant 0.176776692 : f32
    %39 = vector.broadcast %cst_19 : f32 to vector<16x16xf32>
    %40 = arith.mulf %38, %39 : vector<16x16xf32>
    %41 = arith.addf %40, %25 : vector<16x16xf32>
    %cst_20 = arith.constant dense<0xFF800000> : vector<16xf32>
    %42 = vector.multi_reduction <maximumf>, %41, %cst_20 [1] : vector<16x16xf32> to vector<16xf32>
    %43 = vector.shape_cast %42 : vector<16xf32> to vector<16x1xf32>
    %44 = vector.broadcast %43 : vector<16x1xf32> to vector<16x16xf32>
    %45 = arith.subf %41, %44 : vector<16x16xf32>
    %46 = math.exp %45 : vector<16x16xf32>
    %cst_21 = arith.constant dense<0.000000e+00> : vector<16xf32>
    %47 = vector.multi_reduction <add>, %46, %cst_21 [1] : vector<16x16xf32> to vector<16xf32>
    %48 = vector.shape_cast %47 : vector<16xf32> to vector<16x1xf32>
    %49 = tpu.reciprocal %48 {approx = true} : vector<16x1xf32> -> vector<16x1xf32>
    %50 = vector.broadcast %49 : vector<16x1xf32> to vector<16x16xf32>
    %51 = arith.mulf %46, %50 : vector<16x16xf32>
    %52 = arith.truncf %51 : vector<16x16xf32> to vector<16x16xbf16>
    %cst_22 = arith.constant dense<0.000000e+00> : vector<16x32xf32>
    %53 = tpu.matmul %52, %37, %cst_22 {dimension_numbers = #tpu.dot_dimension_numbers<[1], [0], [0], [1], [0, 0, 1, 1], [], []>} : vector<16x16xbf16>, vector<16x32xbf16>, vector<16x32xf32> -> vector<16x32xf32>
    %54 = vector.extract_strided_slice %34 {offsets = [0, 32], sizes = [16, 32], strides = [1, 1]} : vector<16x384xbf16> to vector<16x32xbf16>
    %55 = vector.extract_strided_slice %34 {offsets = [0, 160], sizes = [16, 32], strides = [1, 1]} : vector<16x384xbf16> to vector<16x32xbf16>
    %56 = vector.extract_strided_slice %34 {offsets = [0, 288], sizes = [16, 32], strides = [1, 1]} : vector<16x384xbf16> to vector<16x32xbf16>
    %cst_23 = arith.constant dense<0.000000e+00> : vector<16x16xf32>
    %57 = tpu.matmul %54, %55, %cst_23 {dimension_numbers = #tpu.dot_dimension_numbers<[1], [1], [0], [0], [0, 0, 1, 0], [], []>} : vector<16x32xbf16>, vector<16x32xbf16>, vector<16x16xf32> -> vector<16x16xf32>
    %cst_24 = arith.constant 0.176776692 : f32
    %58 = vector.broadcast %cst_24 : f32 to vector<16x16xf32>
    %59 = arith.mulf %57, %58 : vector<16x16xf32>
    %60 = arith.addf %59, %25 : vector<16x16xf32>
    %cst_25 = arith.constant dense<0xFF800000> : vector<16xf32>
    %61 = vector.multi_reduction <maximumf>, %60, %cst_25 [1] : vector<16x16xf32> to vector<16xf32>
    %62 = vector.shape_cast %61 : vector<16xf32> to vector<16x1xf32>
    %63 = vector.broadcast %62 : vector<16x1xf32> to vector<16x16xf32>
    %64 = arith.subf %60, %63 : vector<16x16xf32>
    %65 = math.exp %64 : vector<16x16xf32>
    %cst_26 = arith.constant dense<0.000000e+00> : vector<16xf32>
    %66 = vector.multi_reduction <add>, %65, %cst_26 [1] : vector<16x16xf32> to vector<16xf32>
    %67 = vector.shape_cast %66 : vector<16xf32> to vector<16x1xf32>
    %68 = tpu.reciprocal %67 {approx = true} : vector<16x1xf32> -> vector<16x1xf32>
    %69 = vector.broadcast %68 : vector<16x1xf32> to vector<16x16xf32>
    %70 = arith.mulf %65, %69 : vector<16x16xf32>
    %71 = arith.truncf %70 : vector<16x16xf32> to vector<16x16xbf16>
    %cst_27 = arith.constant dense<0.000000e+00> : vector<16x32xf32>
    %72 = tpu.matmul %71, %56, %cst_27 {dimension_numbers = #tpu.dot_dimension_numbers<[1], [0], [0], [1], [0, 0, 1, 1], [], []>} : vector<16x16xbf16>, vector<16x32xbf16>, vector<16x32xf32> -> vector<16x32xf32>
    %73 = vector.extract_strided_slice %34 {offsets = [0, 64], sizes = [16, 32], strides = [1, 1]} : vector<16x384xbf16> to vector<16x32xbf16>
    %74 = vector.extract_strided_slice %34 {offsets = [0, 192], sizes = [16, 32], strides = [1, 1]} : vector<16x384xbf16> to vector<16x32xbf16>
    %75 = vector.extract_strided_slice %34 {offsets = [0, 320], sizes = [16, 32], strides = [1, 1]} : vector<16x384xbf16> to vector<16x32xbf16>
    %cst_28 = arith.constant dense<0.000000e+00> : vector<16x16xf32>
    %76 = tpu.matmul %73, %74, %cst_28 {dimension_numbers = #tpu.dot_dimension_numbers<[1], [1], [0], [0], [0, 0, 1, 0], [], []>} : vector<16x32xbf16>, vector<16x32xbf16>, vector<16x16xf32> -> vector<16x16xf32>
    %cst_29 = arith.constant 0.176776692 : f32
    %77 = vector.broadcast %cst_29 : f32 to vector<16x16xf32>
    %78 = arith.mulf %76, %77 : vector<16x16xf32>
    %79 = arith.addf %78, %25 : vector<16x16xf32>
    %cst_30 = arith.constant dense<0xFF800000> : vector<16xf32>
    %80 = vector.multi_reduction <maximumf>, %79, %cst_30 [1] : vector<16x16xf32> to vector<16xf32>
    %81 = vector.shape_cast %80 : vector<16xf32> to vector<16x1xf32>
    %82 = vector.broadcast %81 : vector<16x1xf32> to vector<16x16xf32>
    %83 = arith.subf %79, %82 : vector<16x16xf32>
    %84 = math.exp %83 : vector<16x16xf32>
    %cst_31 = arith.constant dense<0.000000e+00> : vector<16xf32>
    %85 = vector.multi_reduction <add>, %84, %cst_31 [1] : vector<16x16xf32> to vector<16xf32>
    %86 = vector.shape_cast %85 : vector<16xf32> to vector<16x1xf32>
    %87 = tpu.reciprocal %86 {approx = true} : vector<16x1xf32> -> vector<16x1xf32>
    %88 = vector.broadcast %87 : vector<16x1xf32> to vector<16x16xf32>
    %89 = arith.mulf %84, %88 : vector<16x16xf32>
    %90 = arith.truncf %89 : vector<16x16xf32> to vector<16x16xbf16>
    %cst_32 = arith.constant dense<0.000000e+00> : vector<16x32xf32>
    %91 = tpu.matmul %90, %75, %cst_32 {dimension_numbers = #tpu.dot_dimension_numbers<[1], [0], [0], [1], [0, 0, 1, 1], [], []>} : vector<16x16xbf16>, vector<16x32xbf16>, vector<16x32xf32> -> vector<16x32xf32>
    %92 = vector.extract_strided_slice %34 {offsets = [0, 96], sizes = [16, 32], strides = [1, 1]} : vector<16x384xbf16> to vector<16x32xbf16>
    %93 = vector.extract_strided_slice %34 {offsets = [0, 224], sizes = [16, 32], strides = [1, 1]} : vector<16x384xbf16> to vector<16x32xbf16>
    %94 = vector.extract_strided_slice %34 {offsets = [0, 352], sizes = [16, 32], strides = [1, 1]} : vector<16x384xbf16> to vector<16x32xbf16>
    %cst_33 = arith.constant dense<0.000000e+00> : vector<16x16xf32>
    %95 = tpu.matmul %92, %93, %cst_33 {dimension_numbers = #tpu.dot_dimension_numbers<[1], [1], [0], [0], [0, 0, 1, 0], [], []>} : vector<16x32xbf16>, vector<16x32xbf16>, vector<16x16xf32> -> vector<16x16xf32>
    %cst_34 = arith.constant 0.176776692 : f32
    %96 = vector.broadcast %cst_34 : f32 to vector<16x16xf32>
    %97 = arith.mulf %95, %96 : vector<16x16xf32>
    %98 = arith.addf %97, %25 : vector<16x16xf32>
    %cst_35 = arith.constant dense<0xFF800000> : vector<16xf32>
    %99 = vector.multi_reduction <maximumf>, %98, %cst_35 [1] : vector<16x16xf32> to vector<16xf32>
    %100 = vector.shape_cast %99 : vector<16xf32> to vector<16x1xf32>
    %101 = vector.broadcast %100 : vector<16x1xf32> to vector<16x16xf32>
    %102 = arith.subf %98, %101 : vector<16x16xf32>
    %103 = math.exp %102 : vector<16x16xf32>
    %cst_36 = arith.constant dense<0.000000e+00> : vector<16xf32>
    %104 = vector.multi_reduction <add>, %103, %cst_36 [1] : vector<16x16xf32> to vector<16xf32>
    %105 = vector.shape_cast %104 : vector<16xf32> to vector<16x1xf32>
    %106 = tpu.reciprocal %105 {approx = true} : vector<16x1xf32> -> vector<16x1xf32>
    %107 = vector.broadcast %106 : vector<16x1xf32> to vector<16x16xf32>
    %108 = arith.mulf %103, %107 : vector<16x16xf32>
    %109 = arith.truncf %108 : vector<16x16xf32> to vector<16x16xbf16>
    %cst_37 = arith.constant dense<0.000000e+00> : vector<16x32xf32>
    %110 = tpu.matmul %109, %94, %cst_37 {dimension_numbers = #tpu.dot_dimension_numbers<[1], [0], [0], [1], [0, 0, 1, 1], [], []>} : vector<16x16xbf16>, vector<16x32xbf16>, vector<16x32xf32> -> vector<16x32xf32>
    %111 = tpu.concatenate %53, %72, %91, %110 in 1 : vector<16x32xf32>, vector<16x32xf32>, vector<16x32xf32>, vector<16x32xf32> -> vector<16x128xf32>
    %112 = arith.truncf %111 : vector<16x128xf32> to vector<16x128xbf16>
    %c0_38 = arith.constant 0 : index
    %c0_39 = arith.constant 0 : index
    %c0_40 = arith.constant 0 : index
    %113 = vector.load %arg7[%c0_38, %c0_39, %c0_40] : memref<2x128x128xbf16, #tpu.memory_space<vmem>>, vector<1x128x128xbf16>
    %114 = vector.shape_cast %113 : vector<1x128x128xbf16> to vector<128x128xbf16>
    %cst_41 = arith.constant dense<0.000000e+00> : vector<16x128xf32>
    %115 = tpu.matmul %112, %114, %cst_41 {dimension_numbers = #tpu.dot_dimension_numbers<[1], [0], [0], [1], [0, 0, 1, 1], [], []>} : vector<16x128xbf16>, vector<128x128xbf16>, vector<16x128xf32> -> vector<16x128xf32>
    %c0_42 = arith.constant 0 : index
    %c0_43 = arith.constant 0 : index
    %c0_44 = arith.constant 0 : index
    %116 = vector.load %arg8[%c0_42, %c0_43, %c0_44] : memref<2x1x128xf32, #tpu.memory_space<vmem>>, vector<1x1x128xf32>
    %117 = vector.shape_cast %116 : vector<1x1x128xf32> to vector<1x128xf32>
    %118 = vector.broadcast %117 : vector<1x128xf32> to vector<16x128xf32>
    %119 = arith.addf %115, %118 : vector<16x128xf32>
    %120 = arith.addf %119, %24 : vector<16x128xf32>
    %c0_45 = arith.constant 0 : index
    %c0_46 = arith.constant 0 : index
    %c0_47 = arith.constant 0 : index
    %121 = vector.load %arg9[%c0_45, %c0_46, %c0_47] : memref<2x1x128xf32, #tpu.memory_space<vmem>>, vector<1x1x128xf32>
    %122 = vector.shape_cast %121 : vector<1x1x128xf32> to vector<1x128xf32>
    %c0_48 = arith.constant 0 : index
    %c0_49 = arith.constant 0 : index
    %c0_50 = arith.constant 0 : index
    %123 = vector.load %arg10[%c0_48, %c0_49, %c0_50] : memref<2x1x128xf32, #tpu.memory_space<vmem>>, vector<1x1x128xf32>
    %124 = vector.shape_cast %123 : vector<1x1x128xf32> to vector<1x128xf32>
    %cst_51 = arith.constant dense<0.000000e+00> : vector<16xf32>
    %125 = vector.multi_reduction <add>, %120, %cst_51 [1] : vector<16x128xf32> to vector<16xf32>
    %126 = vector.shape_cast %125 : vector<16xf32> to vector<16x1xf32>
    %cst_52 = arith.constant 1.280000e+02 : f32
    %127 = vector.broadcast %cst_52 : f32 to vector<16x1xf32>
    %128 = arith.divf %126, %127 : vector<16x1xf32>
    %129 = vector.broadcast %128 : vector<16x1xf32> to vector<16x128xf32>
    %130 = arith.subf %120, %129 : vector<16x128xf32>
    %131 = arith.mulf %130, %130 : vector<16x128xf32>
    %cst_53 = arith.constant dense<0.000000e+00> : vector<16xf32>
    %132 = vector.multi_reduction <add>, %131, %cst_53 [1] : vector<16x128xf32> to vector<16xf32>
    %133 = vector.shape_cast %132 : vector<16xf32> to vector<16x1xf32>
    %cst_54 = arith.constant 1.280000e+02 : f32
    %134 = vector.broadcast %cst_54 : f32 to vector<16x1xf32>
    %135 = arith.divf %133, %134 : vector<16x1xf32>
    %cst_55 = arith.constant 9.99999996E-13 : f32
    %136 = vector.broadcast %cst_55 : f32 to vector<16x1xf32>
    %137 = arith.addf %135, %136 : vector<16x1xf32>
    %138 = math.rsqrt %137 : vector<16x1xf32>
    %139 = vector.broadcast %128 : vector<16x1xf32> to vector<16x128xf32>
    %140 = arith.subf %120, %139 : vector<16x128xf32>
    %141 = vector.broadcast %138 : vector<16x1xf32> to vector<16x128xf32>
    %142 = arith.mulf %140, %141 : vector<16x128xf32>
    %143 = vector.broadcast %122 : vector<1x128xf32> to vector<16x128xf32>
    %144 = arith.mulf %142, %143 : vector<16x128xf32>
    %145 = vector.broadcast %124 : vector<1x128xf32> to vector<16x128xf32>
    %146 = arith.addf %144, %145 : vector<16x128xf32>
    %147 = arith.truncf %146 : vector<16x128xf32> to vector<16x128xbf16>
    %c0_56 = arith.constant 0 : index
    %c0_57 = arith.constant 0 : index
    %c0_58 = arith.constant 0 : index
    %148 = vector.load %arg11[%c0_56, %c0_57, %c0_58] : memref<2x128x512xbf16, #tpu.memory_space<vmem>>, vector<1x128x512xbf16>
    %149 = vector.shape_cast %148 : vector<1x128x512xbf16> to vector<128x512xbf16>
    %cst_59 = arith.constant dense<0.000000e+00> : vector<16x512xf32>
    %150 = tpu.matmul %147, %149, %cst_59 {dimension_numbers = #tpu.dot_dimension_numbers<[1], [0], [0], [1], [0, 0, 1, 1], [], []>} : vector<16x128xbf16>, vector<128x512xbf16>, vector<16x512xf32> -> vector<16x512xf32>
    %c0_60 = arith.constant 0 : index
    %c0_61 = arith.constant 0 : index
    %c0_62 = arith.constant 0 : index
    %151 = vector.load %arg12[%c0_60, %c0_61, %c0_62] : memref<2x1x512xf32, #tpu.memory_space<vmem>>, vector<1x1x512xf32>
    %152 = vector.shape_cast %151 : vector<1x1x512xf32> to vector<1x512xf32>
    %153 = vector.broadcast %152 : vector<1x512xf32> to vector<16x512xf32>
    %154 = arith.addf %150, %153 : vector<16x512xf32>
    %155 = arith.mulf %154, %154 : vector<16x512xf32>
    %156 = arith.mulf %154, %155 : vector<16x512xf32>
    %cst_63 = arith.constant 4.471500e-02 : f32
    %157 = vector.broadcast %cst_63 : f32 to vector<16x512xf32>
    %158 = arith.mulf %157, %156 : vector<16x512xf32>
    %159 = arith.addf %154, %158 : vector<16x512xf32>
    %cst_64 = arith.constant 0.797884583 : f32
    %160 = vector.broadcast %cst_64 : f32 to vector<16x512xf32>
    %161 = arith.mulf %160, %159 : vector<16x512xf32>
    %162 = math.tanh %161 : vector<16x512xf32>
    %cst_65 = arith.constant 1.000000e+00 : f32
    %163 = vector.broadcast %cst_65 : f32 to vector<16x512xf32>
    %164 = arith.addf %163, %162 : vector<16x512xf32>
    %cst_66 = arith.constant 5.000000e-01 : f32
    %165 = vector.broadcast %cst_66 : f32 to vector<16x512xf32>
    %166 = arith.mulf %165, %164 : vector<16x512xf32>
    %167 = arith.mulf %154, %166 : vector<16x512xf32>
    %168 = arith.truncf %167 : vector<16x512xf32> to vector<16x512xbf16>
    %c0_67 = arith.constant 0 : index
    %c0_68 = arith.constant 0 : index
    %c0_69 = arith.constant 0 : index
    %169 = vector.load %arg13[%c0_67, %c0_68, %c0_69] : memref<2x512x128xbf16, #tpu.memory_space<vmem>>, vector<1x512x128xbf16>
    %170 = vector.shape_cast %169 : vector<1x512x128xbf16> to vector<512x128xbf16>
    %cst_70 = arith.constant dense<0.000000e+00> : vector<16x128xf32>
    %171 = tpu.matmul %168, %170, %cst_70 {dimension_numbers = #tpu.dot_dimension_numbers<[1], [0], [0], [1], [0, 0, 1, 1], [], []>} : vector<16x512xbf16>, vector<512x128xbf16>, vector<16x128xf32> -> vector<16x128xf32>
    %c0_71 = arith.constant 0 : index
    %c0_72 = arith.constant 0 : index
    %c0_73 = arith.constant 0 : index
    %172 = vector.load %arg14[%c0_71, %c0_72, %c0_73] : memref<2x1x128xf32, #tpu.memory_space<vmem>>, vector<1x1x128xf32>
    %173 = vector.shape_cast %172 : vector<1x1x128xf32> to vector<1x128xf32>
    %174 = vector.broadcast %173 : vector<1x128xf32> to vector<16x128xf32>
    %175 = arith.addf %171, %174 : vector<16x128xf32>
    %176 = arith.addf %175, %146 : vector<16x128xf32>
    %c0_74 = arith.constant 0 : index
    %c0_75 = arith.constant 0 : index
    %c0_76 = arith.constant 0 : index
    %177 = vector.load %arg15[%c0_74, %c0_75, %c0_76] : memref<2x1x128xf32, #tpu.memory_space<vmem>>, vector<1x1x128xf32>
    %178 = vector.shape_cast %177 : vector<1x1x128xf32> to vector<1x128xf32>
    %c0_77 = arith.constant 0 : index
    %c0_78 = arith.constant 0 : index
    %c0_79 = arith.constant 0 : index
    %179 = vector.load %arg16[%c0_77, %c0_78, %c0_79] : memref<2x1x128xf32, #tpu.memory_space<vmem>>, vector<1x1x128xf32>
    %180 = vector.shape_cast %179 : vector<1x1x128xf32> to vector<1x128xf32>
    %cst_80 = arith.constant dense<0.000000e+00> : vector<16xf32>
    %181 = vector.multi_reduction <add>, %176, %cst_80 [1] : vector<16x128xf32> to vector<16xf32>
    %182 = vector.shape_cast %181 : vector<16xf32> to vector<16x1xf32>
    %cst_81 = arith.constant 1.280000e+02 : f32
    %183 = vector.broadcast %cst_81 : f32 to vector<16x1xf32>
    %184 = arith.divf %182, %183 : vector<16x1xf32>
    %185 = vector.broadcast %184 : vector<16x1xf32> to vector<16x128xf32>
    %186 = arith.subf %176, %185 : vector<16x128xf32>
    %187 = arith.mulf %186, %186 : vector<16x128xf32>
    %cst_82 = arith.constant dense<0.000000e+00> : vector<16xf32>
    %188 = vector.multi_reduction <add>, %187, %cst_82 [1] : vector<16x128xf32> to vector<16xf32>
    %189 = vector.shape_cast %188 : vector<16xf32> to vector<16x1xf32>
    %cst_83 = arith.constant 1.280000e+02 : f32
    %190 = vector.broadcast %cst_83 : f32 to vector<16x1xf32>
    %191 = arith.divf %189, %190 : vector<16x1xf32>
    %cst_84 = arith.constant 9.99999996E-13 : f32
    %192 = vector.broadcast %cst_84 : f32 to vector<16x1xf32>
    %193 = arith.addf %191, %192 : vector<16x1xf32>
    %194 = math.rsqrt %193 : vector<16x1xf32>
    %195 = vector.broadcast %184 : vector<16x1xf32> to vector<16x128xf32>
    %196 = arith.subf %176, %195 : vector<16x128xf32>
    %197 = vector.broadcast %194 : vector<16x1xf32> to vector<16x128xf32>
    %198 = arith.mulf %196, %197 : vector<16x128xf32>
    %199 = vector.broadcast %178 : vector<1x128xf32> to vector<16x128xf32>
    %200 = arith.mulf %198, %199 : vector<16x128xf32>
    %201 = vector.broadcast %180 : vector<1x128xf32> to vector<16x128xf32>
    %202 = arith.addf %200, %201 : vector<16x128xf32>
    %203 = arith.truncf %202 : vector<16x128xf32> to vector<16x128xbf16>
    %c1 = arith.constant 1 : index
    %c0_85 = arith.constant 0 : index
    %c0_86 = arith.constant 0 : index
    %204 = vector.load %arg5[%c1, %c0_85, %c0_86] : memref<2x128x384xbf16, #tpu.memory_space<vmem>>, vector<1x128x384xbf16>
    %205 = vector.shape_cast %204 : vector<1x128x384xbf16> to vector<128x384xbf16>
    %cst_87 = arith.constant dense<0.000000e+00> : vector<16x384xf32>
    %206 = tpu.matmul %203, %205, %cst_87 {dimension_numbers = #tpu.dot_dimension_numbers<[1], [0], [0], [1], [0, 0, 1, 1], [], []>} : vector<16x128xbf16>, vector<128x384xbf16>, vector<16x384xf32> -> vector<16x384xf32>
    %c1_88 = arith.constant 1 : index
    %c0_89 = arith.constant 0 : index
    %c0_90 = arith.constant 0 : index
    %207 = vector.load %arg6[%c1_88, %c0_89, %c0_90] : memref<2x1x384xf32, #tpu.memory_space<vmem>>, vector<1x1x384xf32>
    %208 = vector.shape_cast %207 : vector<1x1x384xf32> to vector<1x384xf32>
    %209 = vector.broadcast %208 : vector<1x384xf32> to vector<16x384xf32>
    %210 = arith.addf %206, %209 : vector<16x384xf32>
    %211 = arith.truncf %210 : vector<16x384xf32> to vector<16x384xbf16>
    %212 = vector.extract_strided_slice %211 {offsets = [0, 0], sizes = [16, 32], strides = [1, 1]} : vector<16x384xbf16> to vector<16x32xbf16>
    %213 = vector.extract_strided_slice %211 {offsets = [0, 128], sizes = [16, 32], strides = [1, 1]} : vector<16x384xbf16> to vector<16x32xbf16>
    %214 = vector.extract_strided_slice %211 {offsets = [0, 256], sizes = [16, 32], strides = [1, 1]} : vector<16x384xbf16> to vector<16x32xbf16>
    %cst_91 = arith.constant dense<0.000000e+00> : vector<16x16xf32>
    %215 = tpu.matmul %212, %213, %cst_91 {dimension_numbers = #tpu.dot_dimension_numbers<[1], [1], [0], [0], [0, 0, 1, 0], [], []>} : vector<16x32xbf16>, vector<16x32xbf16>, vector<16x16xf32> -> vector<16x16xf32>
    %cst_92 = arith.constant 0.176776692 : f32
    %216 = vector.broadcast %cst_92 : f32 to vector<16x16xf32>
    %217 = arith.mulf %215, %216 : vector<16x16xf32>
    %218 = arith.addf %217, %25 : vector<16x16xf32>
    %cst_93 = arith.constant dense<0xFF800000> : vector<16xf32>
    %219 = vector.multi_reduction <maximumf>, %218, %cst_93 [1] : vector<16x16xf32> to vector<16xf32>
    %220 = vector.shape_cast %219 : vector<16xf32> to vector<16x1xf32>
    %221 = vector.broadcast %220 : vector<16x1xf32> to vector<16x16xf32>
    %222 = arith.subf %218, %221 : vector<16x16xf32>
    %223 = math.exp %222 : vector<16x16xf32>
    %cst_94 = arith.constant dense<0.000000e+00> : vector<16xf32>
    %224 = vector.multi_reduction <add>, %223, %cst_94 [1] : vector<16x16xf32> to vector<16xf32>
    %225 = vector.shape_cast %224 : vector<16xf32> to vector<16x1xf32>
    %226 = tpu.reciprocal %225 {approx = true} : vector<16x1xf32> -> vector<16x1xf32>
    %227 = vector.broadcast %226 : vector<16x1xf32> to vector<16x16xf32>
    %228 = arith.mulf %223, %227 : vector<16x16xf32>
    %229 = arith.truncf %228 : vector<16x16xf32> to vector<16x16xbf16>
    %cst_95 = arith.constant dense<0.000000e+00> : vector<16x32xf32>
    %230 = tpu.matmul %229, %214, %cst_95 {dimension_numbers = #tpu.dot_dimension_numbers<[1], [0], [0], [1], [0, 0, 1, 1], [], []>} : vector<16x16xbf16>, vector<16x32xbf16>, vector<16x32xf32> -> vector<16x32xf32>
    %231 = vector.extract_strided_slice %211 {offsets = [0, 32], sizes = [16, 32], strides = [1, 1]} : vector<16x384xbf16> to vector<16x32xbf16>
    %232 = vector.extract_strided_slice %211 {offsets = [0, 160], sizes = [16, 32], strides = [1, 1]} : vector<16x384xbf16> to vector<16x32xbf16>
    %233 = vector.extract_strided_slice %211 {offsets = [0, 288], sizes = [16, 32], strides = [1, 1]} : vector<16x384xbf16> to vector<16x32xbf16>
    %cst_96 = arith.constant dense<0.000000e+00> : vector<16x16xf32>
    %234 = tpu.matmul %231, %232, %cst_96 {dimension_numbers = #tpu.dot_dimension_numbers<[1], [1], [0], [0], [0, 0, 1, 0], [], []>} : vector<16x32xbf16>, vector<16x32xbf16>, vector<16x16xf32> -> vector<16x16xf32>
    %cst_97 = arith.constant 0.176776692 : f32
    %235 = vector.broadcast %cst_97 : f32 to vector<16x16xf32>
    %236 = arith.mulf %234, %235 : vector<16x16xf32>
    %237 = arith.addf %236, %25 : vector<16x16xf32>
    %cst_98 = arith.constant dense<0xFF800000> : vector<16xf32>
    %238 = vector.multi_reduction <maximumf>, %237, %cst_98 [1] : vector<16x16xf32> to vector<16xf32>
    %239 = vector.shape_cast %238 : vector<16xf32> to vector<16x1xf32>
    %240 = vector.broadcast %239 : vector<16x1xf32> to vector<16x16xf32>
    %241 = arith.subf %237, %240 : vector<16x16xf32>
    %242 = math.exp %241 : vector<16x16xf32>
    %cst_99 = arith.constant dense<0.000000e+00> : vector<16xf32>
    %243 = vector.multi_reduction <add>, %242, %cst_99 [1] : vector<16x16xf32> to vector<16xf32>
    %244 = vector.shape_cast %243 : vector<16xf32> to vector<16x1xf32>
    %245 = tpu.reciprocal %244 {approx = true} : vector<16x1xf32> -> vector<16x1xf32>
    %246 = vector.broadcast %245 : vector<16x1xf32> to vector<16x16xf32>
    %247 = arith.mulf %242, %246 : vector<16x16xf32>
    %248 = arith.truncf %247 : vector<16x16xf32> to vector<16x16xbf16>
    %cst_100 = arith.constant dense<0.000000e+00> : vector<16x32xf32>
    %249 = tpu.matmul %248, %233, %cst_100 {dimension_numbers = #tpu.dot_dimension_numbers<[1], [0], [0], [1], [0, 0, 1, 1], [], []>} : vector<16x16xbf16>, vector<16x32xbf16>, vector<16x32xf32> -> vector<16x32xf32>
    %250 = vector.extract_strided_slice %211 {offsets = [0, 64], sizes = [16, 32], strides = [1, 1]} : vector<16x384xbf16> to vector<16x32xbf16>
    %251 = vector.extract_strided_slice %211 {offsets = [0, 192], sizes = [16, 32], strides = [1, 1]} : vector<16x384xbf16> to vector<16x32xbf16>
    %252 = vector.extract_strided_slice %211 {offsets = [0, 320], sizes = [16, 32], strides = [1, 1]} : vector<16x384xbf16> to vector<16x32xbf16>
    %cst_101 = arith.constant dense<0.000000e+00> : vector<16x16xf32>
    %253 = tpu.matmul %250, %251, %cst_101 {dimension_numbers = #tpu.dot_dimension_numbers<[1], [1], [0], [0], [0, 0, 1, 0], [], []>} : vector<16x32xbf16>, vector<16x32xbf16>, vector<16x16xf32> -> vector<16x16xf32>
    %cst_102 = arith.constant 0.176776692 : f32
    %254 = vector.broadcast %cst_102 : f32 to vector<16x16xf32>
    %255 = arith.mulf %253, %254 : vector<16x16xf32>
    %256 = arith.addf %255, %25 : vector<16x16xf32>
    %cst_103 = arith.constant dense<0xFF800000> : vector<16xf32>
    %257 = vector.multi_reduction <maximumf>, %256, %cst_103 [1] : vector<16x16xf32> to vector<16xf32>
    %258 = vector.shape_cast %257 : vector<16xf32> to vector<16x1xf32>
    %259 = vector.broadcast %258 : vector<16x1xf32> to vector<16x16xf32>
    %260 = arith.subf %256, %259 : vector<16x16xf32>
    %261 = math.exp %260 : vector<16x16xf32>
    %cst_104 = arith.constant dense<0.000000e+00> : vector<16xf32>
    %262 = vector.multi_reduction <add>, %261, %cst_104 [1] : vector<16x16xf32> to vector<16xf32>
    %263 = vector.shape_cast %262 : vector<16xf32> to vector<16x1xf32>
    %264 = tpu.reciprocal %263 {approx = true} : vector<16x1xf32> -> vector<16x1xf32>
    %265 = vector.broadcast %264 : vector<16x1xf32> to vector<16x16xf32>
    %266 = arith.mulf %261, %265 : vector<16x16xf32>
    %267 = arith.truncf %266 : vector<16x16xf32> to vector<16x16xbf16>
    %cst_105 = arith.constant dense<0.000000e+00> : vector<16x32xf32>
    %268 = tpu.matmul %267, %252, %cst_105 {dimension_numbers = #tpu.dot_dimension_numbers<[1], [0], [0], [1], [0, 0, 1, 1], [], []>} : vector<16x16xbf16>, vector<16x32xbf16>, vector<16x32xf32> -> vector<16x32xf32>
    %269 = vector.extract_strided_slice %211 {offsets = [0, 96], sizes = [16, 32], strides = [1, 1]} : vector<16x384xbf16> to vector<16x32xbf16>
    %270 = vector.extract_strided_slice %211 {offsets = [0, 224], sizes = [16, 32], strides = [1, 1]} : vector<16x384xbf16> to vector<16x32xbf16>
    %271 = vector.extract_strided_slice %211 {offsets = [0, 352], sizes = [16, 32], strides = [1, 1]} : vector<16x384xbf16> to vector<16x32xbf16>
    %cst_106 = arith.constant dense<0.000000e+00> : vector<16x16xf32>
    %272 = tpu.matmul %269, %270, %cst_106 {dimension_numbers = #tpu.dot_dimension_numbers<[1], [1], [0], [0], [0, 0, 1, 0], [], []>} : vector<16x32xbf16>, vector<16x32xbf16>, vector<16x16xf32> -> vector<16x16xf32>
    %cst_107 = arith.constant 0.176776692 : f32
    %273 = vector.broadcast %cst_107 : f32 to vector<16x16xf32>
    %274 = arith.mulf %272, %273 : vector<16x16xf32>
    %275 = arith.addf %274, %25 : vector<16x16xf32>
    %cst_108 = arith.constant dense<0xFF800000> : vector<16xf32>
    %276 = vector.multi_reduction <maximumf>, %275, %cst_108 [1] : vector<16x16xf32> to vector<16xf32>
    %277 = vector.shape_cast %276 : vector<16xf32> to vector<16x1xf32>
    %278 = vector.broadcast %277 : vector<16x1xf32> to vector<16x16xf32>
    %279 = arith.subf %275, %278 : vector<16x16xf32>
    %280 = math.exp %279 : vector<16x16xf32>
    %cst_109 = arith.constant dense<0.000000e+00> : vector<16xf32>
    %281 = vector.multi_reduction <add>, %280, %cst_109 [1] : vector<16x16xf32> to vector<16xf32>
    %282 = vector.shape_cast %281 : vector<16xf32> to vector<16x1xf32>
    %283 = tpu.reciprocal %282 {approx = true} : vector<16x1xf32> -> vector<16x1xf32>
    %284 = vector.broadcast %283 : vector<16x1xf32> to vector<16x16xf32>
    %285 = arith.mulf %280, %284 : vector<16x16xf32>
    %286 = arith.truncf %285 : vector<16x16xf32> to vector<16x16xbf16>
    %cst_110 = arith.constant dense<0.000000e+00> : vector<16x32xf32>
    %287 = tpu.matmul %286, %271, %cst_110 {dimension_numbers = #tpu.dot_dimension_numbers<[1], [0], [0], [1], [0, 0, 1, 1], [], []>} : vector<16x16xbf16>, vector<16x32xbf16>, vector<16x32xf32> -> vector<16x32xf32>
    %288 = tpu.concatenate %230, %249, %268, %287 in 1 : vector<16x32xf32>, vector<16x32xf32>, vector<16x32xf32>, vector<16x32xf32> -> vector<16x128xf32>
    %289 = arith.truncf %288 : vector<16x128xf32> to vector<16x128xbf16>
    %c1_111 = arith.constant 1 : index
    %c0_112 = arith.constant 0 : index
    %c0_113 = arith.constant 0 : index
    %290 = vector.load %arg7[%c1_111, %c0_112, %c0_113] : memref<2x128x128xbf16, #tpu.memory_space<vmem>>, vector<1x128x128xbf16>
    %291 = vector.shape_cast %290 : vector<1x128x128xbf16> to vector<128x128xbf16>
    %cst_114 = arith.constant dense<0.000000e+00> : vector<16x128xf32>
    %292 = tpu.matmul %289, %291, %cst_114 {dimension_numbers = #tpu.dot_dimension_numbers<[1], [0], [0], [1], [0, 0, 1, 1], [], []>} : vector<16x128xbf16>, vector<128x128xbf16>, vector<16x128xf32> -> vector<16x128xf32>
    %c1_115 = arith.constant 1 : index
    %c0_116 = arith.constant 0 : index
    %c0_117 = arith.constant 0 : index
    %293 = vector.load %arg8[%c1_115, %c0_116, %c0_117] : memref<2x1x128xf32, #tpu.memory_space<vmem>>, vector<1x1x128xf32>
    %294 = vector.shape_cast %293 : vector<1x1x128xf32> to vector<1x128xf32>
    %295 = vector.broadcast %294 : vector<1x128xf32> to vector<16x128xf32>
    %296 = arith.addf %292, %295 : vector<16x128xf32>
    %297 = arith.addf %296, %202 : vector<16x128xf32>
    %c1_118 = arith.constant 1 : index
    %c0_119 = arith.constant 0 : index
    %c0_120 = arith.constant 0 : index
    %298 = vector.load %arg9[%c1_118, %c0_119, %c0_120] : memref<2x1x128xf32, #tpu.memory_space<vmem>>, vector<1x1x128xf32>
    %299 = vector.shape_cast %298 : vector<1x1x128xf32> to vector<1x128xf32>
    %c1_121 = arith.constant 1 : index
    %c0_122 = arith.constant 0 : index
    %c0_123 = arith.constant 0 : index
    %300 = vector.load %arg10[%c1_121, %c0_122, %c0_123] : memref<2x1x128xf32, #tpu.memory_space<vmem>>, vector<1x1x128xf32>
    %301 = vector.shape_cast %300 : vector<1x1x128xf32> to vector<1x128xf32>
    %cst_124 = arith.constant dense<0.000000e+00> : vector<16xf32>
    %302 = vector.multi_reduction <add>, %297, %cst_124 [1] : vector<16x128xf32> to vector<16xf32>
    %303 = vector.shape_cast %302 : vector<16xf32> to vector<16x1xf32>
    %cst_125 = arith.constant 1.280000e+02 : f32
    %304 = vector.broadcast %cst_125 : f32 to vector<16x1xf32>
    %305 = arith.divf %303, %304 : vector<16x1xf32>
    %306 = vector.broadcast %305 : vector<16x1xf32> to vector<16x128xf32>
    %307 = arith.subf %297, %306 : vector<16x128xf32>
    %308 = arith.mulf %307, %307 : vector<16x128xf32>
    %cst_126 = arith.constant dense<0.000000e+00> : vector<16xf32>
    %309 = vector.multi_reduction <add>, %308, %cst_126 [1] : vector<16x128xf32> to vector<16xf32>
    %310 = vector.shape_cast %309 : vector<16xf32> to vector<16x1xf32>
    %cst_127 = arith.constant 1.280000e+02 : f32
    %311 = vector.broadcast %cst_127 : f32 to vector<16x1xf32>
    %312 = arith.divf %310, %311 : vector<16x1xf32>
    %cst_128 = arith.constant 9.99999996E-13 : f32
    %313 = vector.broadcast %cst_128 : f32 to vector<16x1xf32>
    %314 = arith.addf %312, %313 : vector<16x1xf32>
    %315 = math.rsqrt %314 : vector<16x1xf32>
    %316 = vector.broadcast %305 : vector<16x1xf32> to vector<16x128xf32>
    %317 = arith.subf %297, %316 : vector<16x128xf32>
    %318 = vector.broadcast %315 : vector<16x1xf32> to vector<16x128xf32>
    %319 = arith.mulf %317, %318 : vector<16x128xf32>
    %320 = vector.broadcast %299 : vector<1x128xf32> to vector<16x128xf32>
    %321 = arith.mulf %319, %320 : vector<16x128xf32>
    %322 = vector.broadcast %301 : vector<1x128xf32> to vector<16x128xf32>
    %323 = arith.addf %321, %322 : vector<16x128xf32>
    %324 = arith.truncf %323 : vector<16x128xf32> to vector<16x128xbf16>
    %c1_129 = arith.constant 1 : index
    %c0_130 = arith.constant 0 : index
    %c0_131 = arith.constant 0 : index
    %325 = vector.load %arg11[%c1_129, %c0_130, %c0_131] : memref<2x128x512xbf16, #tpu.memory_space<vmem>>, vector<1x128x512xbf16>
    %326 = vector.shape_cast %325 : vector<1x128x512xbf16> to vector<128x512xbf16>
    %cst_132 = arith.constant dense<0.000000e+00> : vector<16x512xf32>
    %327 = tpu.matmul %324, %326, %cst_132 {dimension_numbers = #tpu.dot_dimension_numbers<[1], [0], [0], [1], [0, 0, 1, 1], [], []>} : vector<16x128xbf16>, vector<128x512xbf16>, vector<16x512xf32> -> vector<16x512xf32>
    %c1_133 = arith.constant 1 : index
    %c0_134 = arith.constant 0 : index
    %c0_135 = arith.constant 0 : index
    %328 = vector.load %arg12[%c1_133, %c0_134, %c0_135] : memref<2x1x512xf32, #tpu.memory_space<vmem>>, vector<1x1x512xf32>
    %329 = vector.shape_cast %328 : vector<1x1x512xf32> to vector<1x512xf32>
    %330 = vector.broadcast %329 : vector<1x512xf32> to vector<16x512xf32>
    %331 = arith.addf %327, %330 : vector<16x512xf32>
    %332 = arith.mulf %331, %331 : vector<16x512xf32>
    %333 = arith.mulf %331, %332 : vector<16x512xf32>
    %cst_136 = arith.constant 4.471500e-02 : f32
    %334 = vector.broadcast %cst_136 : f32 to vector<16x512xf32>
    %335 = arith.mulf %334, %333 : vector<16x512xf32>
    %336 = arith.addf %331, %335 : vector<16x512xf32>
    %cst_137 = arith.constant 0.797884583 : f32
    %337 = vector.broadcast %cst_137 : f32 to vector<16x512xf32>
    %338 = arith.mulf %337, %336 : vector<16x512xf32>
    %339 = math.tanh %338 : vector<16x512xf32>
    %cst_138 = arith.constant 1.000000e+00 : f32
    %340 = vector.broadcast %cst_138 : f32 to vector<16x512xf32>
    %341 = arith.addf %340, %339 : vector<16x512xf32>
    %cst_139 = arith.constant 5.000000e-01 : f32
    %342 = vector.broadcast %cst_139 : f32 to vector<16x512xf32>
    %343 = arith.mulf %342, %341 : vector<16x512xf32>
    %344 = arith.mulf %331, %343 : vector<16x512xf32>
    %345 = arith.truncf %344 : vector<16x512xf32> to vector<16x512xbf16>
    %c1_140 = arith.constant 1 : index
    %c0_141 = arith.constant 0 : index
    %c0_142 = arith.constant 0 : index
    %346 = vector.load %arg13[%c1_140, %c0_141, %c0_142] : memref<2x512x128xbf16, #tpu.memory_space<vmem>>, vector<1x512x128xbf16>
    %347 = vector.shape_cast %346 : vector<1x512x128xbf16> to vector<512x128xbf16>
    %cst_143 = arith.constant dense<0.000000e+00> : vector<16x128xf32>
    %348 = tpu.matmul %345, %347, %cst_143 {dimension_numbers = #tpu.dot_dimension_numbers<[1], [0], [0], [1], [0, 0, 1, 1], [], []>} : vector<16x512xbf16>, vector<512x128xbf16>, vector<16x128xf32> -> vector<16x128xf32>
    %c1_144 = arith.constant 1 : index
    %c0_145 = arith.constant 0 : index
    %c0_146 = arith.constant 0 : index
    %349 = vector.load %arg14[%c1_144, %c0_145, %c0_146] : memref<2x1x128xf32, #tpu.memory_space<vmem>>, vector<1x1x128xf32>
    %350 = vector.shape_cast %349 : vector<1x1x128xf32> to vector<1x128xf32>
    %351 = vector.broadcast %350 : vector<1x128xf32> to vector<16x128xf32>
    %352 = arith.addf %348, %351 : vector<16x128xf32>
    %353 = arith.addf %352, %323 : vector<16x128xf32>
    %c1_147 = arith.constant 1 : index
    %c0_148 = arith.constant 0 : index
    %c0_149 = arith.constant 0 : index
    %354 = vector.load %arg15[%c1_147, %c0_148, %c0_149] : memref<2x1x128xf32, #tpu.memory_space<vmem>>, vector<1x1x128xf32>
    %355 = vector.shape_cast %354 : vector<1x1x128xf32> to vector<1x128xf32>
    %c1_150 = arith.constant 1 : index
    %c0_151 = arith.constant 0 : index
    %c0_152 = arith.constant 0 : index
    %356 = vector.load %arg16[%c1_150, %c0_151, %c0_152] : memref<2x1x128xf32, #tpu.memory_space<vmem>>, vector<1x1x128xf32>
    %357 = vector.shape_cast %356 : vector<1x1x128xf32> to vector<1x128xf32>
    %cst_153 = arith.constant dense<0.000000e+00> : vector<16xf32>
    %358 = vector.multi_reduction <add>, %353, %cst_153 [1] : vector<16x128xf32> to vector<16xf32>
    %359 = vector.shape_cast %358 : vector<16xf32> to vector<16x1xf32>
    %cst_154 = arith.constant 1.280000e+02 : f32
    %360 = vector.broadcast %cst_154 : f32 to vector<16x1xf32>
    %361 = arith.divf %359, %360 : vector<16x1xf32>
    %362 = vector.broadcast %361 : vector<16x1xf32> to vector<16x128xf32>
    %363 = arith.subf %353, %362 : vector<16x128xf32>
    %364 = arith.mulf %363, %363 : vector<16x128xf32>
    %cst_155 = arith.constant dense<0.000000e+00> : vector<16xf32>
    %365 = vector.multi_reduction <add>, %364, %cst_155 [1] : vector<16x128xf32> to vector<16xf32>
    %366 = vector.shape_cast %365 : vector<16xf32> to vector<16x1xf32>
    %cst_156 = arith.constant 1.280000e+02 : f32
    %367 = vector.broadcast %cst_156 : f32 to vector<16x1xf32>
    %368 = arith.divf %366, %367 : vector<16x1xf32>
    %cst_157 = arith.constant 9.99999996E-13 : f32
    %369 = vector.broadcast %cst_157 : f32 to vector<16x1xf32>
    %370 = arith.addf %368, %369 : vector<16x1xf32>
    %371 = math.rsqrt %370 : vector<16x1xf32>
    %372 = vector.broadcast %361 : vector<16x1xf32> to vector<16x128xf32>
    %373 = arith.subf %353, %372 : vector<16x128xf32>
    %374 = vector.broadcast %371 : vector<16x1xf32> to vector<16x128xf32>
    %375 = arith.mulf %373, %374 : vector<16x128xf32>
    %376 = vector.broadcast %355 : vector<1x128xf32> to vector<16x128xf32>
    %377 = arith.mulf %375, %376 : vector<16x128xf32>
    %378 = vector.broadcast %357 : vector<1x128xf32> to vector<16x128xf32>
    %379 = arith.addf %377, %378 : vector<16x128xf32>
    %380 = vector.extract_strided_slice %379 {offsets = [0, 0], sizes = [1, 128], strides = [1, 1]} : vector<16x128xf32> to vector<1x128xf32>
    %381 = vector.extract_strided_slice %379 {offsets = [8, 0], sizes = [1, 128], strides = [1, 1]} : vector<16x128xf32> to vector<1x128xf32>
    %382 = tpu.concatenate %380, %381 in 0 : vector<1x128xf32>, vector<1x128xf32> -> vector<2x128xf32>
    %383 = arith.truncf %382 : vector<2x128xf32> to vector<2x128xbf16>
    %c0_158 = arith.constant 0 : index
    %c0_159 = arith.constant 0 : index
    %384 = vector.load %arg17[%c0_158, %c0_159] : memref<128x128xbf16, #tpu.memory_space<vmem>>, vector<128x128xbf16>
    %cst_160 = arith.constant dense<0.000000e+00> : vector<2x128xf32>
    %385 = tpu.matmul %383, %384, %cst_160 {dimension_numbers = #tpu.dot_dimension_numbers<[1], [0], [0], [1], [0, 0, 1, 1], [], []>} : vector<2x128xbf16>, vector<128x128xbf16>, vector<2x128xf32> -> vector<2x128xf32>
    %c0_161 = arith.constant 0 : index
    %c0_162 = arith.constant 0 : index
    %386 = vector.load %arg18[%c0_161, %c0_162] : memref<1x128xf32, #tpu.memory_space<vmem>>, vector<1x128xf32>
    %387 = vector.broadcast %386 : vector<1x128xf32> to vector<2x128xf32>
    %388 = arith.addf %385, %387 : vector<2x128xf32>
    %389 = math.tanh %388 : vector<2x128xf32>
    %c0_163 = arith.constant 0 : index
    %c0_164 = arith.constant 0 : index
    %390 = vector.load %arg19[%c0_163, %c0_164] : memref<1x128xf32, #tpu.memory_space<vmem>>, vector<1x128xf32>
    %391 = vector.broadcast %390 : vector<1x128xf32> to vector<2x128xf32>
    %392 = arith.mulf %389, %391 : vector<2x128xf32>
    %cst_165 = arith.constant dense<0.000000e+00> : vector<2xf32>
    %393 = vector.multi_reduction <add>, %392, %cst_165 [1] : vector<2x128xf32> to vector<2xf32>
    %394 = vector.shape_cast %393 : vector<2xf32> to vector<2x1xf32>
    %c0_166 = arith.constant 0 : index
    %c0_167 = arith.constant 0 : index
    %395 = vector.load %arg20[%c0_166, %c0_167] : memref<1x1xf32, #tpu.memory_space<vmem>>, vector<1x1xf32>
    %396 = vector.broadcast %395 : vector<1x1xf32> to vector<2x1xf32>
    %397 = arith.addf %394, %396 : vector<2x1xf32>
    %c0_168 = arith.constant 0 : index
    %c0_169 = arith.constant 0 : index
    %398 = vector.load %arg21[%c0_168, %c0_169] : memref<2x1xf32, #tpu.memory_space<vmem>>, vector<2x1xf32>
    tpu.vector_store %arg21[%c0_168, %c0_169], %397 {strides = array<i32>} : memref<2x1xf32, #tpu.memory_space<vmem>>, vector<2x1xf32>,
    return
  }
  func.func @transform_0(%arg0: i32) -> (i32, i32) {
    %c0_i32 = arith.constant 0 : i32
    %c0_i32_0 = arith.constant 0 : i32
    %c0_i32_1 = arith.constant 0 : i32
    return %c0_i32, %c0_i32_0 : i32, i32
  }
  func.func @transform_1(%arg0: i32) -> (i32, i32) {
    %c0_i32 = arith.constant 0 : i32
    %c0_i32_0 = arith.constant 0 : i32
    %c0_i32_1 = arith.constant 0 : i32
    return %c0_i32, %c0_i32_0 : i32, i32
  }
  func.func @transform_2(%arg0: i32) -> (i32, i32) {
    %c0_i32 = arith.constant 0 : i32
    %c0_i32_0 = arith.constant 0 : i32
    %c0_i32_1 = arith.constant 0 : i32
    return %c0_i32, %c0_i32_0 : i32, i32
  }
  func.func @transform_3(%arg0: i32) -> (i32, i32) {
    %c0_i32 = arith.constant 0 : i32
    %c0_i32_0 = arith.constant 0 : i32
    %c0_i32_1 = arith.constant 0 : i32
    return %c0_i32, %c0_i32_0 : i32, i32
  }
  func.func @transform_4(%arg0: i32) -> (i32, i32, i32) {
    %c0_i32 = arith.constant 0 : i32
    %c0_i32_0 = arith.constant 0 : i32
    %c0_i32_1 = arith.constant 0 : i32
    %c0_i32_2 = arith.constant 0 : i32
    return %c0_i32, %c0_i32_0, %c0_i32_1 : i32, i32, i32
  }
  func.func @transform_5(%arg0: i32) -> (i32, i32, i32) {
    %c0_i32 = arith.constant 0 : i32
    %c0_i32_0 = arith.constant 0 : i32
    %c0_i32_1 = arith.constant 0 : i32
    %c0_i32_2 = arith.constant 0 : i32
    return %c0_i32, %c0_i32_0, %c0_i32_1 : i32, i32, i32
  }
  func.func @transform_6(%arg0: i32) -> (i32, i32, i32) {
    %c0_i32 = arith.constant 0 : i32
    %c0_i32_0 = arith.constant 0 : i32
    %c0_i32_1 = arith.constant 0 : i32
    %c0_i32_2 = arith.constant 0 : i32
    return %c0_i32, %c0_i32_0, %c0_i32_1 : i32, i32, i32
  }
  func.func @transform_7(%arg0: i32) -> (i32, i32, i32) {
    %c0_i32 = arith.constant 0 : i32
    %c0_i32_0 = arith.constant 0 : i32
    %c0_i32_1 = arith.constant 0 : i32
    %c0_i32_2 = arith.constant 0 : i32
    return %c0_i32, %c0_i32_0, %c0_i32_1 : i32, i32, i32
  }
  func.func @transform_8(%arg0: i32) -> (i32, i32, i32) {
    %c0_i32 = arith.constant 0 : i32
    %c0_i32_0 = arith.constant 0 : i32
    %c0_i32_1 = arith.constant 0 : i32
    %c0_i32_2 = arith.constant 0 : i32
    return %c0_i32, %c0_i32_0, %c0_i32_1 : i32, i32, i32
  }
  func.func @transform_9(%arg0: i32) -> (i32, i32, i32) {
    %c0_i32 = arith.constant 0 : i32
    %c0_i32_0 = arith.constant 0 : i32
    %c0_i32_1 = arith.constant 0 : i32
    %c0_i32_2 = arith.constant 0 : i32
    return %c0_i32, %c0_i32_0, %c0_i32_1 : i32, i32, i32
  }
  func.func @transform_10(%arg0: i32) -> (i32, i32, i32) {
    %c0_i32 = arith.constant 0 : i32
    %c0_i32_0 = arith.constant 0 : i32
    %c0_i32_1 = arith.constant 0 : i32
    %c0_i32_2 = arith.constant 0 : i32
    return %c0_i32, %c0_i32_0, %c0_i32_1 : i32, i32, i32
  }
  func.func @transform_11(%arg0: i32) -> (i32, i32, i32) {
    %c0_i32 = arith.constant 0 : i32
    %c0_i32_0 = arith.constant 0 : i32
    %c0_i32_1 = arith.constant 0 : i32
    %c0_i32_2 = arith.constant 0 : i32
    return %c0_i32, %c0_i32_0, %c0_i32_1 : i32, i32, i32
  }
  func.func @transform_12(%arg0: i32) -> (i32, i32, i32) {
    %c0_i32 = arith.constant 0 : i32
    %c0_i32_0 = arith.constant 0 : i32
    %c0_i32_1 = arith.constant 0 : i32
    %c0_i32_2 = arith.constant 0 : i32
    return %c0_i32, %c0_i32_0, %c0_i32_1 : i32, i32, i32
  }
  func.func @transform_13(%arg0: i32) -> (i32, i32, i32) {
    %c0_i32 = arith.constant 0 : i32
    %c0_i32_0 = arith.constant 0 : i32
    %c0_i32_1 = arith.constant 0 : i32
    %c0_i32_2 = arith.constant 0 : i32
    return %c0_i32, %c0_i32_0, %c0_i32_1 : i32, i32, i32
  }
  func.func @transform_14(%arg0: i32) -> (i32, i32, i32) {
    %c0_i32 = arith.constant 0 : i32
    %c0_i32_0 = arith.constant 0 : i32
    %c0_i32_1 = arith.constant 0 : i32
    %c0_i32_2 = arith.constant 0 : i32
    return %c0_i32, %c0_i32_0, %c0_i32_1 : i32, i32, i32
  }
  func.func @transform_15(%arg0: i32) -> (i32, i32, i32) {
    %c0_i32 = arith.constant 0 : i32
    %c0_i32_0 = arith.constant 0 : i32
    %c0_i32_1 = arith.constant 0 : i32
    %c0_i32_2 = arith.constant 0 : i32
    return %c0_i32, %c0_i32_0, %c0_i32_1 : i32, i32, i32
  }
  func.func @transform_16(%arg0: i32) -> (i32, i32) {
    %c0_i32 = arith.constant 0 : i32
    %c0_i32_0 = arith.constant 0 : i32
    %c0_i32_1 = arith.constant 0 : i32
    return %c0_i32, %c0_i32_0 : i32, i32
  }
  func.func @transform_17(%arg0: i32) -> (i32, i32) {
    %c0_i32 = arith.constant 0 : i32
    %c0_i32_0 = arith.constant 0 : i32
    %c0_i32_1 = arith.constant 0 : i32
    return %c0_i32, %c0_i32_0 : i32, i32
  }
  func.func @transform_18(%arg0: i32) -> (i32, i32) {
    %c0_i32 = arith.constant 0 : i32
    %c0_i32_0 = arith.constant 0 : i32
    %c0_i32_1 = arith.constant 0 : i32
    return %c0_i32, %c0_i32_0 : i32, i32
  }
  func.func @transform_19(%arg0: i32) -> (i32, i32) {
    %c0_i32 = arith.constant 0 : i32
    %c0_i32_0 = arith.constant 0 : i32
    %c0_i32_1 = arith.constant 0 : i32
    return %c0_i32, %c0_i32_0 : i32, i32
  }
  func.func @transform_20(%arg0: i32) -> (i32, i32) {
    %c0_i32 = arith.constant 0 : i32
    %c0_i32_0 = arith.constant 0 : i32
    %c0_i32_1 = arith.constant 0 : i32
    return %c0_i32, %c0_i32_0 : i32, i32
  }
}

</mosaic_0001>

<llo_original>
// kernel: bert_base_uncased_forward.1
$region0: #{bert_base_uncased_forward.1}
  #allocation0 [shape = 'u32[]', space=smem, size = 0x4, offset = 0x4, fixed_abs, tag = 'smem constant byte address 0x4 - core index']
  #allocation1 [shape = 'u32[144,128]{1,0:T(1,128)}', space=vmem, size = 0x12000, scoped, tag = 'internal scratch']
  #allocation2 [shape = 'f32[1,1]{1,0:T(1,128)S(1)}', space=vmem, size = 0x200, scoped, tag = 'scoped memory for bert_base_uncased_forward.1']
  %s0 = inlined_call_operand.vmem [shape: f32[16,16], index: 0, kind: input, shape index: {}]
  %s1 = inlined_call_operand.vmem [shape: f32[16,128], index: 1, kind: input, shape index: {}]
  %s2 = inlined_call_operand.vmem [shape: f32[1,128], index: 2, kind: input, shape index: {}]
  %s3 = inlined_call_operand.vmem [shape: f32[1,128], index: 3, kind: input, shape index: {}]
  %s4 = inlined_call_operand.hbm [shape: bf16[2,128,384], index: 4, kind: input, shape index: {}]
  %s5 = inlined_call_operand.vmem [shape: f32[2,1,384], index: 5, kind: input, shape index: {}]
  %s6 = inlined_call_operand.vmem [shape: bf16[2,128,128], index: 6, kind: input, shape index: {}]
  %s7 = inlined_call_operand.vmem [shape: f32[2,1,128], index: 7, kind: input, shape index: {}]
  %s8 = inlined_call_operand.vmem [shape: f32[2,1,128], index: 8, kind: input, shape index: {}]
  %s9 = inlined_call_operand.vmem [shape: f32[2,1,128], index: 9, kind: input, shape index: {}]
  %s10 = inlined_call_operand.hbm [shape: bf16[2,128,512], index: 10, kind: input, shape index: {}]
  %s11 = inlined_call_operand.vmem [shape: f32[2,1,512], index: 11, kind: input, shape index: {}]
  %s12 = inlined_call_operand.hbm [shape: bf16[2,512,128], index: 12, kind: input, shape index: {}]
  %s13 = inlined_call_operand.vmem [shape: f32[2,1,128], index: 13, kind: input, shape index: {}]
  %s14 = inlined_call_operand.vmem [shape: f32[2,1,128], index: 14, kind: input, shape index: {}]
  %s15 = inlined_call_operand.vmem [shape: f32[2,1,128], index: 15, kind: input, shape index: {}]
  %s16 = inlined_call_operand.vmem [shape: bf16[128,128], index: 16, kind: input, shape index: {}]
  %s17 = inlined_call_operand.vmem [shape: f32[1,128], index: 17, kind: input, shape index: {}]
  %s18 = inlined_call_operand.vmem [shape: f32[1,128], index: 18, kind: input, shape index: {}]
  %s19 = inlined_call_operand.<no memory space> [shape: f32[1,1], index: 19, kind: input, shape index: {}]
  %s20 = inlined_call_operand.vmem [shape: f32[2,1], index: 20, kind: output, shape index: {}]
  %s21 = sld [smem:[#allocation0]]
  $region102: #{bert_base_uncased_forward.1} parent=0
    _
  %s23 = ssub.s32 1, %s21
  %s24 = scalar_select 0, %s23, %s21
  %v25 = vstv %s19
  %26 = vst [vmem:[#allocation2] sm:$0x1] %v25
  $region1: #{bert_base_uncased_forward.1} parent=0
    #allocation3 [shape = 'u8[196608]{0}', space=vmem, size = 0x30000, scoped, tag = 'input window, operand 4, single buffered']
    #allocation4 [shape = 's32[1]{0}', space=sflag, size = 0x4, scoped, tag = 'scoped memory for bert_base_uncased_forward.1']
    #allocation5 [shape = 'u8[262144]{0}', space=vmem, size = 0x40000, scoped, tag = 'input window, operand 10, single buffered']
    #allocation6 [shape = 's32[1]{0}', space=sflag, size = 0x4, scoped, tag = 'scoped memory for bert_base_uncased_forward.1']
    #allocation7 [shape = 'u8[262144]{0}', space=vmem, size = 0x40000, scoped, tag = 'input window, operand 12, single buffered']
    %27 = vsyncpa [#allocation4], 0
    %28 = vsyncpa [#allocation6], 0
    // Predicated region
    $region2: #{bert_base_uncased_forward.1} parent=1 // pred_check
      _
    $region3: #{bert_base_uncased_forward.1} parent=1 // pred_check_branch
      %30 = sbr.rel (0) target = $region5
    $region4: #{bert_base_uncased_forward.1} parent=1 // pred_region
      _
    $region5: #{bert_base_uncased_forward.1} parent=1 // pred_fallthru
      _
    // Predicated region
    $region6: #{bert_base_uncased_forward.1} parent=1 // pred_check
      _
    $region7: #{bert_base_uncased_forward.1} parent=1 // pred_check_branch
      %32 = sbr.rel (0) target = $region9
    $region8: #{bert_base_uncased_forward.1} parent=1 // pred_region
      _
    $region9: #{bert_base_uncased_forward.1} parent=1 // pred_fallthru
      _
    // Predicated region
    $region10: #{bert_base_uncased_forward.1} parent=1 // pred_check
      _
    $region11: #{bert_base_uncased_forward.1} parent=1 // pred_check_branch
      %34 = sbr.rel (0) target = $region13
    $region12: #{bert_base_uncased_forward.1} parent=1 // pred_region
      _
    $region13: #{bert_base_uncased_forward.1} parent=1 // pred_fallthru
      _
    // Predicated region
    $region14: #{bert_base_uncased_forward.1} parent=1 // pred_check
      _
    $region15: #{bert_base_uncased_forward.1} parent=1 // pred_check_branch
      %36 = sbr.rel (0) target = $region17
    $region16: #{bert_base_uncased_forward.1} parent=1 // pred_region
      _
    $region17: #{bert_base_uncased_forward.1} parent=1 // pred_fallthru
      _
    // Predicated region
    $region18: #{bert_base_uncased_forward.1} parent=1 // pred_check
      _
    $region19: #{bert_base_uncased_forward.1} parent=1 // pred_check_branch
      %38 = sbr.rel (0) target = $region21
    $region20: #{bert_base_uncased_forward.1} parent=1 // pred_region
      %s40 = ssub.s32 6144, 6144
      %41 = vsyncadd [#allocation4], %s40
      %s42 = sshll.u32 [#allocation3], 4
      %s43 = int_to_ptr.vmem [resolvable:$true] %s42
      %48 = dma.hbm_to_vmem [thread:$0]  %s4, 6144, %s43, [#allocation4], 192, 192, 12
    $region21: #{bert_base_uncased_forward.1} parent=1 // pred_fallthru
      _
    // Predicated region
    $region22: #{bert_base_uncased_forward.1} parent=1 // pred_check
      _
    $region23: #{bert_base_uncased_forward.1} parent=1 // pred_check_branch
      %50 = sbr.rel (0) target = $region25
    $region24: #{bert_base_uncased_forward.1} parent=1 // pred_region
      _
    $region25: #{bert_base_uncased_forward.1} parent=1 // pred_fallthru
      _
    // Predicated region
    $region26: #{bert_base_uncased_forward.1} parent=1 // pred_check
      _
    $region27: #{bert_base_uncased_forward.1} parent=1 // pred_check_branch
      %52 = sbr.rel (0) target = $region29
    $region28: #{bert_base_uncased_forward.1} parent=1 // pred_region
      _
    $region29: #{bert_base_uncased_forward.1} parent=1 // pred_fallthru
      _
    // Predicated region
    $region30: #{bert_base_uncased_forward.1} parent=1 // pred_check
      _
    $region31: #{bert_base_uncased_forward.1} parent=1 // pred_check_branch
      %54 = sbr.rel (0) target = $region33
    $region32: #{bert_base_uncased_forward.1} parent=1 // pred_region
      _
    $region33: #{bert_base_uncased_forward.1} parent=1 // pred_fallthru
      _
    // Predicated region
    $region34: #{bert_base_uncased_forward.1} parent=1 // pred_check
      _
    $region35: #{bert_base_uncased_forward.1} parent=1 // pred_check_branch
      %56 = sbr.rel (0) target = $region37
    $region36: #{bert_base_uncased_forward.1} parent=1 // pred_region
      _
    $region37: #{bert_base_uncased_forward.1} parent=1 // pred_fallthru
      _
    // Predicated region
    $region38: #{bert_base_uncased_forward.1} parent=1 // pred_check
      _
    $region39: #{bert_base_uncased_forward.1} parent=1 // pred_check_branch
      %58 = sbr.rel (0) target = $region41
    $region40: #{bert_base_uncased_forward.1} parent=1 // pred_region
      _
    $region41: #{bert_base_uncased_forward.1} parent=1 // pred_fallthru
      _
    // Predicated region
    $region42: #{bert_base_uncased_forward.1} parent=1 // pred_check
      _
    $region43: #{bert_base_uncased_forward.1} parent=1 // pred_check_branch
      %60 = sbr.rel (0) target = $region45
    $region44: #{bert_base_uncased_forward.1} parent=1 // pred_region
      %s62 = ssub.s32 8192, 8192
      %63 = vsyncadd [#allocation6], %s62
      %s64 = sshll.u32 [#allocation5], 4
      %s65 = int_to_ptr.vmem [resolvable:$true] %s64
      %70 = dma.hbm_to_vmem [thread:$0]  %s10, 8192, %s65, [#allocation6], 256, 256, 16
    $region45: #{bert_base_uncased_forward.1} parent=1 // pred_fallthru
      _
    // Predicated region
    $region46: #{bert_base_uncased_forward.1} parent=1 // pred_check
      _
    $region47: #{bert_base_uncased_forward.1} parent=1 // pred_check_branch
      %72 = sbr.rel (0) target = $region49
    $region48: #{bert_base_uncased_forward.1} parent=1 // pred_region
      _
    $region49: #{bert_base_uncased_forward.1} parent=1 // pred_fallthru
      _
    // Predicated region
    $region50: #{bert_base_uncased_forward.1} parent=1 // pred_check
      _
    $region51: #{bert_base_uncased_forward.1} parent=1 // pred_check_branch
      %74 = sbr.rel (0) target = $region53
    $region52: #{bert_base_uncased_forward.1} parent=1 // pred_region
      %s76 = ssub.s32 8192, 8192
      %77 = vsyncadd [#allocation6], %s76
      %s78 = sshll.u32 [#allocation7], 4
      %s79 = int_to_ptr.vmem [resolvable:$true] %s78
      %84 = dma.hbm_to_vmem [thread:$0]  %s12, 8192, %s79, [#allocation6], 64, 64, 4
    $region53: #{bert_base_uncased_forward.1} parent=1 // pred_fallthru
      _
    // Predicated region
    $region54: #{bert_base_uncased_forward.1} parent=1 // pred_check
      _
    $region55: #{bert_base_uncased_forward.1} parent=1 // pred_check_branch
      %86 = sbr.rel (0) target = $region57
    $region56: #{bert_base_uncased_forward.1} parent=1 // pred_region
      _
    $region57: #{bert_base_uncased_forward.1} parent=1 // pred_fallthru
      _
    // Predicated region
    $region58: #{bert_base_uncased_forward.1} parent=1 // pred_check
      _
    $region59: #{bert_base_uncased_forward.1} parent=1 // pred_check_branch
      %88 = sbr.rel (0) target = $region61
    $region60: #{bert_base_uncased_forward.1} parent=1 // pred_region
      _
    $region61: #{bert_base_uncased_forward.1} parent=1 // pred_fallthru
      _
    // Predicated region
    $region62: #{bert_base_uncased_forward.1} parent=1 // pred_check
      _
    $region63: #{bert_base_uncased_forward.1} parent=1 // pred_check_branch
      %90 = sbr.rel (0) target = $region65
    $region64: #{bert_base_uncased_forward.1} parent=1 // pred_region
      _
    $region65: #{bert_base_uncased_forward.1} parent=1 // pred_fallthru
      _
    // Predicated region
    $region66: #{bert_base_uncased_forward.1} parent=1 // pred_check
      _
    $region67: #{bert_base_uncased_forward.1} parent=1 // pred_check_branch
      %92 = sbr.rel (0) target = $region69
    $region68: #{bert_base_uncased_forward.1} parent=1 // pred_region
      _
    $region69: #{bert_base_uncased_forward.1} parent=1 // pred_fallthru
      _
    // Predicated region
    $region70: #{bert_base_uncased_forward.1} parent=1 // pred_check
      _
    $region71: #{bert_base_uncased_forward.1} parent=1 // pred_check_branch
      %94 = sbr.rel (0) target = $region73
    $region72: #{bert_base_uncased_forward.1} parent=1 // pred_region
      _
    $region73: #{bert_base_uncased_forward.1} parent=1 // pred_fallthru
      _
    // Predicated region
    $region74: #{bert_base_uncased_forward.1} parent=1 // pred_check
      _
    $region75: #{bert_base_uncased_forward.1} parent=1 // pred_check_branch
      %96 = sbr.rel (0) target = $region77
    $region76: #{bert_base_uncased_forward.1} parent=1 // pred_region
      _
    $region77: #{bert_base_uncased_forward.1} parent=1 // pred_fallthru
      _
    // Predicated region
    $region78: #{bert_base_uncased_forward.1} parent=1 // pred_check
      _
    $region79: #{bert_base_uncased_forward.1} parent=1 // pred_check_branch
      %98 = sbr.rel (0) target = $region81
    $region80: #{bert_base_uncased_forward.1} parent=1 // pred_region
      _
    $region81: #{bert_base_uncased_forward.1} parent=1 // pred_fallthru
      _
    // Predicated region
    $region82: #{bert_base_uncased_forward.1} parent=1 // pred_check
      _
    $region83: #{bert_base_uncased_forward.1} parent=1 // pred_check_branch
      %100 = sbr.rel (0) target = $region85
    $region84: #{bert_base_uncased_forward.1} parent=1 // pred_region
      %101 = dma.done [#allocation4], 6144
    $region85: #{bert_base_uncased_forward.1} parent=1 // pred_fallthru
      _
    // Predicated region
    $region86: #{bert_base_uncased_forward.1} parent=1 // pred_check
      _
    $region87: #{bert_base_uncased_forward.1} parent=1 // pred_check_branch
      %103 = sbr.rel (0) target = $region89
    $region88: #{bert_base_uncased_forward.1} parent=1 // pred_region
      %104 = dma.done [#allocation6], 8192
    $region89: #{bert_base_uncased_forward.1} parent=1 // pred_fallthru
      _
    // Predicated region
    $region90: #{bert_base_uncased_forward.1} parent=1 // pred_check
      _
    $region91: #{bert_base_uncased_forward.1} parent=1 // pred_check_branch
      %106 = sbr.rel (0) target = $region93
    $region92: #{bert_base_uncased_forward.1} parent=1 // pred_region
      %107 = dma.done [#allocation6], 8192
    $region93: #{bert_base_uncased_forward.1} parent=1 // pred_fallthru
      _
    %v109 = vld [vmem:[%s1] sm:$0xff]
    %v110 = vld [vmem:[%s1 + $0x8] sm:$0xff]
    %v111 = vld [vmem:[%s2] sm:$0x1]
    %v112 = vld [vmem:[%s3] sm:$0x1]
    %113 = vadd.xlane.f32.xlu0 %v109
    %v114 = vpop.xlane.xlu0 %113
    %115 = vadd.xlane.f32.xlu0 %v110
    %v116 = vpop.xlane.xlu0 %115
    %v117 = vrcp.pop 128.0
    %v118 = vmul.f32 %v114, %v117
    %v119 = vmul.f32 %v116, %v117
    %v120 = vsub.f32 %v109, %v118
    %v121 = vsub.f32 %v110, %v119
    %v122 = vmul.f32 %v120, %v120
    %v123 = vmul.f32 %v121, %v121
    %124 = vadd.xlane.f32.xlu0 %v122
    %v125 = vpop.xlane.xlu0 %124
    %126 = vadd.xlane.f32.xlu0 %v123
    %v127 = vpop.xlane.xlu0 %126
    %v128 = vmul.f32 %v125, %v117
    %v129 = vmul.f32 %v127, %v117
    %v130 = vadd.f32 %v128, 1e-12
    %v131 = vadd.f32 %v129, 1e-12
    %v132 = vrsqrt.pop %v130
    %v133 = vrsqrt.pop %v131
    %v134 = vmul.f32 %v120, %v132
    %v135 = vmul.f32 %v121, %v133
    %v137 = vlaneseq
    %v138 = vshrl.u32 %v137, 7
    %v139 = vsub.s32 0, %v138
    %v140 = vrot.slane %v111, %v139
    %v142 = vmul.f32 %v134, %v140
    %v143 = vmul.f32 %v135, %v140
    %v145 = vlaneseq
    %v146 = vshrl.u32 %v145, 7
    %v147 = vsub.s32 0, %v146
    %v148 = vrot.slane %v112, %v147
    %v150 = vadd.f32 %v142, %v148
    %v151 = vadd.f32 %v143, %v148
    %v152 = vld [vmem:[%s0] sm:$0xff]
    %v153 = vld [vmem:[%s0 + $0x8] sm:$0xff]
    %v154 = vpack.c.bf16 %v151, %v150
    %v155 = vld [vmem:[#allocation3] sm:$0xff]
    %v156 = vld [vmem:[#allocation3 + $0x8] sm:$0xf]
    %v157 = vld [vmem:[#allocation3 + $0xc] sm:$0xff]
    %v158 = vld [vmem:[#allocation3 + $0x14] sm:$0xf]
    %v159 = vld [vmem:[#allocation3 + $0x18] sm:$0xff]
    %v160 = vld [vmem:[#allocation3 + $0x20] sm:$0xf]
    %v161 = vld [vmem:[#allocation3 + $0x24] sm:$0xff]
    %v162 = vld [vmem:[#allocation3 + $0x2c] sm:$0xf]
    %v163 = vld [vmem:[#allocation3 + $0x30] sm:$0xff]
    %v164 = vld [vmem:[#allocation3 + $0x38] sm:$0xf]
    %v165 = vld [vmem:[#allocation3 + $0x3c] sm:$0xff]
    %v166 = vld [vmem:[#allocation3 + $0x44] sm:$0xf]
    %v167 = vld [vmem:[#allocation3 + $0x48] sm:$0xff]
    %v168 = vld [vmem:[#allocation3 + $0x50] sm:$0xf]
    %v169 = vld [vmem:[#allocation3 + $0x54] sm:$0xff]
    %v170 = vld [vmem:[#allocation3 + $0x5c] sm:$0xf]
    %v171 = vld [vmem:[#allocation3 + $0x60] sm:$0xff]
    %v172 = vld [vmem:[#allocation3 + $0x68] sm:$0xf]
    %v173 = vld [vmem:[#allocation3 + $0x6c] sm:$0xff]
    %v174 = vld [vmem:[#allocation3 + $0x74] sm:$0xf]
    %v175 = vld [vmem:[#allocation3 + $0x78] sm:$0xff]
    %v176 = vld [vmem:[#allocation3 + $0x80] sm:$0xf]
    %v177 = vld [vmem:[#allocation3 + $0x84] sm:$0xff]
    %v178 = vld [vmem:[#allocation3 + $0x8c] sm:$0xf]
    %v179 = vld [vmem:[#allocation3 + $0x90] sm:$0xff]
    %v180 = vld [vmem:[#allocation3 + $0x98] sm:$0xf]
    %v181 = vld [vmem:[#allocation3 + $0x9c] sm:$0xff]
    %v182 = vld [vmem:[#allocation3 + $0xa4] sm:$0xf]
    %v183 = vld [vmem:[#allocation3 + $0xa8] sm:$0xff]
    %v184 = vld [vmem:[#allocation3 + $0xb0] sm:$0xf]
    %v185 = vld [vmem:[#allocation3 + $0xb4] sm:$0xff]
    %v186 = vld [vmem:[#allocation3 + $0xbc] sm:$0xf]
    %v187 = vld [vmem:[%s5] sm:$0x7]
    %v189 = vlaneseq
    %v190 = vshrl.u32 %v189, 7
    %v191 = vsub.s32 0, %v190
    %v192 = vrot.slane %v187, %v191
    %v193 = vlaneseq
    %v194 = vshrl.u32 %v193, 7
    %v195 = vsub.s32 1, %v194
    %v196 = vrot.slane %v187, %v195
    %v197 = vlaneseq
    %v198 = vshrl.u32 %v197, 7
    %v199 = vsub.s32 2, %v198
    %v200 = vrot.slane %v187, %v199
    %v236 = vunpack.c.l.b16 %v155
    %v237 = vunpack.c.h.b16 %v155
    %v238 = vunpack.c.l.b16 %v156
    %v239 = vunpack.c.l.b16 %v157
    %v240 = vunpack.c.h.b16 %v157
    %v241 = vunpack.c.l.b16 %v158
    %v242 = vunpack.c.l.b16 %v159
    %v243 = vunpack.c.h.b16 %v159
    %v244 = vunpack.c.l.b16 %v160
    %v245 = vunpack.c.l.b16 %v161
    %v246 = vunpack.c.h.b16 %v161
    %v247 = vunpack.c.l.b16 %v162
    %v248 = vunpack.c.l.b16 %v163
    %v249 = vunpack.c.h.b16 %v163
    %v250 = vunpack.c.l.b16 %v164
    %v251 = vunpack.c.l.b16 %v165
    %v252 = vunpack.c.h.b16 %v165
    %v253 = vunpack.c.l.b16 %v166
    %v254 = vunpack.c.l.b16 %v167
    %v255 = vunpack.c.h.b16 %v167
    %v256 = vunpack.c.l.b16 %v168
    %v257 = vunpack.c.l.b16 %v169
    %v258 = vunpack.c.h.b16 %v169
    %v259 = vunpack.c.l.b16 %v170
    %v260 = vunpack.c.l.b16 %v171
    %v261 = vunpack.c.h.b16 %v171
    %v262 = vunpack.c.l.b16 %v172
    %v263 = vunpack.c.l.b16 %v173
    %v264 = vunpack.c.h.b16 %v173
    %v265 = vunpack.c.l.b16 %v174
    %v266 = vunpack.c.l.b16 %v175
    %v267 = vunpack.c.h.b16 %v175
    %v268 = vunpack.c.l.b16 %v176
    %v269 = vunpack.c.l.b16 %v177
    %v270 = vunpack.c.h.b16 %v177
    %v271 = vunpack.c.l.b16 %v178
    %v272 = vunpack.c.l.b16 %v179
    %v273 = vunpack.c.h.b16 %v179
    %v274 = vunpack.c.l.b16 %v180
    %v275 = vunpack.c.l.b16 %v181
    %v276 = vunpack.c.h.b16 %v181
    %v277 = vunpack.c.l.b16 %v182
    %v278 = vunpack.c.l.b16 %v183
    %v279 = vunpack.c.h.b16 %v183
    %v280 = vunpack.c.l.b16 %v184
    %v281 = vunpack.c.l.b16 %v185
    %v282 = vunpack.c.h.b16 %v185
    %v283 = vunpack.c.l.b16 %v186
    %v284 = vpack.c.b16 %v239, %v236
    %v285 = vpack.c.b16 %v240, %v237
    %v286 = vpack.c.b16 %v241, %v238
    %v287 = vpack.c.b16 %v245, %v242
    %v288 = vpack.c.b16 %v246, %v243
    %v289 = vpack.c.b16 %v247, %v244
    %v290 = vpack.c.b16 %v251, %v248
    %v291 = vpack.c.b16 %v252, %v249
    %v292 = vpack.c.b16 %v253, %v250
    %v293 = vpack.c.b16 %v257, %v254
    %v294 = vpack.c.b16 %v258, %v255
    %v295 = vpack.c.b16 %v259, %v256
    %v296 = vpack.c.b16 %v263, %v260
    %v297 = vpack.c.b16 %v264, %v261
    %v298 = vpack.c.b16 %v265, %v262
    %v299 = vpack.c.b16 %v269, %v266
    %v300 = vpack.c.b16 %v270, %v267
    %v301 = vpack.c.b16 %v271, %v268
    %v302 = vpack.c.b16 %v275, %v272
    %v303 = vpack.c.b16 %v276, %v273
    %v304 = vpack.c.b16 %v277, %v274
    %v305 = vpack.c.b16 %v281, %v278
    %v306 = vpack.c.b16 %v282, %v279
    %v307 = vpack.c.b16 %v283, %v280
    %332 = vmatprep.subr.bf16.mxu0 %v306
    %333 = vmatpush1.bf16.msra.mxu0 %v305
    %334 = vmatprep.subr.bf16.mxu0 %v303
    %335 = vmatpush1.bf16.msra.mxu0 %v302
    %336 = vmatprep.subr.bf16.mxu0 %v300
    %337 = vmatpush1.bf16.msra.mxu0 %v299
    %338 = vmatprep.subr.bf16.mxu0 %v297
    %339 = vmatpush1.bf16.msra.mxu0 %v296
    %340 = vmatprep.subr.bf16.mxu0 %v294
    %341 = vmatpush1.bf16.msra.mxu0 %v293
    %342 = vmatprep.subr.bf16.mxu0 %v291
    %343 = vmatpush1.bf16.msra.mxu0 %v290
    %344 = vmatprep.subr.bf16.mxu0 %v288
    %345 = vmatpush1.bf16.msra.mxu0 %v287
    %346 = vmatprep.subr.bf16.mxu0 %v285
    %347 = vmatpush1.bf16.msra.mxu0 %v284
    %348 = vmatprep.subr.bf16.mxu0 0
    %349 = vmatpush2.bf16.msra.mxu0 0
    %350 = vmatprep.subr.bf16.mxu0 0
    %351 = vmatpush2.bf16.msra.mxu0 0
    %352 = vmatprep.subr.bf16.mxu0 0
    %353 = vmatpush2.bf16.msra.mxu0 0
    %354 = vmatprep.subr.bf16.mxu0 0
    %355 = vmatpush2.bf16.msra.mxu0 0
    %356 = vmatprep.subr.bf16.mxu0 0
    %357 = vmatpush2.bf16.msra.mxu0 0
    %358 = vmatprep.subr.bf16.mxu0 0
    %359 = vmatpush2.bf16.msra.mxu0 0
    %360 = vmatprep.subr.bf16.mxu0 0
    %361 = vmatpush2.bf16.msra.mxu0 0
    %362 = vmatprep.subr.bf16.mxu0 0
    %363 = vmatpush2.bf16.msra.mxu0 0
    %364 = vmatprep.mubr.bf16.mxu0 0
    %365 = vmatmul.mubr.bf16.gmra.mxu0 %v154
    %v366 = vpop.f32.mrf.mxu0
    %v367 = vadd.f32 %v192, %v366
    %v368 = vpop.f32.mrf.mxu0
    %v369 = vadd.f32 %v196, %v368
    %v370 = vpop.f32.mrf.mxu0
    %v371 = vadd.f32 %v192, %v370
    %v372 = vpop.f32.mrf.mxu0
    %v373 = vadd.f32 %v196, %v372
    %374 = vdwg.mxu0
    %375 = vmatprep.subr.bf16.mxu0 0
    %376 = vmatpush1.bf16.msra.mxu0 %v307
    %377 = vmatprep.subr.bf16.mxu0 0
    %378 = vmatpush1.bf16.msra.mxu0 %v304
    %379 = vmatprep.subr.bf16.mxu0 0
    %380 = vmatpush1.bf16.msra.mxu0 %v301
    %381 = vmatprep.subr.bf16.mxu0 0
    %382 = vmatpush1.bf16.msra.mxu0 %v298
    %383 = vmatprep.subr.bf16.mxu0 0
    %384 = vmatpush1.bf16.msra.mxu0 %v295
    %385 = vmatprep.subr.bf16.mxu0 0
    %386 = vmatpush1.bf16.msra.mxu0 %v292
    %387 = vmatprep.subr.bf16.mxu0 0
    %388 = vmatpush1.bf16.msra.mxu0 %v289
    %389 = vmatprep.subr.bf16.mxu0 0
    %390 = vmatpush1.bf16.msra.mxu0 %v286
    %391 = vmatprep.subr.bf16.mxu0 0
    %392 = vmatpush2.bf16.msra.mxu0 0
    %393 = vmatprep.subr.bf16.mxu0 0
    %394 = vmatpush2.bf16.msra.mxu0 0
    %395 = vmatprep.subr.bf16.mxu0 0
    %396 = vmatpush2.bf16.msra.mxu0 0
    %397 = vmatprep.subr.bf16.mxu0 0
    %398 = vmatpush2.bf16.msra.mxu0 0
    %399 = vmatprep.subr.bf16.mxu0 0
    %400 = vmatpush2.bf16.msra.mxu0 0
    %401 = vmatprep.subr.bf16.mxu0 0
    %402 = vmatpush2.bf16.msra.mxu0 0
    %403 = vmatprep.subr.bf16.mxu0 0
    %404 = vmatpush2.bf16.msra.mxu0 0
    %405 = vmatprep.subr.bf16.mxu0 0
    %406 = vmatpush2.bf16.msra.mxu0 0
    %407 = vmatprep.mubr.bf16.mxu0 0
    %408 = vmatmul.mubr.bf16.gmra.mxu0 %v154
    %v409 = vpop.f32.mrf.mxu0
    %v410 = vadd.f32 %v200, %v409
    %v411 = vpop.f32.mrf.mxu0
    %v412 = vpop.f32.mrf.mxu0
    %v413 = vadd.f32 %v200, %v412
    %v414 = vpop.f32.mrf.mxu0
    %415 = vdwg.mxu0
    %v416 = vpack.c.bf16 %v371, %v367
    %v417 = vpack.c.bf16 %v373, %v369
    %v418 = vpack.c.bf16 %v413, %v410
    %vm419 = vcmask 261120
    %v421 = vsel %vm419, %v416, 0
    %v424 = vsel %vm419, %v417, 0
    %426 = vmatprep.subr.bf16.mxu0 0
    %427 = vmatpush1.bf16.xpose.msra.mxu0 0
    %428 = vmatprep.subr.bf16.mxu0 0
    %429 = vmatpush1.bf16.xpose.msra.mxu0 0
    %430 = vmatprep.subr.bf16.mxu0 0
    %431 = vmatpush1.bf16.xpose.msra.mxu0 0
    %432 = vmatprep.subr.bf16.mxu0 0
    %433 = vmatpush1.bf16.xpose.msra.mxu0 0
    %434 = vmatprep.subr.bf16.mxu0 0
    %435 = vmatpush1.bf16.xpose.msra.mxu0 0
    %436 = vmatprep.subr.bf16.mxu0 0
    %437 = vmatpush1.bf16.xpose.msra.mxu0 0
    %438 = vmatprep.subr.bf16.mxu0 0
    %439 = vmatpush1.bf16.xpose.msra.mxu0 0
    %440 = vmatprep.subr.bf16.mxu0 0
    %441 = vmatpush1.bf16.xpose.msra.mxu0 %v424
    %442 = vmatprep.subr.bf16.mxu0 0
    %443 = vmatpush2.bf16.xpose.msra.mxu0 0
    %444 = vmatprep.subr.bf16.mxu0 0
    %445 = vmatpush2.bf16.xpose.msra.mxu0 0
    %446 = vmatprep.subr.bf16.mxu0 0
    %447 = vmatpush2.bf16.xpose.msra.mxu0 0
    %448 = vmatprep.subr.bf16.mxu0 0
    %449 = vmatpush2.bf16.xpose.msra.mxu0 0
    %450 = vmatprep.subr.bf16.mxu0 0
    %451 = vmatpush2.bf16.xpose.msra.mxu0 0
    %452 = vmatprep.subr.bf16.mxu0 0
    %453 = vmatpush2.bf16.xpose.msra.mxu0 0
    %454 = vmatprep.subr.bf16.mxu0 0
    %455 = vmatpush2.bf16.xpose.msra.mxu0 0
    %456 = vmatprep.subr.bf16.mxu0 0
    %457 = vmatpush2.bf16.xpose.msra.mxu0 0
    %458 = vmatprep.mubr.bf16.mxu0 0
    %459 = vmatmul.mubr.bf16.gmra.mxu0 %v421
    %v460 = vpop.f32.mrf.mxu0
    %v461 = vadd.f32 0.0, %v460
    %v462 = vpop.f32.mrf.mxu0
    %v463 = vpop.f32.mrf.mxu0
    %v464 = vadd.f32 0.0, %v463
    %v465 = vpop.f32.mrf.mxu0
    %466 = vdwg.mxu0
    %v467 = vmul.f32 %v461, 0.17677669
    %v468 = vmul.f32 %v464, 0.17677669
    %v469 = vadd.f32 %v467, %v152
    %v470 = vadd.f32 %v468, %v153
    %vm471 = vcmask 130048
    %v472 = vsel %vm471, %v469, -inf
    %473 = vmax.xlane.f32.xlu0 %v472
    %v474 = vpop.xlane.xlu0 %473
    %v475 = vsel %vm471, %v470, -inf
    %476 = vmax.xlane.f32.xlu0 %v475
    %v477 = vpop.xlane.xlu0 %476
    %v478 = vsub.f32 %v469, %v474
    %v479 = vsub.f32 %v470, %v477
    %v480 = vmul.f32 %v478, 1.442695
    %v481 = vpow.pop %v480
    %v482 = vmul.f32 %v479, 1.442695
    %v483 = vpow.pop %v482
    %v484 = vsel %vm471, %v481, 0.0
    %485 = vadd.xlane.f32.xlu0 %v484
    %v486 = vpop.xlane.xlu0 %485
    %v487 = vsel %vm471, %v483, 0.0
    %488 = vadd.xlane.f32.xlu0 %v487
    %v489 = vpop.xlane.xlu0 %488
    %v490 = vrcp.pop %v486
    %v491 = vrcp.pop %v489
    %v492 = vmul.f32 %v481, %v490
    %v493 = vmul.f32 %v483, %v491
    %v494 = vpack.c.bf16 %v493, %v492
    %v496 = vsel %vm471, %v494, 0
    %498 = vmatprep.subr.bf16.mxu0 0
    %499 = vmatpush1.bf16.msra.mxu0 0
    %500 = vmatprep.subr.bf16.mxu0 0
    %501 = vmatpush1.bf16.msra.mxu0 0
    %502 = vmatprep.subr.bf16.mxu0 0
    %503 = vmatpush1.bf16.msra.mxu0 0
    %504 = vmatprep.subr.bf16.mxu0 0
    %505 = vmatpush1.bf16.msra.mxu0 0
    %506 = vmatprep.subr.bf16.mxu0 0
    %507 = vmatpush1.bf16.msra.mxu0 0
    %508 = vmatprep.subr.bf16.mxu0 0
    %509 = vmatpush1.bf16.msra.mxu0 0
    %510 = vmatprep.subr.bf16.mxu0 0
    %511 = vmatpush1.bf16.msra.mxu0 0
    %512 = vmatprep.subr.bf16.mxu0 0
    %513 = vmatpush1.bf16.msra.mxu0 %v418
    %514 = vmatprep.subr.bf16.mxu0 0
    %515 = vmatpush2.bf16.msra.mxu0 0
    %516 = vmatprep.subr.bf16.mxu0 0
    %517 = vmatpush2.bf16.msra.mxu0 0
    %518 = vmatprep.subr.bf16.mxu0 0
    %519 = vmatpush2.bf16.msra.mxu0 0
    %520 = vmatprep.subr.bf16.mxu0 0
    %521 = vmatpush2.bf16.msra.mxu0 0
    %522 = vmatprep.subr.bf16.mxu0 0
    %523 = vmatpush2.bf16.msra.mxu0 0
    %524 = vmatprep.subr.bf16.mxu0 0
    %525 = vmatpush2.bf16.msra.mxu0 0
    %526 = vmatprep.subr.bf16.mxu0 0
    %527 = vmatpush2.bf16.msra.mxu0 0
    %528 = vmatprep.subr.bf16.mxu0 0
    %529 = vmatpush2.bf16.msra.mxu0 0
    %530 = vmatprep.mubr.bf16.mxu0 0
    %531 = vmatmul.mubr.bf16.gmra.mxu0 %v496
    %v532 = vpop.f32.mrf.mxu0
    %v533 = vadd.f32 0.0, %v532
    %v534 = vpop.f32.mrf.mxu0
    %v535 = vpop.f32.mrf.mxu0
    %v536 = vadd.f32 0.0, %v535
    %v537 = vpop.f32.mrf.mxu0
    %538 = vdwg.mxu0
    %540 = vrot.lane.b32.xlu0 %v416, 96
    %v541 = vpop.permute.xlu0 %540
    %543 = vrot.lane.b32.xlu0 %v417, 96
    %v544 = vpop.permute.xlu0 %543
    %v546 = vsel %vm419, %v541, 0
    %v549 = vsel %vm419, %v544, 0
    %551 = vmatprep.subr.bf16.mxu0 0
    %552 = vmatpush1.bf16.xpose.msra.mxu0 0
    %553 = vmatprep.subr.bf16.mxu0 0
    %554 = vmatpush1.bf16.xpose.msra.mxu0 0
    %555 = vmatprep.subr.bf16.mxu0 0
    %556 = vmatpush1.bf16.xpose.msra.mxu0 0
    %557 = vmatprep.subr.bf16.mxu0 0
    %558 = vmatpush1.bf16.xpose.msra.mxu0 0
    %559 = vmatprep.subr.bf16.mxu0 0
    %560 = vmatpush1.bf16.xpose.msra.mxu0 0
    %561 = vmatprep.subr.bf16.mxu0 0
    %562 = vmatpush1.bf16.xpose.msra.mxu0 0
    %563 = vmatprep.subr.bf16.mxu0 0
    %564 = vmatpush1.bf16.xpose.msra.mxu0 0
    %565 = vmatprep.subr.bf16.mxu0 0
    %566 = vmatpush1.bf16.xpose.msra.mxu0 %v549
    %567 = vmatprep.subr.bf16.mxu0 0
    %568 = vmatpush2.bf16.xpose.msra.mxu0 0
    %569 = vmatprep.subr.bf16.mxu0 0
    %570 = vmatpush2.bf16.xpose.msra.mxu0 0
    %571 = vmatprep.subr.bf16.mxu0 0
    %572 = vmatpush2.bf16.xpose.msra.mxu0 0
    %573 = vmatprep.subr.bf16.mxu0 0
    %574 = vmatpush2.bf16.xpose.msra.mxu0 0
    %575 = vmatprep.subr.bf16.mxu0 0
    %576 = vmatpush2.bf16.xpose.msra.mxu0 0
    %577 = vmatprep.subr.bf16.mxu0 0
    %578 = vmatpush2.bf16.xpose.msra.mxu0 0
    %579 = vmatprep.subr.bf16.mxu0 0
    %580 = vmatpush2.bf16.xpose.msra.mxu0 0
    %581 = vmatprep.subr.bf16.mxu0 0
    %582 = vmatpush2.bf16.xpose.msra.mxu0 0
    %583 = vmatprep.mubr.bf16.mxu0 0
    %584 = vmatmul.mubr.bf16.gmra.mxu0 %v546
    %v585 = vpop.f32.mrf.mxu0
    %v586 = vadd.f32 0.0, %v585
    %v587 = vpop.f32.mrf.mxu0
    %v588 = vpop.f32.mrf.mxu0
    %v589 = vadd.f32 0.0, %v588
    %v590 = vpop.f32.mrf.mxu0
    %591 = vdwg.mxu0
    %v592 = vmul.f32 %v586, 0.17677669
    %v593 = vmul.f32 %v589, 0.17677669
    %v594 = vadd.f32 %v592, %v152
    %v595 = vadd.f32 %v593, %v153
    %v596 = vsel %vm471, %v594, -inf
    %597 = vmax.xlane.f32.xlu0 %v596
    %v598 = vpop.xlane.xlu0 %597
    %v599 = vsel %vm471, %v595, -inf
    %600 = vmax.xlane.f32.xlu0 %v599
    %v601 = vpop.xlane.xlu0 %600
    %v602 = vsub.f32 %v594, %v598
    %v603 = vsub.f32 %v595, %v601
    %v604 = vmul.f32 %v602, 1.442695
    %v605 = vpow.pop %v604
    %v606 = vmul.f32 %v603, 1.442695
    %v607 = vpow.pop %v606
    %v608 = vsel %vm471, %v605, 0.0
    %609 = vadd.xlane.f32.xlu0 %v608
    %v610 = vpop.xlane.xlu0 %609
    %v611 = vsel %vm471, %v607, 0.0
    %612 = vadd.xlane.f32.xlu0 %v611
    %v613 = vpop.xlane.xlu0 %612
    %v614 = vrcp.pop %v610
    %v615 = vrcp.pop %v613
    %v616 = vmul.f32 %v605, %v614
    %v617 = vmul.f32 %v607, %v615
    %v618 = vpack.c.bf16 %v617, %v616
    %620 = vrot.lane.b32.xlu0 %v418, 96
    %v621 = vpop.permute.xlu0 %620
    %v624 = vsel %vm471, %v618, 0
    %626 = vmatprep.subr.bf16.mxu0 0
    %627 = vmatpush1.bf16.msra.mxu0 0
    %628 = vmatprep.subr.bf16.mxu0 0
    %629 = vmatpush1.bf16.msra.mxu0 0
    %630 = vmatprep.subr.bf16.mxu0 0
    %631 = vmatpush1.bf16.msra.mxu0 0
    %632 = vmatprep.subr.bf16.mxu0 0
    %633 = vmatpush1.bf16.msra.mxu0 0
    %634 = vmatprep.subr.bf16.mxu0 0
    %635 = vmatpush1.bf16.msra.mxu0 0
    %636 = vmatprep.subr.bf16.mxu0 0
    %637 = vmatpush1.bf16.msra.mxu0 0
    %638 = vmatprep.subr.bf16.mxu0 0
    %639 = vmatpush1.bf16.msra.mxu0 0
    %640 = vmatprep.subr.bf16.mxu0 0
    %641 = vmatpush1.bf16.msra.mxu0 %v621
    %642 = vmatprep.subr.bf16.mxu0 0
    %643 = vmatpush2.bf16.msra.mxu0 0
    %644 = vmatprep.subr.bf16.mxu0 0
    %645 = vmatpush2.bf16.msra.mxu0 0
    %646 = vmatprep.subr.bf16.mxu0 0
    %647 = vmatpush2.bf16.msra.mxu0 0
    %648 = vmatprep.subr.bf16.mxu0 0
    %649 = vmatpush2.bf16.msra.mxu0 0
    %650 = vmatprep.subr.bf16.mxu0 0
    %651 = vmatpush2.bf16.msra.mxu0 0
    %652 = vmatprep.subr.bf16.mxu0 0
    %653 = vmatpush2.bf16.msra.mxu0 0
    %654 = vmatprep.subr.bf16.mxu0 0
    %655 = vmatpush2.bf16.msra.mxu0 0
    %656 = vmatprep.subr.bf16.mxu0 0
    %657 = vmatpush2.bf16.msra.mxu0 0
    %658 = vmatprep.mubr.bf16.mxu0 0
    %659 = vmatmul.mubr.bf16.gmra.mxu0 %v624
    %v660 = vpop.f32.mrf.mxu0
    %v661 = vadd.f32 0.0, %v660
    %v662 = vpop.f32.mrf.mxu0
    %v663 = vpop.f32.mrf.mxu0
    %v664 = vadd.f32 0.0, %v663
    %v665 = vpop.f32.mrf.mxu0
    %666 = vdwg.mxu0
    %667 = vrot.lane.b32.xlu0 %v416, 64
    %v668 = vpop.permute.xlu0 %667
    %669 = vrot.lane.b32.xlu0 %v417, 64
    %v670 = vpop.permute.xlu0 %669
    %v672 = vsel %vm419, %v668, 0
    %v675 = vsel %vm419, %v670, 0
    %677 = vmatprep.subr.bf16.mxu0 0
    %678 = vmatpush1.bf16.xpose.msra.mxu0 0
    %679 = vmatprep.subr.bf16.mxu0 0
    %680 = vmatpush1.bf16.xpose.msra.mxu0 0
    %681 = vmatprep.subr.bf16.mxu0 0
    %682 = vmatpush1.bf16.xpose.msra.mxu0 0
    %683 = vmatprep.subr.bf16.mxu0 0
    %684 = vmatpush1.bf16.xpose.msra.mxu0 0
    %685 = vmatprep.subr.bf16.mxu0 0
    %686 = vmatpush1.bf16.xpose.msra.mxu0 0
    %687 = vmatprep.subr.bf16.mxu0 0
    %688 = vmatpush1.bf16.xpose.msra.mxu0 0
    %689 = vmatprep.subr.bf16.mxu0 0
    %690 = vmatpush1.bf16.xpose.msra.mxu0 0
    %691 = vmatprep.subr.bf16.mxu0 0
    %692 = vmatpush1.bf16.xpose.msra.mxu0 %v675
    %693 = vmatprep.subr.bf16.mxu0 0
    %694 = vmatpush2.bf16.xpose.msra.mxu0 0
    %695 = vmatprep.subr.bf16.mxu0 0
    %696 = vmatpush2.bf16.xpose.msra.mxu0 0
    %697 = vmatprep.subr.bf16.mxu0 0
    %698 = vmatpush2.bf16.xpose.msra.mxu0 0
    %699 = vmatprep.subr.bf16.mxu0 0
    %700 = vmatpush2.bf16.xpose.msra.mxu0 0
    %701 = vmatprep.subr.bf16.mxu0 0
    %702 = vmatpush2.bf16.xpose.msra.mxu0 0
    %703 = vmatprep.subr.bf16.mxu0 0
    %704 = vmatpush2.bf16.xpose.msra.mxu0 0
    %705 = vmatprep.subr.bf16.mxu0 0
    %706 = vmatpush2.bf16.xpose.msra.mxu0 0
    %707 = vmatprep.subr.bf16.mxu0 0
    %708 = vmatpush2.bf16.xpose.msra.mxu0 0
    %709 = vmatprep.mubr.bf16.mxu0 0
    %710 = vmatmul.mubr.bf16.gmra.mxu0 %v672
    %v711 = vpop.f32.mrf.mxu0
    %v712 = vadd.f32 0.0, %v711
    %v713 = vpop.f32.mrf.mxu0
    %v714 = vpop.f32.mrf.mxu0
    %v715 = vadd.f32 0.0, %v714
    %v716 = vpop.f32.mrf.mxu0
    %717 = vdwg.mxu0
    %v718 = vmul.f32 %v712, 0.17677669
    %v719 = vmul.f32 %v715, 0.17677669
    %v720 = vadd.f32 %v718, %v152
    %v721 = vadd.f32 %v719, %v153
    %v722 = vsel %vm471, %v720, -inf
    %723 = vmax.xlane.f32.xlu0 %v722
    %v724 = vpop.xlane.xlu0 %723
    %v725 = vsel %vm471, %v721, -inf
    %726 = vmax.xlane.f32.xlu0 %v725
    %v727 = vpop.xlane.xlu0 %726
    %v728 = vsub.f32 %v720, %v724
    %v729 = vsub.f32 %v721, %v727
    %v730 = vmul.f32 %v728, 1.442695
    %v731 = vpow.pop %v730
    %v732 = vmul.f32 %v729, 1.442695
    %v733 = vpow.pop %v732
    %v734 = vsel %vm471, %v731, 0.0
    %735 = vadd.xlane.f32.xlu0 %v734
    %v736 = vpop.xlane.xlu0 %735
    %v737 = vsel %vm471, %v733, 0.0
    %738 = vadd.xlane.f32.xlu0 %v737
    %v739 = vpop.xlane.xlu0 %738
    %v740 = vrcp.pop %v736
    %v741 = vrcp.pop %v739
    %v742 = vmul.f32 %v731, %v740
    %v743 = vmul.f32 %v733, %v741
    %v744 = vpack.c.bf16 %v743, %v742
    %745 = vrot.lane.b32.xlu0 %v418, 64
    %v746 = vpop.permute.xlu0 %745
    %v749 = vsel %vm471, %v744, 0
    %751 = vmatprep.subr.bf16.mxu0 0
    %752 = vmatpush1.bf16.msra.mxu0 0
    %753 = vmatprep.subr.bf16.mxu0 0
    %754 = vmatpush1.bf16.msra.mxu0 0
    %755 = vmatprep.subr.bf16.mxu0 0
    %756 = vmatpush1.bf16.msra.mxu0 0
    %757 = vmatprep.subr.bf16.mxu0 0
    %758 = vmatpush1.bf16.msra.mxu0 0
    %759 = vmatprep.subr.bf16.mxu0 0
    %760 = vmatpush1.bf16.msra.mxu0 0
    %761 = vmatprep.subr.bf16.mxu0 0
    %762 = vmatpush1.bf16.msra.mxu0 0
    %763 = vmatprep.subr.bf16.mxu0 0
    %764 = vmatpush1.bf16.msra.mxu0 0
    %765 = vmatprep.subr.bf16.mxu0 0
    %766 = vmatpush1.bf16.msra.mxu0 %v746
    %767 = vmatprep.subr.bf16.mxu0 0
    %768 = vmatpush2.bf16.msra.mxu0 0
    %769 = vmatprep.subr.bf16.mxu0 0
    %770 = vmatpush2.bf16.msra.mxu0 0
    %771 = vmatprep.subr.bf16.mxu0 0
    %772 = vmatpush2.bf16.msra.mxu0 0
    %773 = vmatprep.subr.bf16.mxu0 0
    %774 = vmatpush2.bf16.msra.mxu0 0
    %775 = vmatprep.subr.bf16.mxu0 0
    %776 = vmatpush2.bf16.msra.mxu0 0
    %777 = vmatprep.subr.bf16.mxu0 0
    %778 = vmatpush2.bf16.msra.mxu0 0
    %779 = vmatprep.subr.bf16.mxu0 0
    %780 = vmatpush2.bf16.msra.mxu0 0
    %781 = vmatprep.subr.bf16.mxu0 0
    %782 = vmatpush2.bf16.msra.mxu0 0
    %783 = vmatprep.mubr.bf16.mxu0 0
    %784 = vmatmul.mubr.bf16.gmra.mxu0 %v749
    %v785 = vpop.f32.mrf.mxu0
    %v786 = vadd.f32 0.0, %v785
    %v787 = vpop.f32.mrf.mxu0
    %v788 = vpop.f32.mrf.mxu0
    %v789 = vadd.f32 0.0, %v788
    %v790 = vpop.f32.mrf.mxu0
    %791 = vdwg.mxu0
    %792 = vrot.lane.b32.xlu0 %v416, 32
    %v793 = vpop.permute.xlu0 %792
    %794 = vrot.lane.b32.xlu0 %v417, 32
    %v795 = vpop.permute.xlu0 %794
    %v797 = vsel %vm419, %v793, 0
    %v800 = vsel %vm419, %v795, 0
    %802 = vmatprep.subr.bf16.mxu0 0
    %803 = vmatpush1.bf16.xpose.msra.mxu0 0
    %804 = vmatprep.subr.bf16.mxu0 0
    %805 = vmatpush1.bf16.xpose.msra.mxu0 0
    %806 = vmatprep.subr.bf16.mxu0 0
    %807 = vmatpush1.bf16.xpose.msra.mxu0 0
    %808 = vmatprep.subr.bf16.mxu0 0
    %809 = vmatpush1.bf16.xpose.msra.mxu0 0
    %810 = vmatprep.subr.bf16.mxu0 0
    %811 = vmatpush1.bf16.xpose.msra.mxu0 0
    %812 = vmatprep.subr.bf16.mxu0 0
    %813 = vmatpush1.bf16.xpose.msra.mxu0 0
    %814 = vmatprep.subr.bf16.mxu0 0
    %815 = vmatpush1.bf16.xpose.msra.mxu0 0
    %816 = vmatprep.subr.bf16.mxu0 0
    %817 = vmatpush1.bf16.xpose.msra.mxu0 %v800
    %818 = vmatprep.subr.bf16.mxu0 0
    %819 = vmatpush2.bf16.xpose.msra.mxu0 0
    %820 = vmatprep.subr.bf16.mxu0 0
    %821 = vmatpush2.bf16.xpose.msra.mxu0 0
    %822 = vmatprep.subr.bf16.mxu0 0
    %823 = vmatpush2.bf16.xpose.msra.mxu0 0
    %824 = vmatprep.subr.bf16.mxu0 0
    %825 = vmatpush2.bf16.xpose.msra.mxu0 0
    %826 = vmatprep.subr.bf16.mxu0 0
    %827 = vmatpush2.bf16.xpose.msra.mxu0 0
    %828 = vmatprep.subr.bf16.mxu0 0
    %829 = vmatpush2.bf16.xpose.msra.mxu0 0
    %830 = vmatprep.subr.bf16.mxu0 0
    %831 = vmatpush2.bf16.xpose.msra.mxu0 0
    %832 = vmatprep.subr.bf16.mxu0 0
    %833 = vmatpush2.bf16.xpose.msra.mxu0 0
    %834 = vmatprep.mubr.bf16.mxu0 0
    %835 = vmatmul.mubr.bf16.gmra.mxu0 %v797
    %v836 = vpop.f32.mrf.mxu0
    %v837 = vadd.f32 0.0, %v836
    %v838 = vpop.f32.mrf.mxu0
    %v839 = vpop.f32.mrf.mxu0
    %v840 = vadd.f32 0.0, %v839
    %v841 = vpop.f32.mrf.mxu0
    %842 = vdwg.mxu0
    %v843 = vmul.f32 %v837, 0.17677669
    %v844 = vmul.f32 %v840, 0.17677669
    %v845 = vadd.f32 %v843, %v152
    %v846 = vadd.f32 %v844, %v153
    %v847 = vsel %vm471, %v845, -inf
    %848 = vmax.xlane.f32.xlu0 %v847
    %v849 = vpop.xlane.xlu0 %848
    %v850 = vsel %vm471, %v846, -inf
    %851 = vmax.xlane.f32.xlu0 %v850
    %v852 = vpop.xlane.xlu0 %851
    %v853 = vsub.f32 %v845, %v849
    %v854 = vsub.f32 %v846, %v852
    %v855 = vmul.f32 %v853, 1.442695
    %v856 = vpow.pop %v855
    %v857 = vmul.f32 %v854, 1.442695
    %v858 = vpow.pop %v857
    %v859 = vsel %vm471, %v856, 0.0
    %860 = vadd.xlane.f32.xlu0 %v859
    %v861 = vpop.xlane.xlu0 %860
    %v862 = vsel %vm471, %v858, 0.0
    %863 = vadd.xlane.f32.xlu0 %v862
    %v864 = vpop.xlane.xlu0 %863
    %v865 = vrcp.pop %v861
    %v866 = vrcp.pop %v864
    %v867 = vmul.f32 %v856, %v865
    %v868 = vmul.f32 %v858, %v866
    %v869 = vpack.c.bf16 %v868, %v867
    %870 = vrot.lane.b32.xlu0 %v418, 32
    %v871 = vpop.permute.xlu0 %870
    %v874 = vsel %vm471, %v869, 0
    %876 = vmatprep.subr.bf16.mxu0 0
    %877 = vmatpush1.bf16.msra.mxu0 0
    %878 = vmatprep.subr.bf16.mxu0 0
    %879 = vmatpush1.bf16.msra.mxu0 0
    %880 = vmatprep.subr.bf16.mxu0 0
    %881 = vmatpush1.bf16.msra.mxu0 0
    %882 = vmatprep.subr.bf16.mxu0 0
    %883 = vmatpush1.bf16.msra.mxu0 0
    %884 = vmatprep.subr.bf16.mxu0 0
    %885 = vmatpush1.bf16.msra.mxu0 0
    %886 = vmatprep.subr.bf16.mxu0 0
    %887 = vmatpush1.bf16.msra.mxu0 0
    %888 = vmatprep.subr.bf16.mxu0 0
    %889 = vmatpush1.bf16.msra.mxu0 0
    %890 = vmatprep.subr.bf16.mxu0 0
    %891 = vmatpush1.bf16.msra.mxu0 %v871
    %892 = vmatprep.subr.bf16.mxu0 0
    %893 = vmatpush2.bf16.msra.mxu0 0
    %894 = vmatprep.subr.bf16.mxu0 0
    %895 = vmatpush2.bf16.msra.mxu0 0
    %896 = vmatprep.subr.bf16.mxu0 0
    %897 = vmatpush2.bf16.msra.mxu0 0
    %898 = vmatprep.subr.bf16.mxu0 0
    %899 = vmatpush2.bf16.msra.mxu0 0
    %900 = vmatprep.subr.bf16.mxu0 0
    %901 = vmatpush2.bf16.msra.mxu0 0
    %902 = vmatprep.subr.bf16.mxu0 0
    %903 = vmatpush2.bf16.msra.mxu0 0
    %904 = vmatprep.subr.bf16.mxu0 0
    %905 = vmatpush2.bf16.msra.mxu0 0
    %906 = vmatprep.subr.bf16.mxu0 0
    %907 = vmatpush2.bf16.msra.mxu0 0
    %908 = vmatprep.mubr.bf16.mxu0 0
    %909 = vmatmul.mubr.bf16.gmra.mxu0 %v874
    %v910 = vpop.f32.mrf.mxu0
    %v911 = vadd.f32 0.0, %v910
    %v912 = vpop.f32.mrf.mxu0
    %v913 = vpop.f32.mrf.mxu0
    %v914 = vadd.f32 0.0, %v913
    %v915 = vpop.f32.mrf.mxu0
    %916 = vdwg.mxu0
    %919 = vrot.lane.b32.xlu0 %v661, 32
    %v920 = vpop.permute.xlu0 %919
    %921 = vrot.lane.b32.xlu0 %v664, 32
    %v922 = vpop.permute.xlu0 %921
    %927 = vrot.lane.b32.xlu0 %v786, 64
    %v928 = vpop.permute.xlu0 %927
    %929 = vrot.lane.b32.xlu0 %v789, 64
    %v930 = vpop.permute.xlu0 %929
    %935 = vrot.lane.b32.xlu0 %v911, 96
    %v936 = vpop.permute.xlu0 %935
    %937 = vrot.lane.b32.xlu0 %v914, 96
    %v938 = vpop.permute.xlu0 %937
    %v941 = vsel %vm419, %v533, %v920
    %v942 = vsel %vm419, %v536, %v922
    %vm943 = vcmask 523264
    %v944 = vsel %vm943, %v941, %v928
    %v945 = vsel %vm943, %v942, %v930
    %vm946 = vcmask 785408
    %v947 = vsel %vm946, %v944, %v936
    %v948 = vsel %vm946, %v945, %v938
    %v949 = vpack.c.bf16 %v948, %v947
    %v950 = vld [vmem:[%s6] sm:$0xf]
    %v951 = vld [vmem:[%s6 + $0x4] sm:$0xf]
    %v952 = vld [vmem:[%s6 + $0x8] sm:$0xf]
    %v953 = vld [vmem:[%s6 + $0xc] sm:$0xf]
    %v954 = vld [vmem:[%s6 + $0x10] sm:$0xf]
    %v955 = vld [vmem:[%s6 + $0x14] sm:$0xf]
    %v956 = vld [vmem:[%s6 + $0x18] sm:$0xf]
    %v957 = vld [vmem:[%s6 + $0x1c] sm:$0xf]
    %v958 = vld [vmem:[%s6 + $0x20] sm:$0xf]
    %v959 = vld [vmem:[%s6 + $0x24] sm:$0xf]
    %v960 = vld [vmem:[%s6 + $0x28] sm:$0xf]
    %v961 = vld [vmem:[%s6 + $0x2c] sm:$0xf]
    %v962 = vld [vmem:[%s6 + $0x30] sm:$0xf]
    %v963 = vld [vmem:[%s6 + $0x34] sm:$0xf]
    %v964 = vld [vmem:[%s6 + $0x38] sm:$0xf]
    %v965 = vld [vmem:[%s6 + $0x3c] sm:$0xf]
    %v966 = vld [vmem:[%s7] sm:$0x1]
    %v968 = vlaneseq
    %v969 = vshrl.u32 %v968, 7
    %v970 = vsub.s32 0, %v969
    %v971 = vrot.slane %v966, %v970
    %v989 = vunpack.c.l.b16 %v950
    %v990 = vunpack.c.l.b16 %v951
    %v991 = vunpack.c.l.b16 %v952
    %v992 = vunpack.c.l.b16 %v953
    %v993 = vunpack.c.l.b16 %v954
    %v994 = vunpack.c.l.b16 %v955
    %v995 = vunpack.c.l.b16 %v956
    %v996 = vunpack.c.l.b16 %v957
    %v997 = vunpack.c.l.b16 %v958
    %v998 = vunpack.c.l.b16 %v959
    %v999 = vunpack.c.l.b16 %v960
    %v1000 = vunpack.c.l.b16 %v961
    %v1001 = vunpack.c.l.b16 %v962
    %v1002 = vunpack.c.l.b16 %v963
    %v1003 = vunpack.c.l.b16 %v964
    %v1004 = vunpack.c.l.b16 %v965
    %v1005 = vpack.c.b16 %v990, %v989
    %v1006 = vpack.c.b16 %v992, %v991
    %v1007 = vpack.c.b16 %v994, %v993
    %v1008 = vpack.c.b16 %v996, %v995
    %v1009 = vpack.c.b16 %v998, %v997
    %v1010 = vpack.c.b16 %v1000, %v999
    %v1011 = vpack.c.b16 %v1002, %v1001
    %v1012 = vpack.c.b16 %v1004, %v1003
    %1021 = vmatprep.subr.bf16.mxu0 0
    %1022 = vmatpush1.bf16.msra.mxu0 %v1012
    %1023 = vmatprep.subr.bf16.mxu0 0
    %1024 = vmatpush1.bf16.msra.mxu0 %v1011
    %1025 = vmatprep.subr.bf16.mxu0 0
    %1026 = vmatpush1.bf16.msra.mxu0 %v1010
    %1027 = vmatprep.subr.bf16.mxu0 0
    %1028 = vmatpush1.bf16.msra.mxu0 %v1009
    %1029 = vmatprep.subr.bf16.mxu0 0
    %1030 = vmatpush1.bf16.msra.mxu0 %v1008
    %1031 = vmatprep.subr.bf16.mxu0 0
    %1032 = vmatpush1.bf16.msra.mxu0 %v1007
    %1033 = vmatprep.subr.bf16.mxu0 0
    %1034 = vmatpush1.bf16.msra.mxu0 %v1006
    %1035 = vmatprep.subr.bf16.mxu0 0
    %1036 = vmatpush1.bf16.msra.mxu0 %v1005
    %1037 = vmatprep.subr.bf16.mxu0 0
    %1038 = vmatpush2.bf16.msra.mxu0 0
    %1039 = vmatprep.subr.bf16.mxu0 0
    %1040 = vmatpush2.bf16.msra.mxu0 0
    %1041 = vmatprep.subr.bf16.mxu0 0
    %1042 = vmatpush2.bf16.msra.mxu0 0
    %1043 = vmatprep.subr.bf16.mxu0 0
    %1044 = vmatpush2.bf16.msra.mxu0 0
    %1045 = vmatprep.subr.bf16.mxu0 0
    %1046 = vmatpush2.bf16.msra.mxu0 0
    %1047 = vmatprep.subr.bf16.mxu0 0
    %1048 = vmatpush2.bf16.msra.mxu0 0
    %1049 = vmatprep.subr.bf16.mxu0 0
    %1050 = vmatpush2.bf16.msra.mxu0 0
    %1051 = vmatprep.subr.bf16.mxu0 0
    %1052 = vmatpush2.bf16.msra.mxu0 0
    %1053 = vmatprep.mubr.bf16.mxu0 0
    %1054 = vmatmul.mubr.bf16.gmra.mxu0 %v949
    %v1055 = vpop.f32.mrf.mxu0
    %v1056 = vadd.f32 %v971, %v1055
    %v1057 = vpop.f32.mrf.mxu0
    %v1058 = vpop.f32.mrf.mxu0
    %v1059 = vadd.f32 %v971, %v1058
    %v1060 = vpop.f32.mrf.mxu0
    %1061 = vdwg.mxu0
    %v1062 = vadd.f32 %v1056, %v150
    %v1063 = vadd.f32 %v1059, %v151
    %v1064 = vld [vmem:[%s8] sm:$0x1]
    %v1065 = vld [vmem:[%s9] sm:$0x1]
    %1066 = vadd.xlane.f32.xlu0 %v1062
    %v1067 = vpop.xlane.xlu0 %1066
    %1068 = vadd.xlane.f32.xlu0 %v1063
    %v1069 = vpop.xlane.xlu0 %1068
    %v1070 = vmul.f32 %v1067, %v117
    %v1071 = vmul.f32 %v1069, %v117
    %v1072 = vsub.f32 %v1062, %v1070
    %v1073 = vsub.f32 %v1063, %v1071
    %v1074 = vmul.f32 %v1072, %v1072
    %v1075 = vmul.f32 %v1073, %v1073
    %1076 = vadd.xlane.f32.xlu0 %v1074
    %v1077 = vpop.xlane.xlu0 %1076
    %1078 = vadd.xlane.f32.xlu0 %v1075
    %v1079 = vpop.xlane.xlu0 %1078
    %v1080 = vmul.f32 %v1077, %v117
    %v1081 = vmul.f32 %v1079, %v117
    %v1082 = vadd.f32 %v1080, 1e-12
    %v1083 = vadd.f32 %v1081, 1e-12
    %v1084 = vrsqrt.pop %v1082
    %v1085 = vrsqrt.pop %v1083
    %v1086 = vmul.f32 %v1072, %v1084
    %v1087 = vmul.f32 %v1073, %v1085
    %v1089 = vlaneseq
    %v1090 = vshrl.u32 %v1089, 7
    %v1091 = vsub.s32 0, %v1090
    %v1092 = vrot.slane %v1064, %v1091
    %v1094 = vmul.f32 %v1086, %v1092
    %v1095 = vmul.f32 %v1087, %v1092
    %v1097 = vlaneseq
    %v1098 = vshrl.u32 %v1097, 7
    %v1099 = vsub.s32 0, %v1098
    %v1100 = vrot.slane %v1065, %v1099
    %v1102 = vadd.f32 %v1094, %v1100
    %v1103 = vadd.f32 %v1095, %v1100
    %v1104 = vpack.c.bf16 %v1103, %v1102
    %v1105 = vld [vmem:[#allocation5] sm:$0xff]
    %v1106 = vld [vmem:[#allocation5 + $0x8] sm:$0xff]
    %v1107 = vld [vmem:[#allocation5 + $0x10] sm:$0xff]
    %v1108 = vld [vmem:[#allocation5 + $0x18] sm:$0xff]
    %v1109 = vld [vmem:[#allocation5 + $0x20] sm:$0xff]
    %v1110 = vld [vmem:[#allocation5 + $0x28] sm:$0xff]
    %v1111 = vld [vmem:[#allocation5 + $0x30] sm:$0xff]
    %v1112 = vld [vmem:[#allocation5 + $0x38] sm:$0xff]
    %v1113 = vld [vmem:[#allocation5 + $0x40] sm:$0xff]
    %v1114 = vld [vmem:[#allocation5 + $0x48] sm:$0xff]
    %v1115 = vld [vmem:[#allocation5 + $0x50] sm:$0xff]
    %v1116 = vld [vmem:[#allocation5 + $0x58] sm:$0xff]
    %v1117 = vld [vmem:[#allocation5 + $0x60] sm:$0xff]
    %v1118 = vld [vmem:[#allocation5 + $0x68] sm:$0xff]
    %v1119 = vld [vmem:[#allocation5 + $0x70] sm:$0xff]
    %v1120 = vld [vmem:[#allocation5 + $0x78] sm:$0xff]
    %v1121 = vld [vmem:[#allocation5 + $0x80] sm:$0xff]
    %v1122 = vld [vmem:[#allocation5 + $0x88] sm:$0xff]
    %v1123 = vld [vmem:[#allocation5 + $0x90] sm:$0xff]
    %v1124 = vld [vmem:[#allocation5 + $0x98] sm:$0xff]
    %v1125 = vld [vmem:[#allocation5 + $0xa0] sm:$0xff]
    %v1126 = vld [vmem:[#allocation5 + $0xa8] sm:$0xff]
    %v1127 = vld [vmem:[#allocation5 + $0xb0] sm:$0xff]
    %v1128 = vld [vmem:[#allocation5 + $0xb8] sm:$0xff]
    %v1129 = vld [vmem:[#allocation5 + $0xc0] sm:$0xff]
    %v1130 = vld [vmem:[#allocation5 + $0xc8] sm:$0xff]
    %v1131 = vld [vmem:[#allocation5 + $0xd0] sm:$0xff]
    %v1132 = vld [vmem:[#allocation5 + $0xd8] sm:$0xff]
    %v1133 = vld [vmem:[#allocation5 + $0xe0] sm:$0xff]
    %v1134 = vld [vmem:[#allocation5 + $0xe8] sm:$0xff]
    %v1135 = vld [vmem:[#allocation5 + $0xf0] sm:$0xff]
    %v1136 = vld [vmem:[#allocation5 + $0xf8] sm:$0xff]
    %v1137 = vld [vmem:[%s11] sm:$0xf]
    %v1139 = vlaneseq
    %v1140 = vshrl.u32 %v1139, 7
    %v1141 = vsub.s32 0, %v1140
    %v1142 = vrot.slane %v1137, %v1141
    %v1143 = vlaneseq
    %v1144 = vshrl.u32 %v1143, 7
    %v1145 = vsub.s32 1, %v1144
    %v1146 = vrot.slane %v1137, %v1145
    %v1147 = vlaneseq
    %v1148 = vshrl.u32 %v1147, 7
    %v1149 = vsub.s32 2, %v1148
    %v1150 = vrot.slane %v1137, %v1149
    %v1151 = vlaneseq
    %v1152 = vshrl.u32 %v1151, 7
    %v1153 = vsub.s32 3, %v1152
    %v1154 = vrot.slane %v1137, %v1153
    %v1191 = vunpack.c.l.b16 %v1105
    %v1192 = vunpack.c.h.b16 %v1105
    %v1193 = vunpack.c.l.b16 %v1106
    %v1194 = vunpack.c.h.b16 %v1106
    %v1195 = vunpack.c.l.b16 %v1107
    %v1196 = vunpack.c.h.b16 %v1107
    %v1197 = vunpack.c.l.b16 %v1108
    %v1198 = vunpack.c.h.b16 %v1108
    %v1199 = vunpack.c.l.b16 %v1109
    %v1200 = vunpack.c.h.b16 %v1109
    %v1201 = vunpack.c.l.b16 %v1110
    %v1202 = vunpack.c.h.b16 %v1110
    %v1203 = vunpack.c.l.b16 %v1111
    %v1204 = vunpack.c.h.b16 %v1111
    %v1205 = vunpack.c.l.b16 %v1112
    %v1206 = vunpack.c.h.b16 %v1112
    %v1207 = vunpack.c.l.b16 %v1113
    %v1208 = vunpack.c.h.b16 %v1113
    %v1209 = vunpack.c.l.b16 %v1114
    %v1210 = vunpack.c.h.b16 %v1114
    %v1211 = vunpack.c.l.b16 %v1115
    %v1212 = vunpack.c.h.b16 %v1115
    %v1213 = vunpack.c.l.b16 %v1116
    %v1214 = vunpack.c.h.b16 %v1116
    %v1215 = vunpack.c.l.b16 %v1117
    %v1216 = vunpack.c.h.b16 %v1117
    %v1217 = vunpack.c.l.b16 %v1118
    %v1218 = vunpack.c.h.b16 %v1118
    %v1219 = vunpack.c.l.b16 %v1119
    %v1220 = vunpack.c.h.b16 %v1119
    %v1221 = vunpack.c.l.b16 %v1120
    %v1222 = vunpack.c.h.b16 %v1120
    %v1223 = vunpack.c.l.b16 %v1121
    %v1224 = vunpack.c.h.b16 %v1121
    %v1225 = vunpack.c.l.b16 %v1122
    %v1226 = vunpack.c.h.b16 %v1122
    %v1227 = vunpack.c.l.b16 %v1123
    %v1228 = vunpack.c.h.b16 %v1123
    %v1229 = vunpack.c.l.b16 %v1124
    %v1230 = vunpack.c.h.b16 %v1124
    %v1231 = vunpack.c.l.b16 %v1125
    %v1232 = vunpack.c.h.b16 %v1125
    %v1233 = vunpack.c.l.b16 %v1126
    %v1234 = vunpack.c.h.b16 %v1126
    %v1235 = vunpack.c.l.b16 %v1127
    %v1236 = vunpack.c.h.b16 %v1127
    %v1237 = vunpack.c.l.b16 %v1128
    %v1238 = vunpack.c.h.b16 %v1128
    %v1239 = vunpack.c.l.b16 %v1129
    %v1240 = vunpack.c.h.b16 %v1129
    %v1241 = vunpack.c.l.b16 %v1130
    %v1242 = vunpack.c.h.b16 %v1130
    %v1243 = vunpack.c.l.b16 %v1131
    %v1244 = vunpack.c.h.b16 %v1131
    %v1245 = vunpack.c.l.b16 %v1132
    %v1246 = vunpack.c.h.b16 %v1132
    %v1247 = vunpack.c.l.b16 %v1133
    %v1248 = vunpack.c.h.b16 %v1133
    %v1249 = vunpack.c.l.b16 %v1134
    %v1250 = vunpack.c.h.b16 %v1134
    %v1251 = vunpack.c.l.b16 %v1135
    %v1252 = vunpack.c.h.b16 %v1135
    %v1253 = vunpack.c.l.b16 %v1136
    %v1254 = vunpack.c.h.b16 %v1136
    %v1255 = vpack.c.b16 %v1195, %v1191
    %v1256 = vpack.c.b16 %v1196, %v1192
    %v1257 = vpack.c.b16 %v1197, %v1193
    %v1258 = vpack.c.b16 %v1198, %v1194
    %v1259 = vpack.c.b16 %v1203, %v1199
    %v1260 = vpack.c.b16 %v1204, %v1200
    %v1261 = vpack.c.b16 %v1205, %v1201
    %v1262 = vpack.c.b16 %v1206, %v1202
    %v1263 = vpack.c.b16 %v1211, %v1207
    %v1264 = vpack.c.b16 %v1212, %v1208
    %v1265 = vpack.c.b16 %v1213, %v1209
    %v1266 = vpack.c.b16 %v1214, %v1210
    %v1267 = vpack.c.b16 %v1219, %v1215
    %v1268 = vpack.c.b16 %v1220, %v1216
    %v1269 = vpack.c.b16 %v1221, %v1217
    %v1270 = vpack.c.b16 %v1222, %v1218
    %v1271 = vpack.c.b16 %v1227, %v1223
    %v1272 = vpack.c.b16 %v1228, %v1224
    %v1273 = vpack.c.b16 %v1229, %v1225
    %v1274 = vpack.c.b16 %v1230, %v1226
    %v1275 = vpack.c.b16 %v1235, %v1231
    %v1276 = vpack.c.b16 %v1236, %v1232
    %v1277 = vpack.c.b16 %v1237, %v1233
    %v1278 = vpack.c.b16 %v1238, %v1234
    %v1279 = vpack.c.b16 %v1243, %v1239
    %v1280 = vpack.c.b16 %v1244, %v1240
    %v1281 = vpack.c.b16 %v1245, %v1241
    %v1282 = vpack.c.b16 %v1246, %v1242
    %v1283 = vpack.c.b16 %v1251, %v1247
    %v1284 = vpack.c.b16 %v1252, %v1248
    %v1285 = vpack.c.b16 %v1253, %v1249
    %v1286 = vpack.c.b16 %v1254, %v1250
    %1319 = vmatprep.subr.bf16.mxu0 %v1284
    %1320 = vmatpush1.bf16.msra.mxu0 %v1283
    %1321 = vmatprep.subr.bf16.mxu0 %v1280
    %1322 = vmatpush1.bf16.msra.mxu0 %v1279
    %1323 = vmatprep.subr.bf16.mxu0 %v1276
    %1324 = vmatpush1.bf16.msra.mxu0 %v1275
    %1325 = vmatprep.subr.bf16.mxu0 %v1272
    %1326 = vmatpush1.bf16.msra.mxu0 %v1271
    %1327 = vmatprep.subr.bf16.mxu0 %v1268
    %1328 = vmatpush1.bf16.msra.mxu0 %v1267
    %1329 = vmatprep.subr.bf16.mxu0 %v1264
    %1330 = vmatpush1.bf16.msra.mxu0 %v1263
    %1331 = vmatprep.subr.bf16.mxu0 %v1260
    %1332 = vmatpush1.bf16.msra.mxu0 %v1259
    %1333 = vmatprep.subr.bf16.mxu0 %v1256
    %1334 = vmatpush1.bf16.msra.mxu0 %v1255
    %1335 = vmatprep.subr.bf16.mxu0 0
    %1336 = vmatpush2.bf16.msra.mxu0 0
    %1337 = vmatprep.subr.bf16.mxu0 0
    %1338 = vmatpush2.bf16.msra.mxu0 0
    %1339 = vmatprep.subr.bf16.mxu0 0
    %1340 = vmatpush2.bf16.msra.mxu0 0
    %1341 = vmatprep.subr.bf16.mxu0 0
    %1342 = vmatpush2.bf16.msra.mxu0 0
    %1343 = vmatprep.subr.bf16.mxu0 0
    %1344 = vmatpush2.bf16.msra.mxu0 0
    %1345 = vmatprep.subr.bf16.mxu0 0
    %1346 = vmatpush2.bf16.msra.mxu0 0
    %1347 = vmatprep.subr.bf16.mxu0 0
    %1348 = vmatpush2.bf16.msra.mxu0 0
    %1349 = vmatprep.subr.bf16.mxu0 0
    %1350 = vmatpush2.bf16.msra.mxu0 0
    %1351 = vmatprep.mubr.bf16.mxu0 0
    %1352 = vmatmul.mubr.bf16.gmra.mxu0 %v1104
    %v1353 = vpop.f32.mrf.mxu0
    %v1354 = vadd.f32 %v1142, %v1353
    %v1355 = vpop.f32.mrf.mxu0
    %v1356 = vadd.f32 %v1146, %v1355
    %v1357 = vpop.f32.mrf.mxu0
    %v1358 = vadd.f32 %v1142, %v1357
    %v1359 = vpop.f32.mrf.mxu0
    %v1360 = vadd.f32 %v1146, %v1359
    %1361 = vdwg.mxu0
    %1362 = vmatprep.subr.bf16.mxu0 %v1286
    %1363 = vmatpush1.bf16.msra.mxu0 %v1285
    %1364 = vmatprep.subr.bf16.mxu0 %v1282
    %1365 = vmatpush1.bf16.msra.mxu0 %v1281
    %1366 = vmatprep.subr.bf16.mxu0 %v1278
    %1367 = vmatpush1.bf16.msra.mxu0 %v1277
    %1368 = vmatprep.subr.bf16.mxu0 %v1274
    %1369 = vmatpush1.bf16.msra.mxu0 %v1273
    %1370 = vmatprep.subr.bf16.mxu0 %v1270
    %1371 = vmatpush1.bf16.msra.mxu0 %v1269
    %1372 = vmatprep.subr.bf16.mxu0 %v1266
    %1373 = vmatpush1.bf16.msra.mxu0 %v1265
    %1374 = vmatprep.subr.bf16.mxu0 %v1262
    %1375 = vmatpush1.bf16.msra.mxu0 %v1261
    %1376 = vmatprep.subr.bf16.mxu0 %v1258
    %1377 = vmatpush1.bf16.msra.mxu0 %v1257
    %1378 = vmatprep.subr.bf16.mxu0 0
    %1379 = vmatpush2.bf16.msra.mxu0 0
    %1380 = vmatprep.subr.bf16.mxu0 0
    %1381 = vmatpush2.bf16.msra.mxu0 0
    %1382 = vmatprep.subr.bf16.mxu0 0
    %1383 = vmatpush2.bf16.msra.mxu0 0
    %1384 = vmatprep.subr.bf16.mxu0 0
    %1385 = vmatpush2.bf16.msra.mxu0 0
    %1386 = vmatprep.subr.bf16.mxu0 0
    %1387 = vmatpush2.bf16.msra.mxu0 0
    %1388 = vmatprep.subr.bf16.mxu0 0
    %1389 = vmatpush2.bf16.msra.mxu0 0
    %1390 = vmatprep.subr.bf16.mxu0 0
    %1391 = vmatpush2.bf16.msra.mxu0 0
    %1392 = vmatprep.subr.bf16.mxu0 0
    %1393 = vmatpush2.bf16.msra.mxu0 0
    %1394 = vmatprep.mubr.bf16.mxu0 0
    %1395 = vmatmul.mubr.bf16.gmra.mxu0 %v1104
    %v1396 = vpop.f32.mrf.mxu0
    %v1397 = vadd.f32 %v1150, %v1396
    %v1398 = vpop.f32.mrf.mxu0
    %v1399 = vadd.f32 %v1154, %v1398
    %v1400 = vpop.f32.mrf.mxu0
    %v1401 = vadd.f32 %v1150, %v1400
    %v1402 = vpop.f32.mrf.mxu0
    %v1403 = vadd.f32 %v1154, %v1402
    %1404 = vdwg.mxu0
    %v1405 = vmul.f32 %v1354, %v1354
    %v1406 = vmul.f32 %v1356, %v1356
    %v1407 = vmul.f32 %v1397, %v1397
    %v1408 = vmul.f32 %v1399, %v1399
    %v1409 = vmul.f32 %v1358, %v1358
    %v1410 = vmul.f32 %v1360, %v1360
    %v1411 = vmul.f32 %v1401, %v1401
    %v1412 = vmul.f32 %v1403, %v1403
    %v1413 = vmul.f32 %v1354, %v1405
    %v1414 = vmul.f32 %v1356, %v1406
    %v1415 = vmul.f32 %v1397, %v1407
    %v1416 = vmul.f32 %v1399, %v1408
    %v1417 = vmul.f32 %v1358, %v1409
    %v1418 = vmul.f32 %v1360, %v1410
    %v1419 = vmul.f32 %v1401, %v1411
    %v1420 = vmul.f32 %v1403, %v1412
    %v1421 = vmul.f32 %v1413, 0.044715
    %v1422 = vmul.f32 %v1414, 0.044715
    %v1423 = vmul.f32 %v1415, 0.044715
    %v1424 = vmul.f32 %v1416, 0.044715
    %v1425 = vmul.f32 %v1417, 0.044715
    %v1426 = vmul.f32 %v1418, 0.044715
    %v1427 = vmul.f32 %v1419, 0.044715
    %v1428 = vmul.f32 %v1420, 0.044715
    %v1429 = vadd.f32 %v1354, %v1421
    %v1430 = vadd.f32 %v1356, %v1422
    %v1431 = vadd.f32 %v1397, %v1423
    %v1432 = vadd.f32 %v1399, %v1424
    %v1433 = vadd.f32 %v1358, %v1425
    %v1434 = vadd.f32 %v1360, %v1426
    %v1435 = vadd.f32 %v1401, %v1427
    %v1436 = vadd.f32 %v1403, %v1428
    %v1437 = vmul.f32 %v1429, 0.7978846
    %v1438 = vmul.f32 %v1430, 0.7978846
    %v1439 = vmul.f32 %v1431, 0.7978846
    %v1440 = vmul.f32 %v1432, 0.7978846
    %v1441 = vmul.f32 %v1433, 0.7978846
    %v1442 = vmul.f32 %v1434, 0.7978846
    %v1443 = vmul.f32 %v1435, 0.7978846
    %v1444 = vmul.f32 %v1436, 0.7978846
    %v1445 = vtanh.pop %v1437
    %v1446 = vtanh.pop %v1438
    %v1447 = vtanh.pop %v1439
    %v1448 = vtanh.pop %v1440
    %v1449 = vtanh.pop %v1441
    %v1450 = vtanh.pop %v1442
    %v1451 = vtanh.pop %v1443
    %v1452 = vtanh.pop %v1444
    %v1453 = vadd.f32 %v1445, 1.0
    %v1454 = vadd.f32 %v1446, 1.0
    %v1455 = vadd.f32 %v1447, 1.0
    %v1456 = vadd.f32 %v1448, 1.0
    %v1457 = vadd.f32 %v1449, 1.0
    %v1458 = vadd.f32 %v1450, 1.0
    %v1459 = vadd.f32 %v1451, 1.0
    %v1460 = vadd.f32 %v1452, 1.0
    %v1461 = vmul.f32 %v1453, 0.5
    %v1462 = vmul.f32 %v1454, 0.5
    %v1463 = vmul.f32 %v1455, 0.5
    %v1464 = vmul.f32 %v1456, 0.5
    %v1465 = vmul.f32 %v1457, 0.5
    %v1466 = vmul.f32 %v1458, 0.5
    %v1467 = vmul.f32 %v1459, 0.5
    %v1468 = vmul.f32 %v1460, 0.5
    %v1469 = vmul.f32 %v1354, %v1461
    %v1470 = vmul.f32 %v1356, %v1462
    %v1471 = vmul.f32 %v1397, %v1463
    %v1472 = vmul.f32 %v1399, %v1464
    %v1473 = vmul.f32 %v1358, %v1465
    %v1474 = vmul.f32 %v1360, %v1466
    %v1475 = vmul.f32 %v1401, %v1467
    %v1476 = vmul.f32 %v1403, %v1468
    %v1477 = vpack.c.bf16 %v1473, %v1469
    %v1478 = vpack.c.bf16 %v1474, %v1470
    %v1479 = vpack.c.bf16 %v1475, %v1471
    %v1480 = vpack.c.bf16 %v1476, %v1472
    %v1481 = vld [vmem:[#allocation7] sm:$0xf]
    %v1482 = vld [vmem:[#allocation7 + $0x4] sm:$0xf]
    %v1483 = vld [vmem:[#allocation7 + $0x8] sm:$0xf]
    %v1484 = vld [vmem:[#allocation7 + $0xc] sm:$0xf]
    %v1485 = vld [vmem:[#allocation7 + $0x10] sm:$0xf]
    %v1486 = vld [vmem:[#allocation7 + $0x14] sm:$0xf]
    %v1487 = vld [vmem:[#allocation7 + $0x18] sm:$0xf]
    %v1488 = vld [vmem:[#allocation7 + $0x1c] sm:$0xf]
    %v1489 = vld [vmem:[#allocation7 + $0x20] sm:$0xf]
    %v1490 = vld [vmem:[#allocation7 + $0x24] sm:$0xf]
    %v1491 = vld [vmem:[#allocation7 + $0x28] sm:$0xf]
    %v1492 = vld [vmem:[#allocation7 + $0x2c] sm:$0xf]
    %v1493 = vld [vmem:[#allocation7 + $0x30] sm:$0xf]
    %v1494 = vld [vmem:[#allocation7 + $0x34] sm:$0xf]
    %v1495 = vld [vmem:[#allocation7 + $0x38] sm:$0xf]
    %v1496 = vld [vmem:[#allocation7 + $0x3c] sm:$0xf]
    %v1497 = vld [vmem:[#allocation7 + $0x40] sm:$0xf]
    %v1498 = vld [vmem:[#allocation7 + $0x44] sm:$0xf]
    %v1499 = vld [vmem:[#allocation7 + $0x48] sm:$0xf]
    %v1500 = vld [vmem:[#allocation7 + $0x4c] sm:$0xf]
    %v1501 = vld [vmem:[#allocation7 + $0x50] sm:$0xf]
    %v1502 = vld [vmem:[#allocation7 + $0x54] sm:$0xf]
    %v1503 = vld [vmem:[#allocation7 + $0x58] sm:$0xf]
    %v1504 = vld [vmem:[#allocation7 + $0x5c] sm:$0xf]
    %v1505 = vld [vmem:[#allocation7 + $0x60] sm:$0xf]
    %v1506 = vld [vmem:[#allocation7 + $0x64] sm:$0xf]
    %v1507 = vld [vmem:[#allocation7 + $0x68] sm:$0xf]
    %v1508 = vld [vmem:[#allocation7 + $0x6c] sm:$0xf]
    %v1509 = vld [vmem:[#allocation7 + $0x70] sm:$0xf]
    %v1510 = vld [vmem:[#allocation7 + $0x74] sm:$0xf]
    %v1511 = vld [vmem:[#allocation7 + $0x78] sm:$0xf]
    %v1512 = vld [vmem:[#allocation7 + $0x7c] sm:$0xf]
    %v1513 = vld [vmem:[#allocation7 + $0x80] sm:$0xf]
    %v1514 = vld [vmem:[#allocation7 + $0x84] sm:$0xf]
    %v1515 = vld [vmem:[#allocation7 + $0x88] sm:$0xf]
    %v1516 = vld [vmem:[#allocation7 + $0x8c] sm:$0xf]
    %v1517 = vld [vmem:[#allocation7 + $0x90] sm:$0xf]
    %v1518 = vld [vmem:[#allocation7 + $0x94] sm:$0xf]
    %v1519 = vld [vmem:[#allocation7 + $0x98] sm:$0xf]
    %v1520 = vld [vmem:[#allocation7 + $0x9c] sm:$0xf]
    %v1521 = vld [vmem:[#allocation7 + $0xa0] sm:$0xf]
    %v1522 = vld [vmem:[#allocation7 + $0xa4] sm:$0xf]
    %v1523 = vld [vmem:[#allocation7 + $0xa8] sm:$0xf]
    %v1524 = vld [vmem:[#allocation7 + $0xac] sm:$0xf]
    %v1525 = vld [vmem:[#allocation7 + $0xb0] sm:$0xf]
    %v1526 = vld [vmem:[#allocation7 + $0xb4] sm:$0xf]
    %v1527 = vld [vmem:[#allocation7 + $0xb8] sm:$0xf]
    %v1528 = vld [vmem:[#allocation7 + $0xbc] sm:$0xf]
    %v1529 = vld [vmem:[#allocation7 + $0xc0] sm:$0xf]
    %v1530 = vld [vmem:[#allocation7 + $0xc4] sm:$0xf]
    %v1531 = vld [vmem:[#allocation7 + $0xc8] sm:$0xf]
    %v1532 = vld [vmem:[#allocation7 + $0xcc] sm:$0xf]
    %v1533 = vld [vmem:[#allocation7 + $0xd0] sm:$0xf]
    %v1534 = vld [vmem:[#allocation7 + $0xd4] sm:$0xf]
    %v1535 = vld [vmem:[#allocation7 + $0xd8] sm:$0xf]
    %v1536 = vld [vmem:[#allocation7 + $0xdc] sm:$0xf]
    %v1537 = vld [vmem:[#allocation7 + $0xe0] sm:$0xf]
    %v1538 = vld [vmem:[#allocation7 + $0xe4] sm:$0xf]
    %v1539 = vld [vmem:[#allocation7 + $0xe8] sm:$0xf]
    %v1540 = vld [vmem:[#allocation7 + $0xec] sm:$0xf]
    %v1541 = vld [vmem:[#allocation7 + $0xf0] sm:$0xf]
    %v1542 = vld [vmem:[#allocation7 + $0xf4] sm:$0xf]
    %v1543 = vld [vmem:[#allocation7 + $0xf8] sm:$0xf]
    %v1544 = vld [vmem:[#allocation7 + $0xfc] sm:$0xf]
    %v1545 = vld [vmem:[%s13] sm:$0x1]
    %v1547 = vlaneseq
    %v1548 = vshrl.u32 %v1547, 7
    %v1549 = vsub.s32 0, %v1548
    %v1550 = vrot.slane %v1545, %v1549
    %v1616 = vunpack.c.l.b16 %v1481
    %v1617 = vunpack.c.l.b16 %v1482
    %v1618 = vunpack.c.l.b16 %v1483
    %v1619 = vunpack.c.l.b16 %v1484
    %v1620 = vunpack.c.l.b16 %v1485
    %v1621 = vunpack.c.l.b16 %v1486
    %v1622 = vunpack.c.l.b16 %v1487
    %v1623 = vunpack.c.l.b16 %v1488
    %v1624 = vunpack.c.l.b16 %v1489
    %v1625 = vunpack.c.l.b16 %v1490
    %v1626 = vunpack.c.l.b16 %v1491
    %v1627 = vunpack.c.l.b16 %v1492
    %v1628 = vunpack.c.l.b16 %v1493
    %v1629 = vunpack.c.l.b16 %v1494
    %v1630 = vunpack.c.l.b16 %v1495
    %v1631 = vunpack.c.l.b16 %v1496
    %v1632 = vunpack.c.l.b16 %v1497
    %v1633 = vunpack.c.l.b16 %v1498
    %v1634 = vunpack.c.l.b16 %v1499
    %v1635 = vunpack.c.l.b16 %v1500
    %v1636 = vunpack.c.l.b16 %v1501
    %v1637 = vunpack.c.l.b16 %v1502
    %v1638 = vunpack.c.l.b16 %v1503
    %v1639 = vunpack.c.l.b16 %v1504
    %v1640 = vunpack.c.l.b16 %v1505
    %v1641 = vunpack.c.l.b16 %v1506
    %v1642 = vunpack.c.l.b16 %v1507
    %v1643 = vunpack.c.l.b16 %v1508
    %v1644 = vunpack.c.l.b16 %v1509
    %v1645 = vunpack.c.l.b16 %v1510
    %v1646 = vunpack.c.l.b16 %v1511
    %v1647 = vunpack.c.l.b16 %v1512
    %v1648 = vunpack.c.l.b16 %v1513
    %v1649 = vunpack.c.l.b16 %v1514
    %v1650 = vunpack.c.l.b16 %v1515
    %v1651 = vunpack.c.l.b16 %v1516
    %v1652 = vunpack.c.l.b16 %v1517
    %v1653 = vunpack.c.l.b16 %v1518
    %v1654 = vunpack.c.l.b16 %v1519
    %v1655 = vunpack.c.l.b16 %v1520
    %v1656 = vunpack.c.l.b16 %v1521
    %v1657 = vunpack.c.l.b16 %v1522
    %v1658 = vunpack.c.l.b16 %v1523
    %v1659 = vunpack.c.l.b16 %v1524
    %v1660 = vunpack.c.l.b16 %v1525
    %v1661 = vunpack.c.l.b16 %v1526
    %v1662 = vunpack.c.l.b16 %v1527
    %v1663 = vunpack.c.l.b16 %v1528
    %v1664 = vunpack.c.l.b16 %v1529
    %v1665 = vunpack.c.l.b16 %v1530
    %v1666 = vunpack.c.l.b16 %v1531
    %v1667 = vunpack.c.l.b16 %v1532
    %v1668 = vunpack.c.l.b16 %v1533
    %v1669 = vunpack.c.l.b16 %v1534
    %v1670 = vunpack.c.l.b16 %v1535
    %v1671 = vunpack.c.l.b16 %v1536
    %v1672 = vunpack.c.l.b16 %v1537
    %v1673 = vunpack.c.l.b16 %v1538
    %v1674 = vunpack.c.l.b16 %v1539
    %v1675 = vunpack.c.l.b16 %v1540
    %v1676 = vunpack.c.l.b16 %v1541
    %v1677 = vunpack.c.l.b16 %v1542
    %v1678 = vunpack.c.l.b16 %v1543
    %v1679 = vunpack.c.l.b16 %v1544
    %v1680 = vpack.c.b16 %v1617, %v1616
    %v1681 = vpack.c.b16 %v1619, %v1618
    %v1682 = vpack.c.b16 %v1621, %v1620
    %v1683 = vpack.c.b16 %v1623, %v1622
    %v1684 = vpack.c.b16 %v1625, %v1624
    %v1685 = vpack.c.b16 %v1627, %v1626
    %v1686 = vpack.c.b16 %v1629, %v1628
    %v1687 = vpack.c.b16 %v1631, %v1630
    %v1688 = vpack.c.b16 %v1633, %v1632
    %v1689 = vpack.c.b16 %v1635, %v1634
    %v1690 = vpack.c.b16 %v1637, %v1636
    %v1691 = vpack.c.b16 %v1639, %v1638
    %v1692 = vpack.c.b16 %v1641, %v1640
    %v1693 = vpack.c.b16 %v1643, %v1642
    %v1694 = vpack.c.b16 %v1645, %v1644
    %v1695 = vpack.c.b16 %v1647, %v1646
    %v1696 = vpack.c.b16 %v1649, %v1648
    %v1697 = vpack.c.b16 %v1651, %v1650
    %v1698 = vpack.c.b16 %v1653, %v1652
    %v1699 = vpack.c.b16 %v1655, %v1654
    %v1700 = vpack.c.b16 %v1657, %v1656
    %v1701 = vpack.c.b16 %v1659, %v1658
    %v1702 = vpack.c.b16 %v1661, %v1660
    %v1703 = vpack.c.b16 %v1663, %v1662
    %v1704 = vpack.c.b16 %v1665, %v1664
    %v1705 = vpack.c.b16 %v1667, %v1666
    %v1706 = vpack.c.b16 %v1669, %v1668
    %v1707 = vpack.c.b16 %v1671, %v1670
    %v1708 = vpack.c.b16 %v1673, %v1672
    %v1709 = vpack.c.b16 %v1675, %v1674
    %v1710 = vpack.c.b16 %v1677, %v1676
    %v1711 = vpack.c.b16 %v1679, %v1678
    %1744 = vmatprep.subr.bf16.mxu0 0
    %1745 = vmatpush1.bf16.msra.mxu0 %v1687
    %1746 = vmatprep.subr.bf16.mxu0 0
    %1747 = vmatpush1.bf16.msra.mxu0 %v1686
    %1748 = vmatprep.subr.bf16.mxu0 0
    %1749 = vmatpush1.bf16.msra.mxu0 %v1685
    %1750 = vmatprep.subr.bf16.mxu0 0
    %1751 = vmatpush1.bf16.msra.mxu0 %v1684
    %1752 = vmatprep.subr.bf16.mxu0 0
    %1753 = vmatpush1.bf16.msra.mxu0 %v1683
    %1754 = vmatprep.subr.bf16.mxu0 0
    %1755 = vmatpush1.bf16.msra.mxu0 %v1682
    %1756 = vmatprep.subr.bf16.mxu0 0
    %1757 = vmatpush1.bf16.msra.mxu0 %v1681
    %1758 = vmatprep.subr.bf16.mxu0 0
    %1759 = vmatpush1.bf16.msra.mxu0 %v1680
    %1760 = vmatprep.subr.bf16.mxu0 0
    %1761 = vmatpush2.bf16.msra.mxu0 %v1695
    %1762 = vmatprep.subr.bf16.mxu0 0
    %1763 = vmatpush2.bf16.msra.mxu0 %v1694
    %1764 = vmatprep.subr.bf16.mxu0 0
    %1765 = vmatpush2.bf16.msra.mxu0 %v1693
    %1766 = vmatprep.subr.bf16.mxu0 0
    %1767 = vmatpush2.bf16.msra.mxu0 %v1692
    %1768 = vmatprep.subr.bf16.mxu0 0
    %1769 = vmatpush2.bf16.msra.mxu0 %v1691
    %1770 = vmatprep.subr.bf16.mxu0 0
    %1771 = vmatpush2.bf16.msra.mxu0 %v1690
    %1772 = vmatprep.subr.bf16.mxu0 0
    %1773 = vmatpush2.bf16.msra.mxu0 %v1689
    %1774 = vmatprep.subr.bf16.mxu0 0
    %1775 = vmatpush2.bf16.msra.mxu0 %v1688
    %1776 = vmatprep.mubr.bf16.mxu0 %v1478
    %1777 = vmatmul.mubr.bf16.gmra.mxu0 %v1477
    %v1778 = vpop.f32.mrf.mxu0
    %v1779 = vadd.f32 %v1550, %v1778
    %v1780 = vpop.f32.mrf.mxu0
    %v1781 = vpop.f32.mrf.mxu0
    %v1782 = vadd.f32 %v1550, %v1781
    %v1783 = vpop.f32.mrf.mxu0
    %1784 = vdwg.mxu0
    %1785 = vmatprep.subr.bf16.mxu0 0
    %1786 = vmatpush1.bf16.msra.mxu0 %v1703
    %1787 = vmatprep.subr.bf16.mxu0 0
    %1788 = vmatpush1.bf16.msra.mxu0 %v1702
    %1789 = vmatprep.subr.bf16.mxu0 0
    %1790 = vmatpush1.bf16.msra.mxu0 %v1701
    %1791 = vmatprep.subr.bf16.mxu0 0
    %1792 = vmatpush1.bf16.msra.mxu0 %v1700
    %1793 = vmatprep.subr.bf16.mxu0 0
    %1794 = vmatpush1.bf16.msra.mxu0 %v1699
    %1795 = vmatprep.subr.bf16.mxu0 0
    %1796 = vmatpush1.bf16.msra.mxu0 %v1698
    %1797 = vmatprep.subr.bf16.mxu0 0
    %1798 = vmatpush1.bf16.msra.mxu0 %v1697
    %1799 = vmatprep.subr.bf16.mxu0 0
    %1800 = vmatpush1.bf16.msra.mxu0 %v1696
    %1801 = vmatprep.subr.bf16.mxu0 0
    %1802 = vmatpush2.bf16.msra.mxu0 %v1711
    %1803 = vmatprep.subr.bf16.mxu0 0
    %1804 = vmatpush2.bf16.msra.mxu0 %v1710
    %1805 = vmatprep.subr.bf16.mxu0 0
    %1806 = vmatpush2.bf16.msra.mxu0 %v1709
    %1807 = vmatprep.subr.bf16.mxu0 0
    %1808 = vmatpush2.bf16.msra.mxu0 %v1708
    %1809 = vmatprep.subr.bf16.mxu0 0
    %1810 = vmatpush2.bf16.msra.mxu0 %v1707
    %1811 = vmatprep.subr.bf16.mxu0 0
    %1812 = vmatpush2.bf16.msra.mxu0 %v1706
    %1813 = vmatprep.subr.bf16.mxu0 0
    %1814 = vmatpush2.bf16.msra.mxu0 %v1705
    %1815 = vmatprep.subr.bf16.mxu0 0
    %1816 = vmatpush2.bf16.msra.mxu0 %v1704
    %1817 = vmatprep.mubr.bf16.mxu0 %v1480
    %1818 = vmatmul.mubr.bf16.gmra.mxu0 %v1479
    %v1819 = vpop.f32.mrf.mxu0
    %v1820 = vadd.f32 %v1779, %v1819
    %v1821 = vpop.f32.mrf.mxu0
    %v1822 = vpop.f32.mrf.mxu0
    %v1823 = vadd.f32 %v1782, %v1822
    %v1824 = vpop.f32.mrf.mxu0
    %1825 = vdwg.mxu0
    %v1826 = vadd.f32 %v1820, %v1102
    %v1827 = vadd.f32 %v1823, %v1103
    %v1828 = vld [vmem:[%s14] sm:$0x1]
    %v1829 = vld [vmem:[%s15] sm:$0x1]
    %1830 = vadd.xlane.f32.xlu0 %v1826
    %v1831 = vpop.xlane.xlu0 %1830
    %1832 = vadd.xlane.f32.xlu0 %v1827
    %v1833 = vpop.xlane.xlu0 %1832
    %v1834 = vmul.f32 %v1831, %v117
    %v1835 = vmul.f32 %v1833, %v117
    %v1836 = vsub.f32 %v1826, %v1834
    %v1837 = vsub.f32 %v1827, %v1835
    %v1838 = vmul.f32 %v1836, %v1836
    %v1839 = vmul.f32 %v1837, %v1837
    %1840 = vadd.xlane.f32.xlu0 %v1838
    %v1841 = vpop.xlane.xlu0 %1840
    %1842 = vadd.xlane.f32.xlu0 %v1839
    %v1843 = vpop.xlane.xlu0 %1842
    %v1844 = vmul.f32 %v1841, %v117
    %v1845 = vmul.f32 %v1843, %v117
    %v1846 = vadd.f32 %v1844, 1e-12
    %v1847 = vadd.f32 %v1845, 1e-12
    %v1848 = vrsqrt.pop %v1846
    %v1849 = vrsqrt.pop %v1847
    %v1850 = vmul.f32 %v1836, %v1848
    %v1851 = vmul.f32 %v1837, %v1849
    %v1853 = vlaneseq
    %v1854 = vshrl.u32 %v1853, 7
    %v1855 = vsub.s32 0, %v1854
    %v1856 = vrot.slane %v1828, %v1855
    %v1858 = vmul.f32 %v1850, %v1856
    %v1859 = vmul.f32 %v1851, %v1856
    %v1861 = vlaneseq
    %v1862 = vshrl.u32 %v1861, 7
    %v1863 = vsub.s32 0, %v1862
    %v1864 = vrot.slane %v1829, %v1863
    %v1866 = vadd.f32 %v1858, %v1864
    %v1867 = vadd.f32 %v1859, %v1864
    %v1868 = vpack.c.bf16 %v1867, %v1866
    %s1869 = scalar_lea.vmem [#allocation3], 192
    %v1870 = vld [vmem:[%s1869] sm:$0xff]
    %v1871 = vld [vmem:[%s1869 + $0x8] sm:$0xf]
    %v1872 = vld [vmem:[%s1869 + $0xc] sm:$0xff]
    %v1873 = vld [vmem:[%s1869 + $0x14] sm:$0xf]
    %v1874 = vld [vmem:[%s1869 + $0x18] sm:$0xff]
    %v1875 = vld [vmem:[%s1869 + $0x20] sm:$0xf]
    %v1876 = vld [vmem:[%s1869 + $0x24] sm:$0xff]
    %v1877 = vld [vmem:[%s1869 + $0x2c] sm:$0xf]
    %v1878 = vld [vmem:[%s1869 + $0x30] sm:$0xff]
    %v1879 = vld [vmem:[%s1869 + $0x38] sm:$0xf]
    %v1880 = vld [vmem:[%s1869 + $0x3c] sm:$0xff]
    %v1881 = vld [vmem:[%s1869 + $0x44] sm:$0xf]
    %v1882 = vld [vmem:[%s1869 + $0x48] sm:$0xff]
    %v1883 = vld [vmem:[%s1869 + $0x50] sm:$0xf]
    %v1884 = vld [vmem:[%s1869 + $0x54] sm:$0xff]
    %v1885 = vld [vmem:[%s1869 + $0x5c] sm:$0xf]
    %v1886 = vld [vmem:[%s1869 + $0x60] sm:$0xff]
    %v1887 = vld [vmem:[%s1869 + $0x68] sm:$0xf]
    %v1888 = vld [vmem:[%s1869 + $0x6c] sm:$0xff]
    %v1889 = vld [vmem:[%s1869 + $0x74] sm:$0xf]
    %v1890 = vld [vmem:[%s1869 + $0x78] sm:$0xff]
    %v1891 = vld [vmem:[%s1869 + $0x80] sm:$0xf]
    %v1892 = vld [vmem:[%s1869 + $0x84] sm:$0xff]
    %v1893 = vld [vmem:[%s1869 + $0x8c] sm:$0xf]
    %v1894 = vld [vmem:[%s1869 + $0x90] sm:$0xff]
    %v1895 = vld [vmem:[%s1869 + $0x98] sm:$0xf]
    %v1896 = vld [vmem:[%s1869 + $0x9c] sm:$0xff]
    %v1897 = vld [vmem:[%s1869 + $0xa4] sm:$0xf]
    %v1898 = vld [vmem:[%s1869 + $0xa8] sm:$0xff]
    %v1899 = vld [vmem:[%s1869 + $0xb0] sm:$0xf]
    %v1900 = vld [vmem:[%s1869 + $0xb4] sm:$0xff]
    %v1901 = vld [vmem:[%s1869 + $0xbc] sm:$0xf]
    %s1902 = scalar_lea.vmem %s5, 3
    %v1903 = vld [vmem:[%s1902] sm:$0x7]
    %v1905 = vlaneseq
    %v1906 = vshrl.u32 %v1905, 7
    %v1907 = vsub.s32 0, %v1906
    %v1908 = vrot.slane %v1903, %v1907
    %v1909 = vlaneseq
    %v1910 = vshrl.u32 %v1909, 7
    %v1911 = vsub.s32 1, %v1910
    %v1912 = vrot.slane %v1903, %v1911
    %v1913 = vlaneseq
    %v1914 = vshrl.u32 %v1913, 7
    %v1915 = vsub.s32 2, %v1914
    %v1916 = vrot.slane %v1903, %v1915
    %v1952 = vunpack.c.l.b16 %v1870
    %v1953 = vunpack.c.h.b16 %v1870
    %v1954 = vunpack.c.l.b16 %v1871
    %v1955 = vunpack.c.l.b16 %v1872
    %v1956 = vunpack.c.h.b16 %v1872
    %v1957 = vunpack.c.l.b16 %v1873
    %v1958 = vunpack.c.l.b16 %v1874
    %v1959 = vunpack.c.h.b16 %v1874
    %v1960 = vunpack.c.l.b16 %v1875
    %v1961 = vunpack.c.l.b16 %v1876
    %v1962 = vunpack.c.h.b16 %v1876
    %v1963 = vunpack.c.l.b16 %v1877
    %v1964 = vunpack.c.l.b16 %v1878
    %v1965 = vunpack.c.h.b16 %v1878
    %v1966 = vunpack.c.l.b16 %v1879
    %v1967 = vunpack.c.l.b16 %v1880
    %v1968 = vunpack.c.h.b16 %v1880
    %v1969 = vunpack.c.l.b16 %v1881
    %v1970 = vunpack.c.l.b16 %v1882
    %v1971 = vunpack.c.h.b16 %v1882
    %v1972 = vunpack.c.l.b16 %v1883
    %v1973 = vunpack.c.l.b16 %v1884
    %v1974 = vunpack.c.h.b16 %v1884
    %v1975 = vunpack.c.l.b16 %v1885
    %v1976 = vunpack.c.l.b16 %v1886
    %v1977 = vunpack.c.h.b16 %v1886
    %v1978 = vunpack.c.l.b16 %v1887
    %v1979 = vunpack.c.l.b16 %v1888
    %v1980 = vunpack.c.h.b16 %v1888
    %v1981 = vunpack.c.l.b16 %v1889
    %v1982 = vunpack.c.l.b16 %v1890
    %v1983 = vunpack.c.h.b16 %v1890
    %v1984 = vunpack.c.l.b16 %v1891
    %v1985 = vunpack.c.l.b16 %v1892
    %v1986 = vunpack.c.h.b16 %v1892
    %v1987 = vunpack.c.l.b16 %v1893
    %v1988 = vunpack.c.l.b16 %v1894
    %v1989 = vunpack.c.h.b16 %v1894
    %v1990 = vunpack.c.l.b16 %v1895
    %v1991 = vunpack.c.l.b16 %v1896
    %v1992 = vunpack.c.h.b16 %v1896
    %v1993 = vunpack.c.l.b16 %v1897
    %v1994 = vunpack.c.l.b16 %v1898
    %v1995 = vunpack.c.h.b16 %v1898
    %v1996 = vunpack.c.l.b16 %v1899
    %v1997 = vunpack.c.l.b16 %v1900
    %v1998 = vunpack.c.h.b16 %v1900
    %v1999 = vunpack.c.l.b16 %v1901
    %v2000 = vpack.c.b16 %v1955, %v1952
    %v2001 = vpack.c.b16 %v1956, %v1953
    %v2002 = vpack.c.b16 %v1957, %v1954
    %v2003 = vpack.c.b16 %v1961, %v1958
    %v2004 = vpack.c.b16 %v1962, %v1959
    %v2005 = vpack.c.b16 %v1963, %v1960
    %v2006 = vpack.c.b16 %v1967, %v1964
    %v2007 = vpack.c.b16 %v1968, %v1965
    %v2008 = vpack.c.b16 %v1969, %v1966
    %v2009 = vpack.c.b16 %v1973, %v1970
    %v2010 = vpack.c.b16 %v1974, %v1971
    %v2011 = vpack.c.b16 %v1975, %v1972
    %v2012 = vpack.c.b16 %v1979, %v1976
    %v2013 = vpack.c.b16 %v1980, %v1977
    %v2014 = vpack.c.b16 %v1981, %v1978
    %v2015 = vpack.c.b16 %v1985, %v1982
    %v2016 = vpack.c.b16 %v1986, %v1983
    %v2017 = vpack.c.b16 %v1987, %v1984
    %v2018 = vpack.c.b16 %v1991, %v1988
    %v2019 = vpack.c.b16 %v1992, %v1989
    %v2020 = vpack.c.b16 %v1993, %v1990
    %v2021 = vpack.c.b16 %v1997, %v1994
    %v2022 = vpack.c.b16 %v1998, %v1995
    %v2023 = vpack.c.b16 %v1999, %v1996
    %2048 = vmatprep.subr.bf16.mxu0 %v2022
    %2049 = vmatpush1.bf16.msra.mxu0 %v2021
    %2050 = vmatprep.subr.bf16.mxu0 %v2019
    %2051 = vmatpush1.bf16.msra.mxu0 %v2018
    %2052 = vmatprep.subr.bf16.mxu0 %v2016
    %2053 = vmatpush1.bf16.msra.mxu0 %v2015
    %2054 = vmatprep.subr.bf16.mxu0 %v2013
    %2055 = vmatpush1.bf16.msra.mxu0 %v2012
    %2056 = vmatprep.subr.bf16.mxu0 %v2010
    %2057 = vmatpush1.bf16.msra.mxu0 %v2009
    %2058 = vmatprep.subr.bf16.mxu0 %v2007
    %2059 = vmatpush1.bf16.msra.mxu0 %v2006
    %2060 = vmatprep.subr.bf16.mxu0 %v2004
    %2061 = vmatpush1.bf16.msra.mxu0 %v2003
    %2062 = vmatprep.subr.bf16.mxu0 %v2001
    %2063 = vmatpush1.bf16.msra.mxu0 %v2000
    %2064 = vmatprep.subr.bf16.mxu0 0
    %2065 = vmatpush2.bf16.msra.mxu0 0
    %2066 = vmatprep.subr.bf16.mxu0 0
    %2067 = vmatpush2.bf16.msra.mxu0 0
    %2068 = vmatprep.subr.bf16.mxu0 0
    %2069 = vmatpush2.bf16.msra.mxu0 0
    %2070 = vmatprep.subr.bf16.mxu0 0
    %2071 = vmatpush2.bf16.msra.mxu0 0
    %2072 = vmatprep.subr.bf16.mxu0 0
    %2073 = vmatpush2.bf16.msra.mxu0 0
    %2074 = vmatprep.subr.bf16.mxu0 0
    %2075 = vmatpush2.bf16.msra.mxu0 0
    %2076 = vmatprep.subr.bf16.mxu0 0
    %2077 = vmatpush2.bf16.msra.mxu0 0
    %2078 = vmatprep.subr.bf16.mxu0 0
    %2079 = vmatpush2.bf16.msra.mxu0 0
    %2080 = vmatprep.mubr.bf16.mxu0 0
    %2081 = vmatmul.mubr.bf16.gmra.mxu0 %v1868
    %v2082 = vpop.f32.mrf.mxu0
    %v2083 = vadd.f32 %v1908, %v2082
    %v2084 = vpop.f32.mrf.mxu0
    %v2085 = vadd.f32 %v1912, %v2084
    %v2086 = vpop.f32.mrf.mxu0
    %v2087 = vadd.f32 %v1908, %v2086
    %v2088 = vpop.f32.mrf.mxu0
    %v2089 = vadd.f32 %v1912, %v2088
    %2090 = vdwg.mxu0
    %2091 = vmatprep.subr.bf16.mxu0 0
    %2092 = vmatpush1.bf16.msra.mxu0 %v2023
    %2093 = vmatprep.subr.bf16.mxu0 0
    %2094 = vmatpush1.bf16.msra.mxu0 %v2020
    %2095 = vmatprep.subr.bf16.mxu0 0
    %2096 = vmatpush1.bf16.msra.mxu0 %v2017
    %2097 = vmatprep.subr.bf16.mxu0 0
    %2098 = vmatpush1.bf16.msra.mxu0 %v2014
    %2099 = vmatprep.subr.bf16.mxu0 0
    %2100 = vmatpush1.bf16.msra.mxu0 %v2011
    %2101 = vmatprep.subr.bf16.mxu0 0
    %2102 = vmatpush1.bf16.msra.mxu0 %v2008
    %2103 = vmatprep.subr.bf16.mxu0 0
    %2104 = vmatpush1.bf16.msra.mxu0 %v2005
    %2105 = vmatprep.subr.bf16.mxu0 0
    %2106 = vmatpush1.bf16.msra.mxu0 %v2002
    %2107 = vmatprep.subr.bf16.mxu0 0
    %2108 = vmatpush2.bf16.msra.mxu0 0
    %2109 = vmatprep.subr.bf16.mxu0 0
    %2110 = vmatpush2.bf16.msra.mxu0 0
    %2111 = vmatprep.subr.bf16.mxu0 0
    %2112 = vmatpush2.bf16.msra.mxu0 0
    %2113 = vmatprep.subr.bf16.mxu0 0
    %2114 = vmatpush2.bf16.msra.mxu0 0
    %2115 = vmatprep.subr.bf16.mxu0 0
    %2116 = vmatpush2.bf16.msra.mxu0 0
    %2117 = vmatprep.subr.bf16.mxu0 0
    %2118 = vmatpush2.bf16.msra.mxu0 0
    %2119 = vmatprep.subr.bf16.mxu0 0
    %2120 = vmatpush2.bf16.msra.mxu0 0
    %2121 = vmatprep.subr.bf16.mxu0 0
    %2122 = vmatpush2.bf16.msra.mxu0 0
    %2123 = vmatprep.mubr.bf16.mxu0 0
    %2124 = vmatmul.mubr.bf16.gmra.mxu0 %v1868
    %v2125 = vpop.f32.mrf.mxu0
    %v2126 = vadd.f32 %v1916, %v2125
    %v2127 = vpop.f32.mrf.mxu0
    %v2128 = vpop.f32.mrf.mxu0
    %v2129 = vadd.f32 %v1916, %v2128
    %v2130 = vpop.f32.mrf.mxu0
    %2131 = vdwg.mxu0
    %v2132 = vpack.c.bf16 %v2087, %v2083
    %v2133 = vpack.c.bf16 %v2089, %v2085
    %v2134 = vpack.c.bf16 %v2129, %v2126
    %v2136 = vsel %vm419, %v2132, 0
    %v2139 = vsel %vm419, %v2133, 0
    %2141 = vmatprep.subr.bf16.mxu0 0
    %2142 = vmatpush1.bf16.xpose.msra.mxu0 0
    %2143 = vmatprep.subr.bf16.mxu0 0
    %2144 = vmatpush1.bf16.xpose.msra.mxu0 0
    %2145 = vmatprep.subr.bf16.mxu0 0
    %2146 = vmatpush1.bf16.xpose.msra.mxu0 0
    %2147 = vmatprep.subr.bf16.mxu0 0
    %2148 = vmatpush1.bf16.xpose.msra.mxu0 0
    %2149 = vmatprep.subr.bf16.mxu0 0
    %2150 = vmatpush1.bf16.xpose.msra.mxu0 0
    %2151 = vmatprep.subr.bf16.mxu0 0
    %2152 = vmatpush1.bf16.xpose.msra.mxu0 0
    %2153 = vmatprep.subr.bf16.mxu0 0
    %2154 = vmatpush1.bf16.xpose.msra.mxu0 0
    %2155 = vmatprep.subr.bf16.mxu0 0
    %2156 = vmatpush1.bf16.xpose.msra.mxu0 %v2139
    %2157 = vmatprep.subr.bf16.mxu0 0
    %2158 = vmatpush2.bf16.xpose.msra.mxu0 0
    %2159 = vmatprep.subr.bf16.mxu0 0
    %2160 = vmatpush2.bf16.xpose.msra.mxu0 0
    %2161 = vmatprep.subr.bf16.mxu0 0
    %2162 = vmatpush2.bf16.xpose.msra.mxu0 0
    %2163 = vmatprep.subr.bf16.mxu0 0
    %2164 = vmatpush2.bf16.xpose.msra.mxu0 0
    %2165 = vmatprep.subr.bf16.mxu0 0
    %2166 = vmatpush2.bf16.xpose.msra.mxu0 0
    %2167 = vmatprep.subr.bf16.mxu0 0
    %2168 = vmatpush2.bf16.xpose.msra.mxu0 0
    %2169 = vmatprep.subr.bf16.mxu0 0
    %2170 = vmatpush2.bf16.xpose.msra.mxu0 0
    %2171 = vmatprep.subr.bf16.mxu0 0
    %2172 = vmatpush2.bf16.xpose.msra.mxu0 0
    %2173 = vmatprep.mubr.bf16.mxu0 0
    %2174 = vmatmul.mubr.bf16.gmra.mxu0 %v2136
    %v2175 = vpop.f32.mrf.mxu0
    %v2176 = vadd.f32 0.0, %v2175
    %v2177 = vpop.f32.mrf.mxu0
    %v2178 = vpop.f32.mrf.mxu0
    %v2179 = vadd.f32 0.0, %v2178
    %v2180 = vpop.f32.mrf.mxu0
    %2181 = vdwg.mxu0
    %v2182 = vmul.f32 %v2176, 0.17677669
    %v2183 = vmul.f32 %v2179, 0.17677669
    %v2184 = vadd.f32 %v2182, %v152
    %v2185 = vadd.f32 %v2183, %v153
    %v2186 = vsel %vm471, %v2184, -inf
    %2187 = vmax.xlane.f32.xlu0 %v2186
    %v2188 = vpop.xlane.xlu0 %2187
    %v2189 = vsel %vm471, %v2185, -inf
    %2190 = vmax.xlane.f32.xlu0 %v2189
    %v2191 = vpop.xlane.xlu0 %2190
    %v2192 = vsub.f32 %v2184, %v2188
    %v2193 = vsub.f32 %v2185, %v2191
    %v2194 = vmul.f32 %v2192, 1.442695
    %v2195 = vpow.pop %v2194
    %v2196 = vmul.f32 %v2193, 1.442695
    %v2197 = vpow.pop %v2196
    %v2198 = vsel %vm471, %v2195, 0.0
    %2199 = vadd.xlane.f32.xlu0 %v2198
    %v2200 = vpop.xlane.xlu0 %2199
    %v2201 = vsel %vm471, %v2197, 0.0
    %2202 = vadd.xlane.f32.xlu0 %v2201
    %v2203 = vpop.xlane.xlu0 %2202
    %v2204 = vrcp.pop %v2200
    %v2205 = vrcp.pop %v2203
    %v2206 = vmul.f32 %v2195, %v2204
    %v2207 = vmul.f32 %v2197, %v2205
    %v2208 = vpack.c.bf16 %v2207, %v2206
    %v2210 = vsel %vm471, %v2208, 0
    %2212 = vmatprep.subr.bf16.mxu0 0
    %2213 = vmatpush1.bf16.msra.mxu0 0
    %2214 = vmatprep.subr.bf16.mxu0 0
    %2215 = vmatpush1.bf16.msra.mxu0 0
    %2216 = vmatprep.subr.bf16.mxu0 0
    %2217 = vmatpush1.bf16.msra.mxu0 0
    %2218 = vmatprep.subr.bf16.mxu0 0
    %2219 = vmatpush1.bf16.msra.mxu0 0
    %2220 = vmatprep.subr.bf16.mxu0 0
    %2221 = vmatpush1.bf16.msra.mxu0 0
    %2222 = vmatprep.subr.bf16.mxu0 0
    %2223 = vmatpush1.bf16.msra.mxu0 0
    %2224 = vmatprep.subr.bf16.mxu0 0
    %2225 = vmatpush1.bf16.msra.mxu0 0
    %2226 = vmatprep.subr.bf16.mxu0 0
    %2227 = vmatpush1.bf16.msra.mxu0 %v2134
    %2228 = vmatprep.subr.bf16.mxu0 0
    %2229 = vmatpush2.bf16.msra.mxu0 0
    %2230 = vmatprep.subr.bf16.mxu0 0
    %2231 = vmatpush2.bf16.msra.mxu0 0
    %2232 = vmatprep.subr.bf16.mxu0 0
    %2233 = vmatpush2.bf16.msra.mxu0 0
    %2234 = vmatprep.subr.bf16.mxu0 0
    %2235 = vmatpush2.bf16.msra.mxu0 0
    %2236 = vmatprep.subr.bf16.mxu0 0
    %2237 = vmatpush2.bf16.msra.mxu0 0
    %2238 = vmatprep.subr.bf16.mxu0 0
    %2239 = vmatpush2.bf16.msra.mxu0 0
    %2240 = vmatprep.subr.bf16.mxu0 0
    %2241 = vmatpush2.bf16.msra.mxu0 0
    %2242 = vmatprep.subr.bf16.mxu0 0
    %2243 = vmatpush2.bf16.msra.mxu0 0
    %2244 = vmatprep.mubr.bf16.mxu0 0
    %2245 = vmatmul.mubr.bf16.gmra.mxu0 %v2210
    %v2246 = vpop.f32.mrf.mxu0
    %v2247 = vadd.f32 0.0, %v2246
    %v2248 = vpop.f32.mrf.mxu0
    %v2249 = vpop.f32.mrf.mxu0
    %v2250 = vadd.f32 0.0, %v2249
    %v2251 = vpop.f32.mrf.mxu0
    %2252 = vdwg.mxu0
    %2254 = vrot.lane.b32.xlu0 %v2132, 96
    %v2255 = vpop.permute.xlu0 %2254
    %2257 = vrot.lane.b32.xlu0 %v2133, 96
    %v2258 = vpop.permute.xlu0 %2257
    %v2260 = vsel %vm419, %v2255, 0
    %v2263 = vsel %vm419, %v2258, 0
    %2265 = vmatprep.subr.bf16.mxu0 0
    %2266 = vmatpush1.bf16.xpose.msra.mxu0 0
    %2267 = vmatprep.subr.bf16.mxu0 0
    %2268 = vmatpush1.bf16.xpose.msra.mxu0 0
    %2269 = vmatprep.subr.bf16.mxu0 0
    %2270 = vmatpush1.bf16.xpose.msra.mxu0 0
    %2271 = vmatprep.subr.bf16.mxu0 0
    %2272 = vmatpush1.bf16.xpose.msra.mxu0 0
    %2273 = vmatprep.subr.bf16.mxu0 0
    %2274 = vmatpush1.bf16.xpose.msra.mxu0 0
    %2275 = vmatprep.subr.bf16.mxu0 0
    %2276 = vmatpush1.bf16.xpose.msra.mxu0 0
    %2277 = vmatprep.subr.bf16.mxu0 0
    %2278 = vmatpush1.bf16.xpose.msra.mxu0 0
    %2279 = vmatprep.subr.bf16.mxu0 0
    %2280 = vmatpush1.bf16.xpose.msra.mxu0 %v2263
    %2281 = vmatprep.subr.bf16.mxu0 0
    %2282 = vmatpush2.bf16.xpose.msra.mxu0 0
    %2283 = vmatprep.subr.bf16.mxu0 0
    %2284 = vmatpush2.bf16.xpose.msra.mxu0 0
    %2285 = vmatprep.subr.bf16.mxu0 0
    %2286 = vmatpush2.bf16.xpose.msra.mxu0 0
    %2287 = vmatprep.subr.bf16.mxu0 0
    %2288 = vmatpush2.bf16.xpose.msra.mxu0 0
    %2289 = vmatprep.subr.bf16.mxu0 0
    %2290 = vmatpush2.bf16.xpose.msra.mxu0 0
    %2291 = vmatprep.subr.bf16.mxu0 0
    %2292 = vmatpush2.bf16.xpose.msra.mxu0 0
    %2293 = vmatprep.subr.bf16.mxu0 0
    %2294 = vmatpush2.bf16.xpose.msra.mxu0 0
    %2295 = vmatprep.subr.bf16.mxu0 0
    %2296 = vmatpush2.bf16.xpose.msra.mxu0 0
    %2297 = vmatprep.mubr.bf16.mxu0 0
    %2298 = vmatmul.mubr.bf16.gmra.mxu0 %v2260
    %v2299 = vpop.f32.mrf.mxu0
    %v2300 = vadd.f32 0.0, %v2299
    %v2301 = vpop.f32.mrf.mxu0
    %v2302 = vpop.f32.mrf.mxu0
    %v2303 = vadd.f32 0.0, %v2302
    %v2304 = vpop.f32.mrf.mxu0
    %2305 = vdwg.mxu0
    %v2306 = vmul.f32 %v2300, 0.17677669
    %v2307 = vmul.f32 %v2303, 0.17677669
    %v2308 = vadd.f32 %v2306, %v152
    %v2309 = vadd.f32 %v2307, %v153
    %v2310 = vsel %vm471, %v2308, -inf
    %2311 = vmax.xlane.f32.xlu0 %v2310
    %v2312 = vpop.xlane.xlu0 %2311
    %v2313 = vsel %vm471, %v2309, -inf
    %2314 = vmax.xlane.f32.xlu0 %v2313
    %v2315 = vpop.xlane.xlu0 %2314
    %v2316 = vsub.f32 %v2308, %v2312
    %v2317 = vsub.f32 %v2309, %v2315
    %v2318 = vmul.f32 %v2316, 1.442695
    %v2319 = vpow.pop %v2318
    %v2320 = vmul.f32 %v2317, 1.442695
    %v2321 = vpow.pop %v2320
    %v2322 = vsel %vm471, %v2319, 0.0
    %2323 = vadd.xlane.f32.xlu0 %v2322
    %v2324 = vpop.xlane.xlu0 %2323
    %v2325 = vsel %vm471, %v2321, 0.0
    %2326 = vadd.xlane.f32.xlu0 %v2325
    %v2327 = vpop.xlane.xlu0 %2326
    %v2328 = vrcp.pop %v2324
    %v2329 = vrcp.pop %v2327
    %v2330 = vmul.f32 %v2319, %v2328
    %v2331 = vmul.f32 %v2321, %v2329
    %v2332 = vpack.c.bf16 %v2331, %v2330
    %2334 = vrot.lane.b32.xlu0 %v2134, 96
    %v2335 = vpop.permute.xlu0 %2334
    %v2338 = vsel %vm471, %v2332, 0
    %2340 = vmatprep.subr.bf16.mxu0 0
    %2341 = vmatpush1.bf16.msra.mxu0 0
    %2342 = vmatprep.subr.bf16.mxu0 0
    %2343 = vmatpush1.bf16.msra.mxu0 0
    %2344 = vmatprep.subr.bf16.mxu0 0
    %2345 = vmatpush1.bf16.msra.mxu0 0
    %2346 = vmatprep.subr.bf16.mxu0 0
    %2347 = vmatpush1.bf16.msra.mxu0 0
    %2348 = vmatprep.subr.bf16.mxu0 0
    %2349 = vmatpush1.bf16.msra.mxu0 0
    %2350 = vmatprep.subr.bf16.mxu0 0
    %2351 = vmatpush1.bf16.msra.mxu0 0
    %2352 = vmatprep.subr.bf16.mxu0 0
    %2353 = vmatpush1.bf16.msra.mxu0 0
    %2354 = vmatprep.subr.bf16.mxu0 0
    %2355 = vmatpush1.bf16.msra.mxu0 %v2335
    %2356 = vmatprep.subr.bf16.mxu0 0
    %2357 = vmatpush2.bf16.msra.mxu0 0
    %2358 = vmatprep.subr.bf16.mxu0 0
    %2359 = vmatpush2.bf16.msra.mxu0 0
    %2360 = vmatprep.subr.bf16.mxu0 0
    %2361 = vmatpush2.bf16.msra.mxu0 0
    %2362 = vmatprep.subr.bf16.mxu0 0
    %2363 = vmatpush2.bf16.msra.mxu0 0
    %2364 = vmatprep.subr.bf16.mxu0 0
    %2365 = vmatpush2.bf16.msra.mxu0 0
    %2366 = vmatprep.subr.bf16.mxu0 0
    %2367 = vmatpush2.bf16.msra.mxu0 0
    %2368 = vmatprep.subr.bf16.mxu0 0
    %2369 = vmatpush2.bf16.msra.mxu0 0
    %2370 = vmatprep.subr.bf16.mxu0 0
    %2371 = vmatpush2.bf16.msra.mxu0 0
    %2372 = vmatprep.mubr.bf16.mxu0 0
    %2373 = vmatmul.mubr.bf16.gmra.mxu0 %v2338
    %v2374 = vpop.f32.mrf.mxu0
    %v2375 = vadd.f32 0.0, %v2374
    %v2376 = vpop.f32.mrf.mxu0
    %v2377 = vpop.f32.mrf.mxu0
    %v2378 = vadd.f32 0.0, %v2377
    %v2379 = vpop.f32.mrf.mxu0
    %2380 = vdwg.mxu0
    %2381 = vrot.lane.b32.xlu0 %v2132, 64
    %v2382 = vpop.permute.xlu0 %2381
    %2383 = vrot.lane.b32.xlu0 %v2133, 64
    %v2384 = vpop.permute.xlu0 %2383
    %v2386 = vsel %vm419, %v2382, 0
    %v2389 = vsel %vm419, %v2384, 0
    %2391 = vmatprep.subr.bf16.mxu0 0
    %2392 = vmatpush1.bf16.xpose.msra.mxu0 0
    %2393 = vmatprep.subr.bf16.mxu0 0
    %2394 = vmatpush1.bf16.xpose.msra.mxu0 0
    %2395 = vmatprep.subr.bf16.mxu0 0
    %2396 = vmatpush1.bf16.xpose.msra.mxu0 0
    %2397 = vmatprep.subr.bf16.mxu0 0
    %2398 = vmatpush1.bf16.xpose.msra.mxu0 0
    %2399 = vmatprep.subr.bf16.mxu0 0
    %2400 = vmatpush1.bf16.xpose.msra.mxu0 0
    %2401 = vmatprep.subr.bf16.mxu0 0
    %2402 = vmatpush1.bf16.xpose.msra.mxu0 0
    %2403 = vmatprep.subr.bf16.mxu0 0
    %2404 = vmatpush1.bf16.xpose.msra.mxu0 0
    %2405 = vmatprep.subr.bf16.mxu0 0
    %2406 = vmatpush1.bf16.xpose.msra.mxu0 %v2389
    %2407 = vmatprep.subr.bf16.mxu0 0
    %2408 = vmatpush2.bf16.xpose.msra.mxu0 0
    %2409 = vmatprep.subr.bf16.mxu0 0
    %2410 = vmatpush2.bf16.xpose.msra.mxu0 0
    %2411 = vmatprep.subr.bf16.mxu0 0
    %2412 = vmatpush2.bf16.xpose.msra.mxu0 0
    %2413 = vmatprep.subr.bf16.mxu0 0
    %2414 = vmatpush2.bf16.xpose.msra.mxu0 0
    %2415 = vmatprep.subr.bf16.mxu0 0
    %2416 = vmatpush2.bf16.xpose.msra.mxu0 0
    %2417 = vmatprep.subr.bf16.mxu0 0
    %2418 = vmatpush2.bf16.xpose.msra.mxu0 0
    %2419 = vmatprep.subr.bf16.mxu0 0
    %2420 = vmatpush2.bf16.xpose.msra.mxu0 0
    %2421 = vmatprep.subr.bf16.mxu0 0
    %2422 = vmatpush2.bf16.xpose.msra.mxu0 0
    %2423 = vmatprep.mubr.bf16.mxu0 0
    %2424 = vmatmul.mubr.bf16.gmra.mxu0 %v2386
    %v2425 = vpop.f32.mrf.mxu0
    %v2426 = vadd.f32 0.0, %v2425
    %v2427 = vpop.f32.mrf.mxu0
    %v2428 = vpop.f32.mrf.mxu0
    %v2429 = vadd.f32 0.0, %v2428
    %v2430 = vpop.f32.mrf.mxu0
    %2431 = vdwg.mxu0
    %v2432 = vmul.f32 %v2426, 0.17677669
    %v2433 = vmul.f32 %v2429, 0.17677669
    %v2434 = vadd.f32 %v2432, %v152
    %v2435 = vadd.f32 %v2433, %v153
    %v2436 = vsel %vm471, %v2434, -inf
    %2437 = vmax.xlane.f32.xlu0 %v2436
    %v2438 = vpop.xlane.xlu0 %2437
    %v2439 = vsel %vm471, %v2435, -inf
    %2440 = vmax.xlane.f32.xlu0 %v2439
    %v2441 = vpop.xlane.xlu0 %2440
    %v2442 = vsub.f32 %v2434, %v2438
    %v2443 = vsub.f32 %v2435, %v2441
    %v2444 = vmul.f32 %v2442, 1.442695
    %v2445 = vpow.pop %v2444
    %v2446 = vmul.f32 %v2443, 1.442695
    %v2447 = vpow.pop %v2446
    %v2448 = vsel %vm471, %v2445, 0.0
    %2449 = vadd.xlane.f32.xlu0 %v2448
    %v2450 = vpop.xlane.xlu0 %2449
    %v2451 = vsel %vm471, %v2447, 0.0
    %2452 = vadd.xlane.f32.xlu0 %v2451
    %v2453 = vpop.xlane.xlu0 %2452
    %v2454 = vrcp.pop %v2450
    %v2455 = vrcp.pop %v2453
    %v2456 = vmul.f32 %v2445, %v2454
    %v2457 = vmul.f32 %v2447, %v2455
    %v2458 = vpack.c.bf16 %v2457, %v2456
    %2459 = vrot.lane.b32.xlu0 %v2134, 64
    %v2460 = vpop.permute.xlu0 %2459
    %v2463 = vsel %vm471, %v2458, 0
    %2465 = vmatprep.subr.bf16.mxu0 0
    %2466 = vmatpush1.bf16.msra.mxu0 0
    %2467 = vmatprep.subr.bf16.mxu0 0
    %2468 = vmatpush1.bf16.msra.mxu0 0
    %2469 = vmatprep.subr.bf16.mxu0 0
    %2470 = vmatpush1.bf16.msra.mxu0 0
    %2471 = vmatprep.subr.bf16.mxu0 0
    %2472 = vmatpush1.bf16.msra.mxu0 0
    %2473 = vmatprep.subr.bf16.mxu0 0
    %2474 = vmatpush1.bf16.msra.mxu0 0
    %2475 = vmatprep.subr.bf16.mxu0 0
    %2476 = vmatpush1.bf16.msra.mxu0 0
    %2477 = vmatprep.subr.bf16.mxu0 0
    %2478 = vmatpush1.bf16.msra.mxu0 0
    %2479 = vmatprep.subr.bf16.mxu0 0
    %2480 = vmatpush1.bf16.msra.mxu0 %v2460
    %2481 = vmatprep.subr.bf16.mxu0 0
    %2482 = vmatpush2.bf16.msra.mxu0 0
    %2483 = vmatprep.subr.bf16.mxu0 0
    %2484 = vmatpush2.bf16.msra.mxu0 0
    %2485 = vmatprep.subr.bf16.mxu0 0
    %2486 = vmatpush2.bf16.msra.mxu0 0
    %2487 = vmatprep.subr.bf16.mxu0 0
    %2488 = vmatpush2.bf16.msra.mxu0 0
    %2489 = vmatprep.subr.bf16.mxu0 0
    %2490 = vmatpush2.bf16.msra.mxu0 0
    %2491 = vmatprep.subr.bf16.mxu0 0
    %2492 = vmatpush2.bf16.msra.mxu0 0
    %2493 = vmatprep.subr.bf16.mxu0 0
    %2494 = vmatpush2.bf16.msra.mxu0 0
    %2495 = vmatprep.subr.bf16.mxu0 0
    %2496 = vmatpush2.bf16.msra.mxu0 0
    %2497 = vmatprep.mubr.bf16.mxu0 0
    %2498 = vmatmul.mubr.bf16.gmra.mxu0 %v2463
    %v2499 = vpop.f32.mrf.mxu0
    %v2500 = vadd.f32 0.0, %v2499
    %v2501 = vpop.f32.mrf.mxu0
    %v2502 = vpop.f32.mrf.mxu0
    %v2503 = vadd.f32 0.0, %v2502
    %v2504 = vpop.f32.mrf.mxu0
    %2505 = vdwg.mxu0
    %2506 = vrot.lane.b32.xlu0 %v2132, 32
    %v2507 = vpop.permute.xlu0 %2506
    %2508 = vrot.lane.b32.xlu0 %v2133, 32
    %v2509 = vpop.permute.xlu0 %2508
    %v2511 = vsel %vm419, %v2507, 0
    %v2514 = vsel %vm419, %v2509, 0
    %2516 = vmatprep.subr.bf16.mxu0 0
    %2517 = vmatpush1.bf16.xpose.msra.mxu0 0
    %2518 = vmatprep.subr.bf16.mxu0 0
    %2519 = vmatpush1.bf16.xpose.msra.mxu0 0
    %2520 = vmatprep.subr.bf16.mxu0 0
    %2521 = vmatpush1.bf16.xpose.msra.mxu0 0
    %2522 = vmatprep.subr.bf16.mxu0 0
    %2523 = vmatpush1.bf16.xpose.msra.mxu0 0
    %2524 = vmatprep.subr.bf16.mxu0 0
    %2525 = vmatpush1.bf16.xpose.msra.mxu0 0
    %2526 = vmatprep.subr.bf16.mxu0 0
    %2527 = vmatpush1.bf16.xpose.msra.mxu0 0
    %2528 = vmatprep.subr.bf16.mxu0 0
    %2529 = vmatpush1.bf16.xpose.msra.mxu0 0
    %2530 = vmatprep.subr.bf16.mxu0 0
    %2531 = vmatpush1.bf16.xpose.msra.mxu0 %v2514
    %2532 = vmatprep.subr.bf16.mxu0 0
    %2533 = vmatpush2.bf16.xpose.msra.mxu0 0
    %2534 = vmatprep.subr.bf16.mxu0 0
    %2535 = vmatpush2.bf16.xpose.msra.mxu0 0
    %2536 = vmatprep.subr.bf16.mxu0 0
    %2537 = vmatpush2.bf16.xpose.msra.mxu0 0
    %2538 = vmatprep.subr.bf16.mxu0 0
    %2539 = vmatpush2.bf16.xpose.msra.mxu0 0
    %2540 = vmatprep.subr.bf16.mxu0 0
    %2541 = vmatpush2.bf16.xpose.msra.mxu0 0
    %2542 = vmatprep.subr.bf16.mxu0 0
    %2543 = vmatpush2.bf16.xpose.msra.mxu0 0
    %2544 = vmatprep.subr.bf16.mxu0 0
    %2545 = vmatpush2.bf16.xpose.msra.mxu0 0
    %2546 = vmatprep.subr.bf16.mxu0 0
    %2547 = vmatpush2.bf16.xpose.msra.mxu0 0
    %2548 = vmatprep.mubr.bf16.mxu0 0
    %2549 = vmatmul.mubr.bf16.gmra.mxu0 %v2511
    %v2550 = vpop.f32.mrf.mxu0
    %v2551 = vadd.f32 0.0, %v2550
    %v2552 = vpop.f32.mrf.mxu0
    %v2553 = vpop.f32.mrf.mxu0
    %v2554 = vadd.f32 0.0, %v2553
    %v2555 = vpop.f32.mrf.mxu0
    %2556 = vdwg.mxu0
    %v2557 = vmul.f32 %v2551, 0.17677669
    %v2558 = vmul.f32 %v2554, 0.17677669
    %v2559 = vadd.f32 %v2557, %v152
    %v2560 = vadd.f32 %v2558, %v153
    %v2561 = vsel %vm471, %v2559, -inf
    %2562 = vmax.xlane.f32.xlu0 %v2561
    %v2563 = vpop.xlane.xlu0 %2562
    %v2564 = vsel %vm471, %v2560, -inf
    %2565 = vmax.xlane.f32.xlu0 %v2564
    %v2566 = vpop.xlane.xlu0 %2565
    %v2567 = vsub.f32 %v2559, %v2563
    %v2568 = vsub.f32 %v2560, %v2566
    %v2569 = vmul.f32 %v2567, 1.442695
    %v2570 = vpow.pop %v2569
    %v2571 = vmul.f32 %v2568, 1.442695
    %v2572 = vpow.pop %v2571
    %v2573 = vsel %vm471, %v2570, 0.0
    %2574 = vadd.xlane.f32.xlu0 %v2573
    %v2575 = vpop.xlane.xlu0 %2574
    %v2576 = vsel %vm471, %v2572, 0.0
    %2577 = vadd.xlane.f32.xlu0 %v2576
    %v2578 = vpop.xlane.xlu0 %2577
    %v2579 = vrcp.pop %v2575
    %v2580 = vrcp.pop %v2578
    %v2581 = vmul.f32 %v2570, %v2579
    %v2582 = vmul.f32 %v2572, %v2580
    %v2583 = vpack.c.bf16 %v2582, %v2581
    %2584 = vrot.lane.b32.xlu0 %v2134, 32
    %v2585 = vpop.permute.xlu0 %2584
    %v2588 = vsel %vm471, %v2583, 0
    %2590 = vmatprep.subr.bf16.mxu0 0
    %2591 = vmatpush1.bf16.msra.mxu0 0
    %2592 = vmatprep.subr.bf16.mxu0 0
    %2593 = vmatpush1.bf16.msra.mxu0 0
    %2594 = vmatprep.subr.bf16.mxu0 0
    %2595 = vmatpush1.bf16.msra.mxu0 0
    %2596 = vmatprep.subr.bf16.mxu0 0
    %2597 = vmatpush1.bf16.msra.mxu0 0
    %2598 = vmatprep.subr.bf16.mxu0 0
    %2599 = vmatpush1.bf16.msra.mxu0 0
    %2600 = vmatprep.subr.bf16.mxu0 0
    %2601 = vmatpush1.bf16.msra.mxu0 0
    %2602 = vmatprep.subr.bf16.mxu0 0
    %2603 = vmatpush1.bf16.msra.mxu0 0
    %2604 = vmatprep.subr.bf16.mxu0 0
    %2605 = vmatpush1.bf16.msra.mxu0 %v2585
    %2606 = vmatprep.subr.bf16.mxu0 0
    %2607 = vmatpush2.bf16.msra.mxu0 0
    %2608 = vmatprep.subr.bf16.mxu0 0
    %2609 = vmatpush2.bf16.msra.mxu0 0
    %2610 = vmatprep.subr.bf16.mxu0 0
    %2611 = vmatpush2.bf16.msra.mxu0 0
    %2612 = vmatprep.subr.bf16.mxu0 0
    %2613 = vmatpush2.bf16.msra.mxu0 0
    %2614 = vmatprep.subr.bf16.mxu0 0
    %2615 = vmatpush2.bf16.msra.mxu0 0
    %2616 = vmatprep.subr.bf16.mxu0 0
    %2617 = vmatpush2.bf16.msra.mxu0 0
    %2618 = vmatprep.subr.bf16.mxu0 0
    %2619 = vmatpush2.bf16.msra.mxu0 0
    %2620 = vmatprep.subr.bf16.mxu0 0
    %2621 = vmatpush2.bf16.msra.mxu0 0
    %2622 = vmatprep.mubr.bf16.mxu0 0
    %2623 = vmatmul.mubr.bf16.gmra.mxu0 %v2588
    %v2624 = vpop.f32.mrf.mxu0
    %v2625 = vadd.f32 0.0, %v2624
    %v2626 = vpop.f32.mrf.mxu0
    %v2627 = vpop.f32.mrf.mxu0
    %v2628 = vadd.f32 0.0, %v2627
    %v2629 = vpop.f32.mrf.mxu0
    %2630 = vdwg.mxu0
    %2633 = vrot.lane.b32.xlu0 %v2375, 32
    %v2634 = vpop.permute.xlu0 %2633
    %2635 = vrot.lane.b32.xlu0 %v2378, 32
    %v2636 = vpop.permute.xlu0 %2635
    %2641 = vrot.lane.b32.xlu0 %v2500, 64
    %v2642 = vpop.permute.xlu0 %2641
    %2643 = vrot.lane.b32.xlu0 %v2503, 64
    %v2644 = vpop.permute.xlu0 %2643
    %2649 = vrot.lane.b32.xlu0 %v2625, 96
    %v2650 = vpop.permute.xlu0 %2649
    %2651 = vrot.lane.b32.xlu0 %v2628, 96
    %v2652 = vpop.permute.xlu0 %2651
    %v2655 = vsel %vm419, %v2247, %v2634
    %v2656 = vsel %vm419, %v2250, %v2636
    %v2657 = vsel %vm943, %v2655, %v2642
    %v2658 = vsel %vm943, %v2656, %v2644
    %v2659 = vsel %vm946, %v2657, %v2650
    %v2660 = vsel %vm946, %v2658, %v2652
    %v2661 = vpack.c.bf16 %v2660, %v2659
    %s2662 = scalar_lea.vmem %s6, 64
    %v2663 = vld [vmem:[%s2662] sm:$0xf]
    %v2664 = vld [vmem:[%s2662 + $0x4] sm:$0xf]
    %v2665 = vld [vmem:[%s2662 + $0x8] sm:$0xf]
    %v2666 = vld [vmem:[%s2662 + $0xc] sm:$0xf]
    %v2667 = vld [vmem:[%s2662 + $0x10] sm:$0xf]
    %v2668 = vld [vmem:[%s2662 + $0x14] sm:$0xf]
    %v2669 = vld [vmem:[%s2662 + $0x18] sm:$0xf]
    %v2670 = vld [vmem:[%s2662 + $0x1c] sm:$0xf]
    %v2671 = vld [vmem:[%s2662 + $0x20] sm:$0xf]
    %v2672 = vld [vmem:[%s2662 + $0x24] sm:$0xf]
    %v2673 = vld [vmem:[%s2662 + $0x28] sm:$0xf]
    %v2674 = vld [vmem:[%s2662 + $0x2c] sm:$0xf]
    %v2675 = vld [vmem:[%s2662 + $0x30] sm:$0xf]
    %v2676 = vld [vmem:[%s2662 + $0x34] sm:$0xf]
    %v2677 = vld [vmem:[%s2662 + $0x38] sm:$0xf]
    %v2678 = vld [vmem:[%s2662 + $0x3c] sm:$0xf]
    %s2679 = scalar_lea.vmem %s7, 1
    %v2680 = vld [vmem:[%s2679] sm:$0x1]
    %v2682 = vlaneseq
    %v2683 = vshrl.u32 %v2682, 7
    %v2684 = vsub.s32 0, %v2683
    %v2685 = vrot.slane %v2680, %v2684
    %v2703 = vunpack.c.l.b16 %v2663
    %v2704 = vunpack.c.l.b16 %v2664
    %v2705 = vunpack.c.l.b16 %v2665
    %v2706 = vunpack.c.l.b16 %v2666
    %v2707 = vunpack.c.l.b16 %v2667
    %v2708 = vunpack.c.l.b16 %v2668
    %v2709 = vunpack.c.l.b16 %v2669
    %v2710 = vunpack.c.l.b16 %v2670
    %v2711 = vunpack.c.l.b16 %v2671
    %v2712 = vunpack.c.l.b16 %v2672
    %v2713 = vunpack.c.l.b16 %v2673
    %v2714 = vunpack.c.l.b16 %v2674
    %v2715 = vunpack.c.l.b16 %v2675
    %v2716 = vunpack.c.l.b16 %v2676
    %v2717 = vunpack.c.l.b16 %v2677
    %v2718 = vunpack.c.l.b16 %v2678
    %v2719 = vpack.c.b16 %v2704, %v2703
    %v2720 = vpack.c.b16 %v2706, %v2705
    %v2721 = vpack.c.b16 %v2708, %v2707
    %v2722 = vpack.c.b16 %v2710, %v2709
    %v2723 = vpack.c.b16 %v2712, %v2711
    %v2724 = vpack.c.b16 %v2714, %v2713
    %v2725 = vpack.c.b16 %v2716, %v2715
    %v2726 = vpack.c.b16 %v2718, %v2717
    %2735 = vmatprep.subr.bf16.mxu0 0
    %2736 = vmatpush1.bf16.msra.mxu0 %v2726
    %2737 = vmatprep.subr.bf16.mxu0 0
    %2738 = vmatpush1.bf16.msra.mxu0 %v2725
    %2739 = vmatprep.subr.bf16.mxu0 0
    %2740 = vmatpush1.bf16.msra.mxu0 %v2724
    %2741 = vmatprep.subr.bf16.mxu0 0
    %2742 = vmatpush1.bf16.msra.mxu0 %v2723
    %2743 = vmatprep.subr.bf16.mxu0 0
    %2744 = vmatpush1.bf16.msra.mxu0 %v2722
    %2745 = vmatprep.subr.bf16.mxu0 0
    %2746 = vmatpush1.bf16.msra.mxu0 %v2721
    %2747 = vmatprep.subr.bf16.mxu0 0
    %2748 = vmatpush1.bf16.msra.mxu0 %v2720
    %2749 = vmatprep.subr.bf16.mxu0 0
    %2750 = vmatpush1.bf16.msra.mxu0 %v2719
    %2751 = vmatprep.subr.bf16.mxu0 0
    %2752 = vmatpush2.bf16.msra.mxu0 0
    %2753 = vmatprep.subr.bf16.mxu0 0
    %2754 = vmatpush2.bf16.msra.mxu0 0
    %2755 = vmatprep.subr.bf16.mxu0 0
    %2756 = vmatpush2.bf16.msra.mxu0 0
    %2757 = vmatprep.subr.bf16.mxu0 0
    %2758 = vmatpush2.bf16.msra.mxu0 0
    %2759 = vmatprep.subr.bf16.mxu0 0
    %2760 = vmatpush2.bf16.msra.mxu0 0
    %2761 = vmatprep.subr.bf16.mxu0 0
    %2762 = vmatpush2.bf16.msra.mxu0 0
    %2763 = vmatprep.subr.bf16.mxu0 0
    %2764 = vmatpush2.bf16.msra.mxu0 0
    %2765 = vmatprep.subr.bf16.mxu0 0
    %2766 = vmatpush2.bf16.msra.mxu0 0
    %2767 = vmatprep.mubr.bf16.mxu0 0
    %2768 = vmatmul.mubr.bf16.gmra.mxu0 %v2661
    %v2769 = vpop.f32.mrf.mxu0
    %v2770 = vadd.f32 %v2685, %v2769
    %v2771 = vpop.f32.mrf.mxu0
    %v2772 = vpop.f32.mrf.mxu0
    %v2773 = vadd.f32 %v2685, %v2772
    %v2774 = vpop.f32.mrf.mxu0
    %2775 = vdwg.mxu0
    %v2776 = vadd.f32 %v2770, %v1866
    %v2777 = vadd.f32 %v2773, %v1867
    %s2778 = scalar_lea.vmem %s8, 1
    %v2779 = vld [vmem:[%s2778] sm:$0x1]
    %s2780 = scalar_lea.vmem %s9, 1
    %v2781 = vld [vmem:[%s2780] sm:$0x1]
    %2782 = vadd.xlane.f32.xlu0 %v2776
    %v2783 = vpop.xlane.xlu0 %2782
    %2784 = vadd.xlane.f32.xlu0 %v2777
    %v2785 = vpop.xlane.xlu0 %2784
    %v2786 = vmul.f32 %v2783, %v117
    %v2787 = vmul.f32 %v2785, %v117
    %v2788 = vsub.f32 %v2776, %v2786
    %v2789 = vsub.f32 %v2777, %v2787
    %v2790 = vmul.f32 %v2788, %v2788
    %v2791 = vmul.f32 %v2789, %v2789
    %2792 = vadd.xlane.f32.xlu0 %v2790
    %v2793 = vpop.xlane.xlu0 %2792
    %2794 = vadd.xlane.f32.xlu0 %v2791
    %v2795 = vpop.xlane.xlu0 %2794
    %v2796 = vmul.f32 %v2793, %v117
    %v2797 = vmul.f32 %v2795, %v117
    %v2798 = vadd.f32 %v2796, 1e-12
    %v2799 = vadd.f32 %v2797, 1e-12
    %v2800 = vrsqrt.pop %v2798
    %v2801 = vrsqrt.pop %v2799
    %v2802 = vmul.f32 %v2788, %v2800
    %v2803 = vmul.f32 %v2789, %v2801
    %v2805 = vlaneseq
    %v2806 = vshrl.u32 %v2805, 7
    %v2807 = vsub.s32 0, %v2806
    %v2808 = vrot.slane %v2779, %v2807
    %v2810 = vmul.f32 %v2802, %v2808
    %v2811 = vmul.f32 %v2803, %v2808
    %v2813 = vlaneseq
    %v2814 = vshrl.u32 %v2813, 7
    %v2815 = vsub.s32 0, %v2814
    %v2816 = vrot.slane %v2781, %v2815
    %v2818 = vadd.f32 %v2810, %v2816
    %v2819 = vadd.f32 %v2811, %v2816
    %v2820 = vpack.c.bf16 %v2819, %v2818
    %s2821 = scalar_lea.vmem [#allocation5], 256
    %v2822 = vld [vmem:[%s2821] sm:$0xff]
    %v2823 = vld [vmem:[%s2821 + $0x8] sm:$0xff]
    %v2824 = vld [vmem:[%s2821 + $0x10] sm:$0xff]
    %v2825 = vld [vmem:[%s2821 + $0x18] sm:$0xff]
    %v2826 = vld [vmem:[%s2821 + $0x20] sm:$0xff]
    %v2827 = vld [vmem:[%s2821 + $0x28] sm:$0xff]
    %v2828 = vld [vmem:[%s2821 + $0x30] sm:$0xff]
    %v2829 = vld [vmem:[%s2821 + $0x38] sm:$0xff]
    %v2830 = vld [vmem:[%s2821 + $0x40] sm:$0xff]
    %v2831 = vld [vmem:[%s2821 + $0x48] sm:$0xff]
    %v2832 = vld [vmem:[%s2821 + $0x50] sm:$0xff]
    %v2833 = vld [vmem:[%s2821 + $0x58] sm:$0xff]
    %v2834 = vld [vmem:[%s2821 + $0x60] sm:$0xff]
    %v2835 = vld [vmem:[%s2821 + $0x68] sm:$0xff]
    %v2836 = vld [vmem:[%s2821 + $0x70] sm:$0xff]
    %v2837 = vld [vmem:[%s2821 + $0x78] sm:$0xff]
    %v2838 = vld [vmem:[%s2821 + $0x80] sm:$0xff]
    %v2839 = vld [vmem:[%s2821 + $0x88] sm:$0xff]
    %v2840 = vld [vmem:[%s2821 + $0x90] sm:$0xff]
    %v2841 = vld [vmem:[%s2821 + $0x98] sm:$0xff]
    %v2842 = vld [vmem:[%s2821 + $0xa0] sm:$0xff]
    %v2843 = vld [vmem:[%s2821 + $0xa8] sm:$0xff]
    %v2844 = vld [vmem:[%s2821 + $0xb0] sm:$0xff]
    %v2845 = vld [vmem:[%s2821 + $0xb8] sm:$0xff]
    %v2846 = vld [vmem:[%s2821 + $0xc0] sm:$0xff]
    %v2847 = vld [vmem:[%s2821 + $0xc8] sm:$0xff]
    %v2848 = vld [vmem:[%s2821 + $0xd0] sm:$0xff]
    %v2849 = vld [vmem:[%s2821 + $0xd8] sm:$0xff]
    %v2850 = vld [vmem:[%s2821 + $0xe0] sm:$0xff]
    %v2851 = vld [vmem:[%s2821 + $0xe8] sm:$0xff]
    %v2852 = vld [vmem:[%s2821 + $0xf0] sm:$0xff]
    %v2853 = vld [vmem:[%s2821 + $0xf8] sm:$0xff]
    %s2854 = scalar_lea.vmem %s11, 4
    %v2855 = vld [vmem:[%s2854] sm:$0xf]
    %v2857 = vlaneseq
    %v2858 = vshrl.u32 %v2857, 7
    %v2859 = vsub.s32 0, %v2858
    %v2860 = vrot.slane %v2855, %v2859
    %v2861 = vlaneseq
    %v2862 = vshrl.u32 %v2861, 7
    %v2863 = vsub.s32 1, %v2862
    %v2864 = vrot.slane %v2855, %v2863
    %v2865 = vlaneseq
    %v2866 = vshrl.u32 %v2865, 7
    %v2867 = vsub.s32 2, %v2866
    %v2868 = vrot.slane %v2855, %v2867
    %v2869 = vlaneseq
    %v2870 = vshrl.u32 %v2869, 7
    %v2871 = vsub.s32 3, %v2870
    %v2872 = vrot.slane %v2855, %v2871
    %v2909 = vunpack.c.l.b16 %v2822
    %v2910 = vunpack.c.h.b16 %v2822
    %v2911 = vunpack.c.l.b16 %v2823
    %v2912 = vunpack.c.h.b16 %v2823
    %v2913 = vunpack.c.l.b16 %v2824
    %v2914 = vunpack.c.h.b16 %v2824
    %v2915 = vunpack.c.l.b16 %v2825
    %v2916 = vunpack.c.h.b16 %v2825
    %v2917 = vunpack.c.l.b16 %v2826
    %v2918 = vunpack.c.h.b16 %v2826
    %v2919 = vunpack.c.l.b16 %v2827
    %v2920 = vunpack.c.h.b16 %v2827
    %v2921 = vunpack.c.l.b16 %v2828
    %v2922 = vunpack.c.h.b16 %v2828
    %v2923 = vunpack.c.l.b16 %v2829
    %v2924 = vunpack.c.h.b16 %v2829
    %v2925 = vunpack.c.l.b16 %v2830
    %v2926 = vunpack.c.h.b16 %v2830
    %v2927 = vunpack.c.l.b16 %v2831
    %v2928 = vunpack.c.h.b16 %v2831
    %v2929 = vunpack.c.l.b16 %v2832
    %v2930 = vunpack.c.h.b16 %v2832
    %v2931 = vunpack.c.l.b16 %v2833
    %v2932 = vunpack.c.h.b16 %v2833
    %v2933 = vunpack.c.l.b16 %v2834
    %v2934 = vunpack.c.h.b16 %v2834
    %v2935 = vunpack.c.l.b16 %v2835
    %v2936 = vunpack.c.h.b16 %v2835
    %v2937 = vunpack.c.l.b16 %v2836
    %v2938 = vunpack.c.h.b16 %v2836
    %v2939 = vunpack.c.l.b16 %v2837
    %v2940 = vunpack.c.h.b16 %v2837
    %v2941 = vunpack.c.l.b16 %v2838
    %v2942 = vunpack.c.h.b16 %v2838
    %v2943 = vunpack.c.l.b16 %v2839
    %v2944 = vunpack.c.h.b16 %v2839
    %v2945 = vunpack.c.l.b16 %v2840
    %v2946 = vunpack.c.h.b16 %v2840
    %v2947 = vunpack.c.l.b16 %v2841
    %v2948 = vunpack.c.h.b16 %v2841
    %v2949 = vunpack.c.l.b16 %v2842
    %v2950 = vunpack.c.h.b16 %v2842
    %v2951 = vunpack.c.l.b16 %v2843
    %v2952 = vunpack.c.h.b16 %v2843
    %v2953 = vunpack.c.l.b16 %v2844
    %v2954 = vunpack.c.h.b16 %v2844
    %v2955 = vunpack.c.l.b16 %v2845
    %v2956 = vunpack.c.h.b16 %v2845
    %v2957 = vunpack.c.l.b16 %v2846
    %v2958 = vunpack.c.h.b16 %v2846
    %v2959 = vunpack.c.l.b16 %v2847
    %v2960 = vunpack.c.h.b16 %v2847
    %v2961 = vunpack.c.l.b16 %v2848
    %v2962 = vunpack.c.h.b16 %v2848
    %v2963 = vunpack.c.l.b16 %v2849
    %v2964 = vunpack.c.h.b16 %v2849
    %v2965 = vunpack.c.l.b16 %v2850
    %v2966 = vunpack.c.h.b16 %v2850
    %v2967 = vunpack.c.l.b16 %v2851
    %v2968 = vunpack.c.h.b16 %v2851
    %v2969 = vunpack.c.l.b16 %v2852
    %v2970 = vunpack.c.h.b16 %v2852
    %v2971 = vunpack.c.l.b16 %v2853
    %v2972 = vunpack.c.h.b16 %v2853
    %v2973 = vpack.c.b16 %v2913, %v2909
    %v2974 = vpack.c.b16 %v2914, %v2910
    %v2975 = vpack.c.b16 %v2915, %v2911
    %v2976 = vpack.c.b16 %v2916, %v2912
    %v2977 = vpack.c.b16 %v2921, %v2917
    %v2978 = vpack.c.b16 %v2922, %v2918
    %v2979 = vpack.c.b16 %v2923, %v2919
    %v2980 = vpack.c.b16 %v2924, %v2920
    %v2981 = vpack.c.b16 %v2929, %v2925
    %v2982 = vpack.c.b16 %v2930, %v2926
    %v2983 = vpack.c.b16 %v2931, %v2927
    %v2984 = vpack.c.b16 %v2932, %v2928
    %v2985 = vpack.c.b16 %v2937, %v2933
    %v2986 = vpack.c.b16 %v2938, %v2934
    %v2987 = vpack.c.b16 %v2939, %v2935
    %v2988 = vpack.c.b16 %v2940, %v2936
    %v2989 = vpack.c.b16 %v2945, %v2941
    %v2990 = vpack.c.b16 %v2946, %v2942
    %v2991 = vpack.c.b16 %v2947, %v2943
    %v2992 = vpack.c.b16 %v2948, %v2944
    %v2993 = vpack.c.b16 %v2953, %v2949
    %v2994 = vpack.c.b16 %v2954, %v2950
    %v2995 = vpack.c.b16 %v2955, %v2951
    %v2996 = vpack.c.b16 %v2956, %v2952
    %v2997 = vpack.c.b16 %v2961, %v2957
    %v2998 = vpack.c.b16 %v2962, %v2958
    %v2999 = vpack.c.b16 %v2963, %v2959
    %v3000 = vpack.c.b16 %v2964, %v2960
    %v3001 = vpack.c.b16 %v2969, %v2965
    %v3002 = vpack.c.b16 %v2970, %v2966
    %v3003 = vpack.c.b16 %v2971, %v2967
    %v3004 = vpack.c.b16 %v2972, %v2968
    %3037 = vmatprep.subr.bf16.mxu0 %v3002
    %3038 = vmatpush1.bf16.msra.mxu0 %v3001
    %3039 = vmatprep.subr.bf16.mxu0 %v2998
    %3040 = vmatpush1.bf16.msra.mxu0 %v2997
    %3041 = vmatprep.subr.bf16.mxu0 %v2994
    %3042 = vmatpush1.bf16.msra.mxu0 %v2993
    %3043 = vmatprep.subr.bf16.mxu0 %v2990
    %3044 = vmatpush1.bf16.msra.mxu0 %v2989
    %3045 = vmatprep.subr.bf16.mxu0 %v2986
    %3046 = vmatpush1.bf16.msra.mxu0 %v2985
    %3047 = vmatprep.subr.bf16.mxu0 %v2982
    %3048 = vmatpush1.bf16.msra.mxu0 %v2981
    %3049 = vmatprep.subr.bf16.mxu0 %v2978
    %3050 = vmatpush1.bf16.msra.mxu0 %v2977
    %3051 = vmatprep.subr.bf16.mxu0 %v2974
    %3052 = vmatpush1.bf16.msra.mxu0 %v2973
    %3053 = vmatprep.subr.bf16.mxu0 0
    %3054 = vmatpush2.bf16.msra.mxu0 0
    %3055 = vmatprep.subr.bf16.mxu0 0
    %3056 = vmatpush2.bf16.msra.mxu0 0
    %3057 = vmatprep.subr.bf16.mxu0 0
    %3058 = vmatpush2.bf16.msra.mxu0 0
    %3059 = vmatprep.subr.bf16.mxu0 0
    %3060 = vmatpush2.bf16.msra.mxu0 0
    %3061 = vmatprep.subr.bf16.mxu0 0
    %3062 = vmatpush2.bf16.msra.mxu0 0
    %3063 = vmatprep.subr.bf16.mxu0 0
    %3064 = vmatpush2.bf16.msra.mxu0 0
    %3065 = vmatprep.subr.bf16.mxu0 0
    %3066 = vmatpush2.bf16.msra.mxu0 0
    %3067 = vmatprep.subr.bf16.mxu0 0
    %3068 = vmatpush2.bf16.msra.mxu0 0
    %3069 = vmatprep.mubr.bf16.mxu0 0
    %3070 = vmatmul.mubr.bf16.gmra.mxu0 %v2820
    %v3071 = vpop.f32.mrf.mxu0
    %v3072 = vadd.f32 %v2860, %v3071
    %v3073 = vpop.f32.mrf.mxu0
    %v3074 = vadd.f32 %v2864, %v3073
    %v3075 = vpop.f32.mrf.mxu0
    %v3076 = vadd.f32 %v2860, %v3075
    %v3077 = vpop.f32.mrf.mxu0
    %v3078 = vadd.f32 %v2864, %v3077
    %3079 = vdwg.mxu0
    %3080 = vmatprep.subr.bf16.mxu0 %v3004
    %3081 = vmatpush1.bf16.msra.mxu0 %v3003
    %3082 = vmatprep.subr.bf16.mxu0 %v3000
    %3083 = vmatpush1.bf16.msra.mxu0 %v2999
    %3084 = vmatprep.subr.bf16.mxu0 %v2996
    %3085 = vmatpush1.bf16.msra.mxu0 %v2995
    %3086 = vmatprep.subr.bf16.mxu0 %v2992
    %3087 = vmatpush1.bf16.msra.mxu0 %v2991
    %3088 = vmatprep.subr.bf16.mxu0 %v2988
    %3089 = vmatpush1.bf16.msra.mxu0 %v2987
    %3090 = vmatprep.subr.bf16.mxu0 %v2984
    %3091 = vmatpush1.bf16.msra.mxu0 %v2983
    %3092 = vmatprep.subr.bf16.mxu0 %v2980
    %3093 = vmatpush1.bf16.msra.mxu0 %v2979
    %3094 = vmatprep.subr.bf16.mxu0 %v2976
    %3095 = vmatpush1.bf16.msra.mxu0 %v2975
    %3096 = vmatprep.subr.bf16.mxu0 0
    %3097 = vmatpush2.bf16.msra.mxu0 0
    %3098 = vmatprep.subr.bf16.mxu0 0
    %3099 = vmatpush2.bf16.msra.mxu0 0
    %3100 = vmatprep.subr.bf16.mxu0 0
    %3101 = vmatpush2.bf16.msra.mxu0 0
    %3102 = vmatprep.subr.bf16.mxu0 0
    %3103 = vmatpush2.bf16.msra.mxu0 0
    %3104 = vmatprep.subr.bf16.mxu0 0
    %3105 = vmatpush2.bf16.msra.mxu0 0
    %3106 = vmatprep.subr.bf16.mxu0 0
    %3107 = vmatpush2.bf16.msra.mxu0 0
    %3108 = vmatprep.subr.bf16.mxu0 0
    %3109 = vmatpush2.bf16.msra.mxu0 0
    %3110 = vmatprep.subr.bf16.mxu0 0
    %3111 = vmatpush2.bf16.msra.mxu0 0
    %3112 = vmatprep.mubr.bf16.mxu0 0
    %3113 = vmatmul.mubr.bf16.gmra.mxu0 %v2820
    %v3114 = vpop.f32.mrf.mxu0
    %v3115 = vadd.f32 %v2868, %v3114
    %v3116 = vpop.f32.mrf.mxu0
    %v3117 = vadd.f32 %v2872, %v3116
    %v3118 = vpop.f32.mrf.mxu0
    %v3119 = vadd.f32 %v2868, %v3118
    %v3120 = vpop.f32.mrf.mxu0
    %v3121 = vadd.f32 %v2872, %v3120
    %3122 = vdwg.mxu0
    %v3123 = vmul.f32 %v3072, %v3072
    %v3124 = vmul.f32 %v3074, %v3074
    %v3125 = vmul.f32 %v3115, %v3115
    %v3126 = vmul.f32 %v3117, %v3117
    %v3127 = vmul.f32 %v3076, %v3076
    %v3128 = vmul.f32 %v3078, %v3078
    %v3129 = vmul.f32 %v3119, %v3119
    %v3130 = vmul.f32 %v3121, %v3121
    %v3131 = vmul.f32 %v3072, %v3123
    %v3132 = vmul.f32 %v3074, %v3124
    %v3133 = vmul.f32 %v3115, %v3125
    %v3134 = vmul.f32 %v3117, %v3126
    %v3135 = vmul.f32 %v3076, %v3127
    %v3136 = vmul.f32 %v3078, %v3128
    %v3137 = vmul.f32 %v3119, %v3129
    %v3138 = vmul.f32 %v3121, %v3130
    %v3139 = vmul.f32 %v3131, 0.044715
    %v3140 = vmul.f32 %v3132, 0.044715
    %v3141 = vmul.f32 %v3133, 0.044715
    %v3142 = vmul.f32 %v3134, 0.044715
    %v3143 = vmul.f32 %v3135, 0.044715
    %v3144 = vmul.f32 %v3136, 0.044715
    %v3145 = vmul.f32 %v3137, 0.044715
    %v3146 = vmul.f32 %v3138, 0.044715
    %v3147 = vadd.f32 %v3072, %v3139
    %v3148 = vadd.f32 %v3074, %v3140
    %v3149 = vadd.f32 %v3115, %v3141
    %v3150 = vadd.f32 %v3117, %v3142
    %v3151 = vadd.f32 %v3076, %v3143
    %v3152 = vadd.f32 %v3078, %v3144
    %v3153 = vadd.f32 %v3119, %v3145
    %v3154 = vadd.f32 %v3121, %v3146
    %v3155 = vmul.f32 %v3147, 0.7978846
    %v3156 = vmul.f32 %v3148, 0.7978846
    %v3157 = vmul.f32 %v3149, 0.7978846
    %v3158 = vmul.f32 %v3150, 0.7978846
    %v3159 = vmul.f32 %v3151, 0.7978846
    %v3160 = vmul.f32 %v3152, 0.7978846
    %v3161 = vmul.f32 %v3153, 0.7978846
    %v3162 = vmul.f32 %v3154, 0.7978846
    %v3163 = vtanh.pop %v3155
    %v3164 = vtanh.pop %v3156
    %v3165 = vtanh.pop %v3157
    %v3166 = vtanh.pop %v3158
    %v3167 = vtanh.pop %v3159
    %v3168 = vtanh.pop %v3160
    %v3169 = vtanh.pop %v3161
    %v3170 = vtanh.pop %v3162
    %v3171 = vadd.f32 %v3163, 1.0
    %v3172 = vadd.f32 %v3164, 1.0
    %v3173 = vadd.f32 %v3165, 1.0
    %v3174 = vadd.f32 %v3166, 1.0
    %v3175 = vadd.f32 %v3167, 1.0
    %v3176 = vadd.f32 %v3168, 1.0
    %v3177 = vadd.f32 %v3169, 1.0
    %v3178 = vadd.f32 %v3170, 1.0
    %v3179 = vmul.f32 %v3171, 0.5
    %v3180 = vmul.f32 %v3172, 0.5
    %v3181 = vmul.f32 %v3173, 0.5
    %v3182 = vmul.f32 %v3174, 0.5
    %v3183 = vmul.f32 %v3175, 0.5
    %v3184 = vmul.f32 %v3176, 0.5
    %v3185 = vmul.f32 %v3177, 0.5
    %v3186 = vmul.f32 %v3178, 0.5
    %v3187 = vmul.f32 %v3072, %v3179
    %v3188 = vmul.f32 %v3074, %v3180
    %v3189 = vmul.f32 %v3115, %v3181
    %v3190 = vmul.f32 %v3117, %v3182
    %v3191 = vmul.f32 %v3076, %v3183
    %v3192 = vmul.f32 %v3078, %v3184
    %v3193 = vmul.f32 %v3119, %v3185
    %v3194 = vmul.f32 %v3121, %v3186
    %v3195 = vpack.c.bf16 %v3191, %v3187
    %v3196 = vpack.c.bf16 %v3192, %v3188
    %v3197 = vpack.c.bf16 %v3193, %v3189
    %v3198 = vpack.c.bf16 %v3194, %v3190
    %s3199 = scalar_lea.vmem [#allocation7], 256
    %v3200 = vld [vmem:[%s3199] sm:$0xf]
    %v3201 = vld [vmem:[%s3199 + $0x4] sm:$0xf]
    %v3202 = vld [vmem:[%s3199 + $0x8] sm:$0xf]
    %v3203 = vld [vmem:[%s3199 + $0xc] sm:$0xf]
    %v3204 = vld [vmem:[%s3199 + $0x10] sm:$0xf]
    %v3205 = vld [vmem:[%s3199 + $0x14] sm:$0xf]
    %v3206 = vld [vmem:[%s3199 + $0x18] sm:$0xf]
    %v3207 = vld [vmem:[%s3199 + $0x1c] sm:$0xf]
    %v3208 = vld [vmem:[%s3199 + $0x20] sm:$0xf]
    %v3209 = vld [vmem:[%s3199 + $0x24] sm:$0xf]
    %v3210 = vld [vmem:[%s3199 + $0x28] sm:$0xf]
    %v3211 = vld [vmem:[%s3199 + $0x2c] sm:$0xf]
    %v3212 = vld [vmem:[%s3199 + $0x30] sm:$0xf]
    %v3213 = vld [vmem:[%s3199 + $0x34] sm:$0xf]
    %v3214 = vld [vmem:[%s3199 + $0x38] sm:$0xf]
    %v3215 = vld [vmem:[%s3199 + $0x3c] sm:$0xf]
    %v3216 = vld [vmem:[%s3199 + $0x40] sm:$0xf]
    %v3217 = vld [vmem:[%s3199 + $0x44] sm:$0xf]
    %v3218 = vld [vmem:[%s3199 + $0x48] sm:$0xf]
    %v3219 = vld [vmem:[%s3199 + $0x4c] sm:$0xf]
    %v3220 = vld [vmem:[%s3199 + $0x50] sm:$0xf]
    %v3221 = vld [vmem:[%s3199 + $0x54] sm:$0xf]
    %v3222 = vld [vmem:[%s3199 + $0x58] sm:$0xf]
    %v3223 = vld [vmem:[%s3199 + $0x5c] sm:$0xf]
    %v3224 = vld [vmem:[%s3199 + $0x60] sm:$0xf]
    %v3225 = vld [vmem:[%s3199 + $0x64] sm:$0xf]
    %v3226 = vld [vmem:[%s3199 + $0x68] sm:$0xf]
    %v3227 = vld [vmem:[%s3199 + $0x6c] sm:$0xf]
    %v3228 = vld [vmem:[%s3199 + $0x70] sm:$0xf]
    %v3229 = vld [vmem:[%s3199 + $0x74] sm:$0xf]
    %v3230 = vld [vmem:[%s3199 + $0x78] sm:$0xf]
    %v3231 = vld [vmem:[%s3199 + $0x7c] sm:$0xf]
    %v3232 = vld [vmem:[%s3199 + $0x80] sm:$0xf]
    %v3233 = vld [vmem:[%s3199 + $0x84] sm:$0xf]
    %v3234 = vld [vmem:[%s3199 + $0x88] sm:$0xf]
    %v3235 = vld [vmem:[%s3199 + $0x8c] sm:$0xf]
    %v3236 = vld [vmem:[%s3199 + $0x90] sm:$0xf]
    %v3237 = vld [vmem:[%s3199 + $0x94] sm:$0xf]
    %v3238 = vld [vmem:[%s3199 + $0x98] sm:$0xf]
    %v3239 = vld [vmem:[%s3199 + $0x9c] sm:$0xf]
    %v3240 = vld [vmem:[%s3199 + $0xa0] sm:$0xf]
    %v3241 = vld [vmem:[%s3199 + $0xa4] sm:$0xf]
    %v3242 = vld [vmem:[%s3199 + $0xa8] sm:$0xf]
    %v3243 = vld [vmem:[%s3199 + $0xac] sm:$0xf]
    %v3244 = vld [vmem:[%s3199 + $0xb0] sm:$0xf]
    %v3245 = vld [vmem:[%s3199 + $0xb4] sm:$0xf]
    %v3246 = vld [vmem:[%s3199 + $0xb8] sm:$0xf]
    %v3247 = vld [vmem:[%s3199 + $0xbc] sm:$0xf]
    %v3248 = vld [vmem:[%s3199 + $0xc0] sm:$0xf]
    %v3249 = vld [vmem:[%s3199 + $0xc4] sm:$0xf]
    %v3250 = vld [vmem:[%s3199 + $0xc8] sm:$0xf]
    %v3251 = vld [vmem:[%s3199 + $0xcc] sm:$0xf]
    %v3252 = vld [vmem:[%s3199 + $0xd0] sm:$0xf]
    %v3253 = vld [vmem:[%s3199 + $0xd4] sm:$0xf]
    %v3254 = vld [vmem:[%s3199 + $0xd8] sm:$0xf]
    %v3255 = vld [vmem:[%s3199 + $0xdc] sm:$0xf]
    %v3256 = vld [vmem:[%s3199 + $0xe0] sm:$0xf]
    %v3257 = vld [vmem:[%s3199 + $0xe4] sm:$0xf]
    %v3258 = vld [vmem:[%s3199 + $0xe8] sm:$0xf]
    %v3259 = vld [vmem:[%s3199 + $0xec] sm:$0xf]
    %v3260 = vld [vmem:[%s3199 + $0xf0] sm:$0xf]
    %v3261 = vld [vmem:[%s3199 + $0xf4] sm:$0xf]
    %v3262 = vld [vmem:[%s3199 + $0xf8] sm:$0xf]
    %v3263 = vld [vmem:[%s3199 + $0xfc] sm:$0xf]
    %s3264 = scalar_lea.vmem %s13, 1
    %v3265 = vld [vmem:[%s3264] sm:$0x1]
    %v3267 = vlaneseq
    %v3268 = vshrl.u32 %v3267, 7
    %v3269 = vsub.s32 0, %v3268
    %v3270 = vrot.slane %v3265, %v3269
    %v3336 = vunpack.c.l.b16 %v3200
    %v3337 = vunpack.c.l.b16 %v3201
    %v3338 = vunpack.c.l.b16 %v3202
    %v3339 = vunpack.c.l.b16 %v3203
    %v3340 = vunpack.c.l.b16 %v3204
    %v3341 = vunpack.c.l.b16 %v3205
    %v3342 = vunpack.c.l.b16 %v3206
    %v3343 = vunpack.c.l.b16 %v3207
    %v3344 = vunpack.c.l.b16 %v3208
    %v3345 = vunpack.c.l.b16 %v3209
    %v3346 = vunpack.c.l.b16 %v3210
    %v3347 = vunpack.c.l.b16 %v3211
    %v3348 = vunpack.c.l.b16 %v3212
    %v3349 = vunpack.c.l.b16 %v3213
    %v3350 = vunpack.c.l.b16 %v3214
    %v3351 = vunpack.c.l.b16 %v3215
    %v3352 = vunpack.c.l.b16 %v3216
    %v3353 = vunpack.c.l.b16 %v3217
    %v3354 = vunpack.c.l.b16 %v3218
    %v3355 = vunpack.c.l.b16 %v3219
    %v3356 = vunpack.c.l.b16 %v3220
    %v3357 = vunpack.c.l.b16 %v3221
    %v3358 = vunpack.c.l.b16 %v3222
    %v3359 = vunpack.c.l.b16 %v3223
    %v3360 = vunpack.c.l.b16 %v3224
    %v3361 = vunpack.c.l.b16 %v3225
    %v3362 = vunpack.c.l.b16 %v3226
    %v3363 = vunpack.c.l.b16 %v3227
    %v3364 = vunpack.c.l.b16 %v3228
    %v3365 = vunpack.c.l.b16 %v3229
    %v3366 = vunpack.c.l.b16 %v3230
    %v3367 = vunpack.c.l.b16 %v3231
    %v3368 = vunpack.c.l.b16 %v3232
    %v3369 = vunpack.c.l.b16 %v3233
    %v3370 = vunpack.c.l.b16 %v3234
    %v3371 = vunpack.c.l.b16 %v3235
    %v3372 = vunpack.c.l.b16 %v3236
    %v3373 = vunpack.c.l.b16 %v3237
    %v3374 = vunpack.c.l.b16 %v3238
    %v3375 = vunpack.c.l.b16 %v3239
    %v3376 = vunpack.c.l.b16 %v3240
    %v3377 = vunpack.c.l.b16 %v3241
    %v3378 = vunpack.c.l.b16 %v3242
    %v3379 = vunpack.c.l.b16 %v3243
    %v3380 = vunpack.c.l.b16 %v3244
    %v3381 = vunpack.c.l.b16 %v3245
    %v3382 = vunpack.c.l.b16 %v3246
    %v3383 = vunpack.c.l.b16 %v3247
    %v3384 = vunpack.c.l.b16 %v3248
    %v3385 = vunpack.c.l.b16 %v3249
    %v3386 = vunpack.c.l.b16 %v3250
    %v3387 = vunpack.c.l.b16 %v3251
    %v3388 = vunpack.c.l.b16 %v3252
    %v3389 = vunpack.c.l.b16 %v3253
    %v3390 = vunpack.c.l.b16 %v3254
    %v3391 = vunpack.c.l.b16 %v3255
    %v3392 = vunpack.c.l.b16 %v3256
    %v3393 = vunpack.c.l.b16 %v3257
    %v3394 = vunpack.c.l.b16 %v3258
    %v3395 = vunpack.c.l.b16 %v3259
    %v3396 = vunpack.c.l.b16 %v3260
    %v3397 = vunpack.c.l.b16 %v3261
    %v3398 = vunpack.c.l.b16 %v3262
    %v3399 = vunpack.c.l.b16 %v3263
    %v3400 = vpack.c.b16 %v3337, %v3336
    %v3401 = vpack.c.b16 %v3339, %v3338
    %v3402 = vpack.c.b16 %v3341, %v3340
    %v3403 = vpack.c.b16 %v3343, %v3342
    %v3404 = vpack.c.b16 %v3345, %v3344
    %v3405 = vpack.c.b16 %v3347, %v3346
    %v3406 = vpack.c.b16 %v3349, %v3348
    %v3407 = vpack.c.b16 %v3351, %v3350
    %v3408 = vpack.c.b16 %v3353, %v3352
    %v3409 = vpack.c.b16 %v3355, %v3354
    %v3410 = vpack.c.b16 %v3357, %v3356
    %v3411 = vpack.c.b16 %v3359, %v3358
    %v3412 = vpack.c.b16 %v3361, %v3360
    %v3413 = vpack.c.b16 %v3363, %v3362
    %v3414 = vpack.c.b16 %v3365, %v3364
    %v3415 = vpack.c.b16 %v3367, %v3366
    %v3416 = vpack.c.b16 %v3369, %v3368
    %v3417 = vpack.c.b16 %v3371, %v3370
    %v3418 = vpack.c.b16 %v3373, %v3372
    %v3419 = vpack.c.b16 %v3375, %v3374
    %v3420 = vpack.c.b16 %v3377, %v3376
    %v3421 = vpack.c.b16 %v3379, %v3378
    %v3422 = vpack.c.b16 %v3381, %v3380
    %v3423 = vpack.c.b16 %v3383, %v3382
    %v3424 = vpack.c.b16 %v3385, %v3384
    %v3425 = vpack.c.b16 %v3387, %v3386
    %v3426 = vpack.c.b16 %v3389, %v3388
    %v3427 = vpack.c.b16 %v3391, %v3390
    %v3428 = vpack.c.b16 %v3393, %v3392
    %v3429 = vpack.c.b16 %v3395, %v3394
    %v3430 = vpack.c.b16 %v3397, %v3396
    %v3431 = vpack.c.b16 %v3399, %v3398
    %3464 = vmatprep.subr.bf16.mxu0 0
    %3465 = vmatpush1.bf16.msra.mxu0 %v3407
    %3466 = vmatprep.subr.bf16.mxu0 0
    %3467 = vmatpush1.bf16.msra.mxu0 %v3406
    %3468 = vmatprep.subr.bf16.mxu0 0
    %3469 = vmatpush1.bf16.msra.mxu0 %v3405
    %3470 = vmatprep.subr.bf16.mxu0 0
    %3471 = vmatpush1.bf16.msra.mxu0 %v3404
    %3472 = vmatprep.subr.bf16.mxu0 0
    %3473 = vmatpush1.bf16.msra.mxu0 %v3403
    %3474 = vmatprep.subr.bf16.mxu0 0
    %3475 = vmatpush1.bf16.msra.mxu0 %v3402
    %3476 = vmatprep.subr.bf16.mxu0 0
    %3477 = vmatpush1.bf16.msra.mxu0 %v3401
    %3478 = vmatprep.subr.bf16.mxu0 0
    %3479 = vmatpush1.bf16.msra.mxu0 %v3400
    %3480 = vmatprep.subr.bf16.mxu0 0
    %3481 = vmatpush2.bf16.msra.mxu0 %v3415
    %3482 = vmatprep.subr.bf16.mxu0 0
    %3483 = vmatpush2.bf16.msra.mxu0 %v3414
    %3484 = vmatprep.subr.bf16.mxu0 0
    %3485 = vmatpush2.bf16.msra.mxu0 %v3413
    %3486 = vmatprep.subr.bf16.mxu0 0
    %3487 = vmatpush2.bf16.msra.mxu0 %v3412
    %3488 = vmatprep.subr.bf16.mxu0 0
    %3489 = vmatpush2.bf16.msra.mxu0 %v3411
    %3490 = vmatprep.subr.bf16.mxu0 0
    %3491 = vmatpush2.bf16.msra.mxu0 %v3410
    %3492 = vmatprep.subr.bf16.mxu0 0
    %3493 = vmatpush2.bf16.msra.mxu0 %v3409
    %3494 = vmatprep.subr.bf16.mxu0 0
    %3495 = vmatpush2.bf16.msra.mxu0 %v3408
    %3496 = vmatprep.mubr.bf16.mxu0 %v3196
    %3497 = vmatmul.mubr.bf16.gmra.mxu0 %v3195
    %v3498 = vpop.f32.mrf.mxu0
    %v3499 = vadd.f32 %v3270, %v3498
    %v3500 = vpop.f32.mrf.mxu0
    %v3501 = vpop.f32.mrf.mxu0
    %v3502 = vadd.f32 %v3270, %v3501
    %v3503 = vpop.f32.mrf.mxu0
    %3504 = vdwg.mxu0
    %3505 = vmatprep.subr.bf16.mxu0 0
    %3506 = vmatpush1.bf16.msra.mxu0 %v3423
    %3507 = vmatprep.subr.bf16.mxu0 0
    %3508 = vmatpush1.bf16.msra.mxu0 %v3422
    %3509 = vmatprep.subr.bf16.mxu0 0
    %3510 = vmatpush1.bf16.msra.mxu0 %v3421
    %3511 = vmatprep.subr.bf16.mxu0 0
    %3512 = vmatpush1.bf16.msra.mxu0 %v3420
    %3513 = vmatprep.subr.bf16.mxu0 0
    %3514 = vmatpush1.bf16.msra.mxu0 %v3419
    %3515 = vmatprep.subr.bf16.mxu0 0
    %3516 = vmatpush1.bf16.msra.mxu0 %v3418
    %3517 = vmatprep.subr.bf16.mxu0 0
    %3518 = vmatpush1.bf16.msra.mxu0 %v3417
    %3519 = vmatprep.subr.bf16.mxu0 0
    %3520 = vmatpush1.bf16.msra.mxu0 %v3416
    %3521 = vmatprep.subr.bf16.mxu0 0
    %3522 = vmatpush2.bf16.msra.mxu0 %v3431
    %3523 = vmatprep.subr.bf16.mxu0 0
    %3524 = vmatpush2.bf16.msra.mxu0 %v3430
    %3525 = vmatprep.subr.bf16.mxu0 0
    %3526 = vmatpush2.bf16.msra.mxu0 %v3429
    %3527 = vmatprep.subr.bf16.mxu0 0
    %3528 = vmatpush2.bf16.msra.mxu0 %v3428
    %3529 = vmatprep.subr.bf16.mxu0 0
    %3530 = vmatpush2.bf16.msra.mxu0 %v3427
    %3531 = vmatprep.subr.bf16.mxu0 0
    %3532 = vmatpush2.bf16.msra.mxu0 %v3426
    %3533 = vmatprep.subr.bf16.mxu0 0
    %3534 = vmatpush2.bf16.msra.mxu0 %v3425
    %3535 = vmatprep.subr.bf16.mxu0 0
    %3536 = vmatpush2.bf16.msra.mxu0 %v3424
    %3537 = vmatprep.mubr.bf16.mxu0 %v3198
    %3538 = vmatmul.mubr.bf16.gmra.mxu0 %v3197
    %v3539 = vpop.f32.mrf.mxu0
    %v3540 = vadd.f32 %v3499, %v3539
    %v3541 = vpop.f32.mrf.mxu0
    %v3542 = vpop.f32.mrf.mxu0
    %v3543 = vadd.f32 %v3502, %v3542
    %v3544 = vpop.f32.mrf.mxu0
    %3545 = vdwg.mxu0
    %v3546 = vadd.f32 %v3540, %v2818
    %v3547 = vadd.f32 %v3543, %v2819
    %s3548 = scalar_lea.vmem %s14, 1
    %v3549 = vld [vmem:[%s3548] sm:$0x1]
    %s3550 = scalar_lea.vmem %s15, 1
    %v3551 = vld [vmem:[%s3550] sm:$0x1]
    %3552 = vadd.xlane.f32.xlu0 %v3546
    %v3553 = vpop.xlane.xlu0 %3552
    %3554 = vadd.xlane.f32.xlu0 %v3547
    %v3555 = vpop.xlane.xlu0 %3554
    %v3556 = vmul.f32 %v3553, %v117
    %v3557 = vmul.f32 %v3555, %v117
    %v3558 = vsub.f32 %v3546, %v3556
    %v3559 = vsub.f32 %v3547, %v3557
    %v3560 = vmul.f32 %v3558, %v3558
    %v3561 = vmul.f32 %v3559, %v3559
    %3562 = vadd.xlane.f32.xlu0 %v3560
    %v3563 = vpop.xlane.xlu0 %3562
    %3564 = vadd.xlane.f32.xlu0 %v3561
    %v3565 = vpop.xlane.xlu0 %3564
    %v3566 = vmul.f32 %v3563, %v117
    %v3567 = vmul.f32 %v3565, %v117
    %v3568 = vadd.f32 %v3566, 1e-12
    %v3569 = vadd.f32 %v3567, 1e-12
    %v3570 = vrsqrt.pop %v3568
    %v3571 = vrsqrt.pop %v3569
    %v3572 = vmul.f32 %v3558, %v3570
    %v3573 = vmul.f32 %v3559, %v3571
    %v3575 = vlaneseq
    %v3576 = vshrl.u32 %v3575, 7
    %v3577 = vsub.s32 0, %v3576
    %v3578 = vrot.slane %v3549, %v3577
    %v3580 = vmul.f32 %v3572, %v3578
    %v3581 = vmul.f32 %v3573, %v3578
    %v3583 = vlaneseq
    %v3584 = vshrl.u32 %v3583, 7
    %v3585 = vsub.s32 0, %v3584
    %v3586 = vrot.slane %v3551, %v3585
    %v3588 = vadd.f32 %v3580, %v3586
    %v3589 = vadd.f32 %v3581, %v3586
    %v3591 = vrot.slane %v3589, 7
    %vm3593 = vcmask 1040384
    %v3594 = vsel %vm3593, %v3588, %v3591
    %v3595 = vpack.c.bf16 %v3594, %v3594
    %v3596 = vld [vmem:[%s16] sm:$0xf]
    %v3597 = vld [vmem:[%s16 + $0x4] sm:$0xf]
    %v3598 = vld [vmem:[%s16 + $0x8] sm:$0xf]
    %v3599 = vld [vmem:[%s16 + $0xc] sm:$0xf]
    %v3600 = vld [vmem:[%s16 + $0x10] sm:$0xf]
    %v3601 = vld [vmem:[%s16 + $0x14] sm:$0xf]
    %v3602 = vld [vmem:[%s16 + $0x18] sm:$0xf]
    %v3603 = vld [vmem:[%s16 + $0x1c] sm:$0xf]
    %v3604 = vld [vmem:[%s16 + $0x20] sm:$0xf]
    %v3605 = vld [vmem:[%s16 + $0x24] sm:$0xf]
    %v3606 = vld [vmem:[%s16 + $0x28] sm:$0xf]
    %v3607 = vld [vmem:[%s16 + $0x2c] sm:$0xf]
    %v3608 = vld [vmem:[%s16 + $0x30] sm:$0xf]
    %v3609 = vld [vmem:[%s16 + $0x34] sm:$0xf]
    %v3610 = vld [vmem:[%s16 + $0x38] sm:$0xf]
    %v3611 = vld [vmem:[%s16 + $0x3c] sm:$0xf]
    %v3612 = vld [vmem:[%s17] sm:$0x1]
    %v3614 = vlaneseq
    %v3615 = vshrl.u32 %v3614, 7
    %v3616 = vsub.s32 0, %v3615
    %v3617 = vrot.slane %v3612, %v3616
    %v3635 = vunpack.c.l.b16 %v3596
    %v3636 = vunpack.c.l.b16 %v3597
    %v3637 = vunpack.c.l.b16 %v3598
    %v3638 = vunpack.c.l.b16 %v3599
    %v3639 = vunpack.c.l.b16 %v3600
    %v3640 = vunpack.c.l.b16 %v3601
    %v3641 = vunpack.c.l.b16 %v3602
    %v3642 = vunpack.c.l.b16 %v3603
    %v3643 = vunpack.c.l.b16 %v3604
    %v3644 = vunpack.c.l.b16 %v3605
    %v3645 = vunpack.c.l.b16 %v3606
    %v3646 = vunpack.c.l.b16 %v3607
    %v3647 = vunpack.c.l.b16 %v3608
    %v3648 = vunpack.c.l.b16 %v3609
    %v3649 = vunpack.c.l.b16 %v3610
    %v3650 = vunpack.c.l.b16 %v3611
    %v3651 = vpack.c.b16 %v3636, %v3635
    %v3652 = vpack.c.b16 %v3638, %v3637
    %v3653 = vpack.c.b16 %v3640, %v3639
    %v3654 = vpack.c.b16 %v3642, %v3641
    %v3655 = vpack.c.b16 %v3644, %v3643
    %v3656 = vpack.c.b16 %v3646, %v3645
    %v3657 = vpack.c.b16 %v3648, %v3647
    %v3658 = vpack.c.b16 %v3650, %v3649
    %3667 = vmatprep.subr.bf16.mxu0 0
    %3668 = vmatpush1.bf16.msra.mxu0 %v3658
    %3669 = vmatprep.subr.bf16.mxu0 0
    %3670 = vmatpush1.bf16.msra.mxu0 %v3657
    %3671 = vmatprep.subr.bf16.mxu0 0
    %3672 = vmatpush1.bf16.msra.mxu0 %v3656
    %3673 = vmatprep.subr.bf16.mxu0 0
    %3674 = vmatpush1.bf16.msra.mxu0 %v3655
    %3675 = vmatprep.subr.bf16.mxu0 0
    %3676 = vmatpush1.bf16.msra.mxu0 %v3654
    %3677 = vmatprep.subr.bf16.mxu0 0
    %3678 = vmatpush1.bf16.msra.mxu0 %v3653
    %3679 = vmatprep.subr.bf16.mxu0 0
    %3680 = vmatpush1.bf16.msra.mxu0 %v3652
    %3681 = vmatprep.subr.bf16.mxu0 0
    %3682 = vmatpush1.bf16.msra.mxu0 %v3651
    %3683 = vmatprep.subr.bf16.mxu0 0
    %3684 = vmatpush2.bf16.msra.mxu0 0
    %3685 = vmatprep.subr.bf16.mxu0 0
    %3686 = vmatpush2.bf16.msra.mxu0 0
    %3687 = vmatprep.subr.bf16.mxu0 0
    %3688 = vmatpush2.bf16.msra.mxu0 0
    %3689 = vmatprep.subr.bf16.mxu0 0
    %3690 = vmatpush2.bf16.msra.mxu0 0
    %3691 = vmatprep.subr.bf16.mxu0 0
    %3692 = vmatpush2.bf16.msra.mxu0 0
    %3693 = vmatprep.subr.bf16.mxu0 0
    %3694 = vmatpush2.bf16.msra.mxu0 0
    %3695 = vmatprep.subr.bf16.mxu0 0
    %3696 = vmatpush2.bf16.msra.mxu0 0
    %3697 = vmatprep.subr.bf16.mxu0 0
    %3698 = vmatpush2.bf16.msra.mxu0 0
    %3699 = vmatprep.mubr.bf16.mxu0 0
    %3700 = vmatmul.mubr.bf16.gmra.mxu0 %v3595
    %v3701 = vpop.f32.mrf.mxu0
    %v3702 = vadd.f32 %v3617, %v3701
    %v3703 = vpop.f32.mrf.mxu0
    %v3704 = vpop.f32.mrf.mxu0
    %v3705 = vpop.f32.mrf.mxu0
    %3706 = vdwg.mxu0
    %v3707 = vtanh.pop %v3702
    %v3708 = vld [vmem:[%s18] sm:$0x1]
    %v3710 = vlaneseq
    %v3711 = vshrl.u32 %v3710, 7
    %v3712 = vsub.s32 0, %v3711
    %v3713 = vrot.slane %v3708, %v3712
    %v3715 = vmul.f32 %v3707, %v3713
    %vm3716 = vcmask 1041408
    %v3717 = vsel %vm3716, %v3715, 0.0
    %3718 = vadd.xlane.f32.xlu0 %v3717
    %v3719 = vpop.xlane.xlu0 %3718
    %v3720 = vld [vmem:[#allocation2] sm:$0x1]
    %v3722 = vlaneseq
    %v3723 = vshrl.u32 %v3722, 7
    %v3724 = vsub.s32 0, %v3723
    %v3725 = vrot.slane %v3720, %v3724
    %v3727 = vadd.f32 %v3719, %v3725
    %vm3728 = vcmask 1024
    %3729 = vst.msk [vmem:[%s20] sm:$0x3] %vm3728, %v3727
    // Predicated region
    $region94: #{bert_base_uncased_forward.1} parent=1 // pred_check
      _
    $region95: #{bert_base_uncased_forward.1} parent=1 // pred_check_branch
      %3731 = sbr.rel (0) target = $region97
    $region96: #{bert_base_uncased_forward.1} parent=1 // pred_region
      _
    $region97: #{bert_base_uncased_forward.1} parent=1 // pred_fallthru
      _
    // Predicated region
    $region98: #{bert_base_uncased_forward.1} parent=1 // pred_check
      _
    $region99: #{bert_base_uncased_forward.1} parent=1 // pred_check_branch
      %3733 = sbr.rel (0) target = $region101
    $region100: #{bert_base_uncased_forward.1} parent=1 // pred_region
      _
    $region101: #{bert_base_uncased_forward.1} parent=1 // pred_fallthru
      _
    %3734 = vsyncpa [#allocation4], 1
    %3735 = vsyncpa [#allocation6], 1

</llo_original>
